<compile_context>
chip_gen: v7x
topology: tpu7x:2x2x1
jax: 0.10.0
libtpu: 0.0.40
codegen_flags: <defaults>
</compile_context>

<pallas_src>
import functools
import math

import jax
import jax.numpy as jnp
from jax.experimental import pallas as pl
from jax.experimental.pallas import tpu as pltpu

NEG_INF = -1e30                 # additive mask value (same softmax result as -inf)
ACT_DTYPE = jnp.bfloat16        # residual-stream dtype between kernels
                                # (set to jnp.float32 for strict parity with the torch path)


# ----------------------------------------------------------------------------
# Hardware-aware budgets
# ----------------------------------------------------------------------------
def _tpu_vmem_capacity_bytes():
    try:
        return int(pltpu.get_tpu_info().vmem_capacity_bytes)
    except Exception:
        return 128 * 1024 * 1024            # v5e / v6e default


_VMEM_CAP = _tpu_vmem_capacity_bytes()
_VMEM_LIMIT = max(32 * 2**20, min(int(_VMEM_CAP * 0.8), _VMEM_CAP - 12 * 2**20))


def _row_tile(m):
    # Biggest row tile the VMEM budget tolerates; callers pad M up to a multiple of it
    # so we never silently disable pipelining / megacore sharding with one full-M block.
    cands = (512, 256, 128) if _VMEM_CAP >= 96 * 2**20 else (256, 128)
    for t in cands:
        if m >= t:
            return t
    return m        # tiny row counts: single block equal to the array dims (layout OK)


def _round_up(x, m):
    return ((x + m - 1) // m) * m


def _compiler_params(n_grid_dims=1):
    return pltpu.CompilerParams(dimension_semantics=("parallel",) * n_grid_dims,
                                vmem_limit_bytes=_VMEM_LIMIT)


# ----------------------------------------------------------------------------
# Single-buffered (Buffered(1)) specs for grid-invariant weight blocks
# ----------------------------------------------------------------------------
_BUFFERED1 = None


def _probe_buffered1():
    """One-time check that pipeline_mode=pl.Buffered(1) compiles on this JAX/Mosaic."""
    global _BUFFERED1
    if _BUFFERED1 is not None:
        return _BUFFERED1
    try:
        def _k(c_ref, x_ref, o_ref):
            o_ref[...] = x_ref[...] + c_ref[...]

        out = pl.pallas_call(
            _k, grid=(2,),
            in_specs=[pl.BlockSpec((8, 128), lambda i: (0, 0),
                                   pipeline_mode=pl.Buffered(1)),
                      pl.BlockSpec((8, 128), lambda i: (i, 0))],
            out_specs=pl.BlockSpec((8, 128), lambda i: (i, 0)),
            out_shape=jax.ShapeDtypeStruct((16, 128), jnp.float32),
        )(jnp.ones((8, 128), jnp.float32), jnp.zeros((16, 128), jnp.float32))
        jax.block_until_ready(out)
        _BUFFERED1 = True
    except Exception:
        _BUFFERED1 = False
    return _BUFFERED1


def _const_spec(shape):
    """BlockSpec for a grid-invariant block (weights/bias/gamma/beta): single-buffered,
    since it is revisited rather than streamed — halves its VMEM footprint."""
    imap = lambda *_: (0,) * len(shape)
    if _probe_buffered1():
        return pl.BlockSpec(shape, imap, pipeline_mode=pl.Buffered(1))
    return pl.BlockSpec(shape, imap)


# ----------------------------------------------------------------------------
# Fused (optional LayerNorm) + matmul (+bias, +relu, +residual, N-way split) kernel
# ----------------------------------------------------------------------------
def _fused_linear_kernel(*refs, has_ln, has_res, relu, n_split):
    idx = 0
    x_ref = refs[idx]; idx += 1
    if has_ln:
        g_ref, beta_ref = refs[idx], refs[idx + 1]; idx += 2
    w_ref, bias_ref = refs[idx], refs[idx + 1]; idx += 2
    if has_res:
        r_ref = refs[idx]; idx += 1
    out_refs = refs[idx:]

    x = x_ref[...]
    if has_ln:
        x = x.astype(jnp.float32)
        mu = jnp.mean(x, axis=-1, keepdims=True)
        xc = x - mu
        var = jnp.mean(xc * xc, axis=-1, keepdims=True)      # biased var (torch LayerNorm)
        x = xc * jax.lax.rsqrt(var + 1e-5) * g_ref[...] + beta_ref[...]

    y = jnp.dot(x.astype(jnp.bfloat16), w_ref[...],
                preferred_element_type=jnp.float32)
    y = y + bias_ref[...]
    if relu:
        y = jnp.maximum(y, 0.0)
    if has_res:
        y = y + r_ref[...].astype(jnp.float32)

    if n_split == 1:
        out_refs[0][...] = y.astype(out_refs[0].dtype)
    else:
        n = y.shape[-1] // n_split
        for i in range(n_split):
            out_refs[i][...] = y[:, i * n:(i + 1) * n].astype(out_refs[i].dtype)


def fused_linear(x2, w, bias=None, *, gamma=None, beta=None, residual=None,
                 relu=False, n_split=1, out_dtype=ACT_DTYPE):
    """y = [LN](x2) @ w + bias [+relu] [+residual]; optional n-way column split."""
    M, K = x2.shape
    N = w.shape[1]
    tm = _row_tile(M)
    Mp = _round_up(M, tm)
    has_ln = gamma is not None
    has_res = residual is not None

    if Mp != M:                       # pad rows: keeps pipelining + a real grid
        x2 = jnp.pad(x2, ((0, Mp - M), (0, 0)))
        if has_res:
            residual = jnp.pad(residual, ((0, Mp - M), (0, 0)))

    inputs = [x2]
    in_specs = [pl.BlockSpec((tm, K), lambda i: (i, 0))]
    if has_ln:
        inputs += [gamma.reshape(1, K).astype(jnp.float32),
                   beta.reshape(1, K).astype(jnp.float32)]
        in_specs += [_const_spec((1, K)), _const_spec((1, K))]
    b2 = (jnp.zeros((1, N), jnp.float32) if bias is None
          else bias.reshape(1, N).astype(jnp.float32))
    inputs += [w.astype(jnp.bfloat16), b2]
    in_specs += [_const_spec((K, N)), _const_spec((1, N))]
    if has_res:
        inputs.append(residual)
        in_specs.append(pl.BlockSpec((tm, N), lambda i: (i, 0)))

    n_each = N // n_split
    out_shape = tuple(jax.ShapeDtypeStruct((Mp, n_each), out_dtype) for _ in range(n_split))
    out_specs = tuple(pl.BlockSpec((tm, n_each), lambda i: (i, 0)) for _ in range(n_split))

    nbytes = lambda a: int(a.size) * a.dtype.itemsize
    cost = pl.CostEstimate(
        flops=2 * Mp * K * N, transcendentals=0,
        bytes_accessed=sum(nbytes(a) for a in inputs) + Mp * N * jnp.dtype(out_dtype).itemsize)

    out = pl.pallas_call(
        functools.partial(_fused_linear_kernel, has_ln=has_ln, has_res=has_res,
                          relu=relu, n_split=n_split),
        grid=(Mp // tm,),
        out_shape=out_shape if n_split > 1 else out_shape[0],
        in_specs=in_specs,
        out_specs=out_specs if n_split > 1 else out_specs[0],
        compiler_params=_compiler_params(1),
        cost_estimate=cost,
    )(*inputs)

    if Mp != M:
        out = tuple(o[:M] for o in out) if n_split > 1 else out[:M]
    return out


# ----------------------------------------------------------------------------
# Fused FFN block: y = x + FC2(relu(FC1(LN(x))))
# ----------------------------------------------------------------------------
def _ffn_kernel(x_ref, g_ref, b_ref, w1_ref, b1_ref, w2_ref, b2_ref, o_ref):
    x = x_ref[...].astype(jnp.float32)
    mu = jnp.mean(x, axis=-1, keepdims=True)
    xc = x - mu
    var = jnp.mean(xc * xc, axis=-1, keepdims=True)
    h = xc * jax.lax.rsqrt(var + 1e-5) * g_ref[...] + b_ref[...]
    h = jnp.dot(h.astype(jnp.bfloat16), w1_ref[...],
                preferred_element_type=jnp.float32) + b1_ref[...]
    h = jnp.maximum(h, 0.0)
    h = jnp.dot(h.astype(jnp.bfloat16), w2_ref[...],
                preferred_element_type=jnp.float32) + b2_ref[...]
    o_ref[...] = (x + h).astype(o_ref.dtype)


def fused_ffn(x2, gamma, beta, w1, b1, w2, b2):
    # TODO(synk): for very large D*F on v7x (64 MiB VMEM) add an N/K reduction tile on
    # the FFN weights ('arbitrary' grid axis + VMEM accumulator) instead of whole blocks.
    M, D = x2.shape
    F = w1.shape[1]
    tm = _row_tile(M)
    Mp = _round_up(M, tm)
    xp = jnp.pad(x2, ((0, Mp - M), (0, 0))) if Mp != M else x2

    cost = pl.CostEstimate(
        flops=4 * Mp * D * F, transcendentals=0,
        bytes_accessed=int(xp.size) * xp.dtype.itemsize + 4 * D * F
                       + Mp * D * jnp.dtype(ACT_DTYPE).itemsize)

    out = pl.pallas_call(
        _ffn_kernel,
        grid=(Mp // tm,),
        out_shape=jax.ShapeDtypeStruct((Mp, D), ACT_DTYPE),
        in_specs=[pl.BlockSpec((tm, D), lambda i: (i, 0)),
                  _const_spec((1, D)), _const_spec((1, D)),
                  _const_spec((D, F)), _const_spec((1, F)),
                  _const_spec((F, D)), _const_spec((1, D))],
        out_specs=pl.BlockSpec((tm, D), lambda i: (i, 0)),
        compiler_params=_compiler_params(1),
        cost_estimate=cost,
    )(xp,
      gamma.reshape(1, D).astype(jnp.float32), beta.reshape(1, D).astype(jnp.float32),
      w1.astype(jnp.bfloat16), b1.reshape(1, F).astype(jnp.float32),
      w2.astype(jnp.bfloat16), b2.reshape(1, D).astype(jnp.float32))
    return out[:M] if Mp != M else out


# ----------------------------------------------------------------------------
# Attention kernel: 2-D grid over (batch, head-group); masks generated in-kernel.
# 1/sqrt(Dh) scale is pre-folded into the Q projection weights.
# ----------------------------------------------------------------------------
def _attn_kernel(kpm_ref, q_ref, k_ref, v_ref, o_ref, acc_ref, *, heads_per_group, causal):
    T = q_ref.shape[1]
    S = k_ref.shape[1]
    Gd = q_ref.shape[2]
    Dh = Gd // heads_per_group

    # Combine key-padding + causal bias ONCE before the head loop (hoisted VPU work).
    bias = kpm_ref[0]                                                 # (1, S) additive f32
    if causal:
        row = jax.lax.broadcasted_iota(jnp.int32, (T, S), 0)
        col = jax.lax.broadcasted_iota(jnp.int32, (T, S), 1)
        bias = bias + jnp.where(col <= row, 0.0, NEG_INF).astype(jnp.float32)

    # heads_per_group is small by construction (group width picked lane-dense), so this
    # static unroll stays short and does not blow up vreg live ranges.
    # TODO(synk): pack >=2 heads into one MXU pass for Dh < 128 to raise MXU utilization.
    for h in range(heads_per_group):
        lo = h * Dh
        q = q_ref[0, :, lo:lo + Dh]                                   # (T, Dh) bf16 (pre-scaled)
        k = k_ref[0, :, lo:lo + Dh]                                   # (S, Dh) bf16
        v = v_ref[0, :, lo:lo + Dh]                                   # (S, Dh) bf16
        s = jax.lax.dot_general(q, k, (((1,), (1,)), ((), ())),
                                preferred_element_type=jnp.float32)   # (T, S) f32
        s = s + bias
        s = s - jnp.max(s, axis=-1, keepdims=True)
        p = jnp.exp(s)
        p = p * pl.reciprocal(jnp.sum(p, axis=-1, keepdims=True), approx=True)
        acc_ref[:, lo:lo + Dh] = jnp.dot(p.astype(jnp.bfloat16), v,
                                         preferred_element_type=jnp.float32)

    # Single lane-dense store of the whole head-group block (no per-head partial stores
    # into the output block); HBM writeback is one dense DMA per (batch, head-group).
    o_ref[0, :, :] = acc_ref[...].astype(o_ref.dtype)


def _heads_per_group(num_heads, head_dim):
    # Smallest divisor g of num_heads whose column group g*Dh is a multiple of 128 lanes;
    # otherwise take all heads (block == full D, which always satisfies the layout rule).
    for g in range(1, num_heads + 1):
        if num_heads % g == 0 and (g * head_dim) % 128 == 0:
            return g
    return num_heads


def attention(q, k, v, key_pad_bias, num_heads, causal):
    # q: (B,T,D) bf16, k/v: (B,S,D) bf16, key_pad_bias: (B,1,S) f32 additive
    # TODO(synk): for very long encoder S, tile K/V along S (flash-style online softmax).
    B, T, D = q.shape
    S = k.shape[1]
    Dh = D // num_heads
    g = _heads_per_group(num_heads, Dh)
    Gd = g * Dh
    n_groups = D // Gd

    return pl.pallas_call(
        functools.partial(_attn_kernel, heads_per_group=g, causal=causal),
        grid=(B, n_groups),                       # batch x head-group, both parallel
        out_shape=jax.ShapeDtypeStruct((B, T, D), jnp.bfloat16),
        in_specs=[pl.BlockSpec((1, 1, S), lambda b, hg: (b, 0, 0)),
                  pl.BlockSpec((1, T, Gd), lambda b, hg: (b, 0, hg)),
                  pl.BlockSpec((1, S, Gd), lambda b, hg: (b, 0, hg)),
                  pl.BlockSpec((1, S, Gd), lambda b, hg: (b, 0, hg))],
        out_specs=pl.BlockSpec((1, T, Gd), lambda b, hg: (b, 0, hg)),
        scratch_shapes=[pltpu.VMEM((T, Gd), jnp.float32)],
        compiler_params=_compiler_params(2),
    )(key_pad_bias, q, k, v)


# ----------------------------------------------------------------------------
# Positions / embeddings (plain-JAX glue)
# ----------------------------------------------------------------------------
def sinusoidal_embedding_table(num_embeddings, embedding_dim, padding_idx):
    half_dim = embedding_dim // 2
    emb = math.log(10000.0) / (half_dim - 1)
    emb = jnp.exp(jnp.arange(half_dim, dtype=jnp.float32) * -emb)
    emb = jnp.arange(num_embeddings, dtype=jnp.float32)[:, None] * emb[None, :]
    emb = jnp.concatenate([jnp.sin(emb), jnp.cos(emb)], axis=1)
    if embedding_dim % 2 == 1:
        emb = jnp.concatenate([emb, jnp.zeros((num_embeddings, 1), jnp.float32)], axis=1)
    emb = emb.at[padding_idx].set(0.0)
    return emb


def make_positions(tokens, padding_idx):
    mask = (tokens != padding_idx).astype(jnp.int32)
    return jnp.cumsum(mask, axis=1) * mask + padding_idx


# ----------------------------------------------------------------------------
# Full decoder forward (uses prepared/fused params)
# ----------------------------------------------------------------------------
def transformer_decoder_forward(params, prev_output_tokens, enc, enc_padding_mask, cfg):
    B, T = prev_output_tokens.shape
    D, H, V, pad = cfg['embed_dim'], cfg['heads'], cfg['vocab'], cfg['padding_idx']
    S = enc.shape[0]

    # embeddings + sinusoidal positions (gather = plain-JAX glue); dropout = identity (eval)
    pos_table = sinusoidal_embedding_table(pad + T + 1, D, pad)
    positions = pos_table[make_positions(prev_output_tokens, pad)]             # (B, T, D)
    x = math.sqrt(D) * params['embed_tokens'][prev_output_tokens] + positions  # (B, T, D) f32
    x2 = x.reshape(B * T, D).astype(ACT_DTYPE)          # residual stream carried in bf16

    # encoder output -> batch-first rows once, outside the layer loop
    enc2 = enc.transpose(1, 0, 2).reshape(B * S, D).astype(ACT_DTYPE)

    # tiny additive key-padding biases; the causal mask is generated inside the kernel
    dec_kpm = jnp.where(prev_output_tokens == pad, NEG_INF, 0.0).astype(jnp.float32).reshape(B, 1, T)
    if enc_padding_mask is not None:
        enc_kpm = jnp.where(enc_padding_mask, NEG_INF, 0.0).astype(jnp.float32).reshape(B, 1, S)
    else:
        enc_kpm = jnp.zeros((B, 1, S), jnp.float32)

    # inner states kept batch-first during the loop; transposed once at the very end
    inner_btd = [x2.reshape(B, T, D)]

    for lp in params['layers']:
        # --- self-attention block (pre-norm) ---
        q, k, v = fused_linear(x2, lp['w_qkv'], lp['b_qkv'],
                               gamma=lp['ln1_g'], beta=lp['ln1_b'],
                               n_split=3, out_dtype=jnp.bfloat16)
        att = attention(q.reshape(B, T, D), k.reshape(B, T, D), v.reshape(B, T, D),
                        dec_kpm, H, causal=True)                                # (B,T,D) bf16
        x2 = fused_linear(att.reshape(B * T, D), lp['self_wo'], lp['self_bo'],
                          residual=x2, out_dtype=ACT_DTYPE)

        # --- encoder cross-attention block ---
        qc = fused_linear(x2, lp['enc_wq'], lp['enc_bq'],
                          gamma=lp['ln2_g'], beta=lp['ln2_b'], out_dtype=jnp.bfloat16)
        kc, vc = fused_linear(enc2, lp['enc_wkv'], lp['enc_bkv'],
                              n_split=2, out_dtype=jnp.bfloat16)
        attc = attention(qc.reshape(B, T, D), kc.reshape(B, S, D), vc.reshape(B, S, D),
                         enc_kpm, H, causal=False)
        x2 = fused_linear(attc.reshape(B * T, D), lp['enc_wo'], lp['enc_bo'],
                          residual=x2, out_dtype=ACT_DTYPE)

        # --- feed-forward block (fully fused) ---
        x2 = fused_ffn(x2, lp['ln3_g'], lp['ln3_b'],
                       lp['fc1_w'], lp['fc1_b'], lp['fc2_w'], lp['fc2_b'])
        inner_btd.append(x2.reshape(B, T, D))

    # final LayerNorm fused with the output projection (no bias); logits kept f32
    logits2 = fused_linear(x2, params['out_proj_w'], None,
                           gamma=params['ln_g'], beta=params['ln_b'],
                           out_dtype=jnp.float32)                               # (B*T, V)
    logits = logits2.reshape(B, T, V).transpose(0, 2, 1)                        # (B, V, T)

    # reference (T, B, D) convention, built once after all layer kernels
    inner_states = [a.transpose(1, 0, 2) for a in inner_btd]
    return logits, {'inner_states': inner_states}


# ----------------------------------------------------------------------------
# Deterministic "torch-like" parameter init and fusion/cast prep
# ----------------------------------------------------------------------------
def init_params(key, cfg):
    D, H, F, V, L = cfg['embed_dim'], cfg['heads'], cfg['ffn_dim'], cfg['vocab'], cfg['layers']
    keys = iter(jax.random.split(key, 128))

    def w(shape, scale=0.05):
        return (scale * jax.random.normal(next(keys), shape)).astype(jnp.float32)

    def attn_params():
        return {'wq': w((D, D)), 'bq': jnp.zeros((D,), jnp.float32),
                'wk': w((D, D)), 'bk': jnp.zeros((D,), jnp.float32),
                'wv': w((D, D)), 'bv': jnp.zeros((D,), jnp.float32),
                'wo': w((D, D)), 'bo': jnp.zeros((D,), jnp.float32)}

    embed = w((V, D), 1.0 / math.sqrt(D)).at[cfg['padding_idx']].set(0.0)

    layers = []
    for _ in range(L):
        layers.append({
            'self_attn': attn_params(),
            'enc_attn': attn_params(),
            'ln1_g': jnp.ones((D,), jnp.float32), 'ln1_b': jnp.zeros((D,), jnp.float32),
            'ln2_g': jnp.ones((D,), jnp.float32), 'ln2_b': jnp.zeros((D,), jnp.float32),
            'ln3_g': jnp.ones((D,), jnp.float32), 'ln3_b': jnp.zeros((D,), jnp.float32),
            'fc1_w': w((D, F)), 'fc1_b': jnp.zeros((F,), jnp.float32),
            'fc2_w': w((F, D)), 'fc2_b': jnp.zeros((D,), jnp.float32),
        })

    return {'embed_tokens': embed,
            'layers': layers,
            'ln_g': jnp.ones((D,), jnp.float32), 'ln_b': jnp.zeros((D,), jnp.float32),
            'out_proj_w': w((D, V), D ** -0.5)}     # nn.init.normal_(std=D**-0.5)


def prepare_params(raw, cfg):
    """Fuse QKV / KV weights, fold the attention scale into Q, cast matmul weights to bf16."""
    D, H = cfg['embed_dim'], cfg['heads']
    scale = (D // H) ** -0.5
    bf = lambda a: a.astype(jnp.bfloat16)

    layers = []
    for lp in raw['layers']:
        sa, ea = lp['self_attn'], lp['enc_attn']
        layers.append({
            'ln1_g': lp['ln1_g'], 'ln1_b': lp['ln1_b'],
            'w_qkv': bf(jnp.concatenate([sa['wq'] * scale, sa['wk'], sa['wv']], axis=1)),
            'b_qkv': jnp.concatenate([sa['bq'] * scale, sa['bk'], sa['bv']]),
            'self_wo': bf(sa['wo']), 'self_bo': sa['bo'],
            'ln2_g': lp['ln2_g'], 'ln2_b': lp['ln2_b'],
            'enc_wq': bf(ea['wq'] * scale), 'enc_bq': ea['bq'] * scale,
            'enc_wkv': bf(jnp.concatenate([ea['wk'], ea['wv']], axis=1)),
            'enc_bkv': jnp.concatenate([ea['bk'], ea['bv']]),
            'enc_wo': bf(ea['wo']), 'enc_bo': ea['bo'],
            'ln3_g': lp['ln3_g'], 'ln3_b': lp['ln3_b'],
            'fc1_w': bf(lp['fc1_w']), 'fc1_b': lp['fc1_b'],
            'fc2_w': bf(lp['fc2_w']), 'fc2_b': lp['fc2_b'],
        })
    return {'embed_tokens': raw['embed_tokens'], 'layers': layers,
            'ln_g': raw['ln_g'], 'ln_b': raw['ln_b'],
            'out_proj_w': bf(raw['out_proj_w'])}


if __name__ == "__main__":
    cfg = dict(embed_dim=32, heads=4, ffn_dim=64, vocab=16, layers=2, padding_idx=1)
    B, T, S = 2, 8, 10

    _probe_buffered1()   # settle the Buffered(1) capability once, before tracing the model

    key = jax.random.PRNGKey(0)
    pkey, tkey, ekey = jax.random.split(key, 3)

    raw_params = init_params(pkey, cfg)
    params = prepare_params(raw_params, cfg)

    # tokens avoid padding_idx -> self_attn_padding_mask effectively None (as in torch path)
    prev_output_tokens = jax.random.randint(tkey, (B, T), 2, cfg['vocab'], dtype=jnp.int32)
    enc = jax.random.normal(ekey, (S, B, cfg['embed_dim']), dtype=jnp.float32)   # (S, B, D)
    enc_padding_mask = jnp.zeros((B, S), dtype=bool).at[1, 8:].set(True)         # pad last 2 of batch 1

    fwd = jax.jit(lambda p, t, e, m: transformer_decoder_forward(p, t, e, m, cfg))
    logits, extra = fwd(params, prev_output_tokens, enc, enc_padding_mask)
    logits = jax.block_until_ready(logits)

    assert logits.shape == (B, cfg['vocab'], T), logits.shape
    assert len(extra['inner_states']) == cfg['layers'] + 1
    assert bool(jnp.all(jnp.isfinite(logits)))
    print("KERNEL_OK")
</pallas_src>

<mosaic_0001>
module attributes {stable_mosaic.version = 11 : i64} {
  func.func @_k(%arg0: i32, %arg1: memref<8x128xf32, #tpu.memory_space<vmem>>, %arg2: memref<8x128xf32, #tpu.memory_space<vmem>>, %arg3: memref<8x128xf32, #tpu.memory_space<vmem>>) attributes {dimension_semantics = [#tpu.dimension_semantics<arbitrary>], iteration_bounds = array<i64: 2>, scalar_prefetch = 0 : i64, scratch_operands = 0 : i64, tpu.core_type = #tpu.core_type<tc>, window_params = [{pipeline_mode = #tpu.pipeline_mode<synchronous>, transform_indices = @transform_0, window_bounds = array<i64: 8, 128>}, {transform_indices = @transform_1, window_bounds = array<i64: 8, 128>}, {transform_indices = @transform_2, window_bounds = array<i64: 8, 128>}]} {
    %c0 = arith.constant 0 : index
    %c0_0 = arith.constant 0 : index
    %0 = vector.load %arg2[%c0, %c0_0] : memref<8x128xf32, #tpu.memory_space<vmem>>, vector<8x128xf32>
    %c0_1 = arith.constant 0 : index
    %c0_2 = arith.constant 0 : index
    %1 = vector.load %arg1[%c0_1, %c0_2] : memref<8x128xf32, #tpu.memory_space<vmem>>, vector<8x128xf32>
    %2 = arith.addf %0, %1 : vector<8x128xf32>
    %c0_3 = arith.constant 0 : index
    %c0_4 = arith.constant 0 : index
    %3 = vector.load %arg3[%c0_3, %c0_4] : memref<8x128xf32, #tpu.memory_space<vmem>>, vector<8x128xf32>
    tpu.vector_store %arg3[%c0_3, %c0_4], %2 {strides = array<i32>} : memref<8x128xf32, #tpu.memory_space<vmem>>, vector<8x128xf32>,
    return
  }
  func.func @transform_0(%arg0: i32) -> (i32, i32) {
    %c0_i32 = arith.constant 0 : i32
    %c0_i32_0 = arith.constant 0 : i32
    %c0_i32_1 = arith.constant 0 : i32
    return %c0_i32, %c0_i32_0 : i32, i32
  }
  func.func @transform_1(%arg0: i32) -> (i32, i32) {
    %c0_i32 = arith.constant 0 : i32
    %c0_i32_0 = arith.constant 0 : i32
    return %arg0, %c0_i32 : i32, i32
  }
  func.func @transform_2(%arg0: i32) -> (i32, i32) {
    %c0_i32 = arith.constant 0 : i32
    %c0_i32_0 = arith.constant 0 : i32
    return %arg0, %c0_i32 : i32, i32
  }
}

module attributes {stable_mosaic.version = 11 : i64} {
  func.func @_attn_kernel(%arg0: i32, %arg1: i32, %arg2: memref<1x1x8xf32, #tpu.memory_space<vmem>>, %arg3: memref<1x8x32xbf16, #tpu.memory_space<vmem>>, %arg4: memref<1x8x32xbf16, #tpu.memory_space<vmem>>, %arg5: memref<1x8x32xbf16, #tpu.memory_space<vmem>>, %arg6: memref<1x8x32xbf16, #tpu.memory_space<vmem>>, %arg7: memref<8x32xf32, #tpu.memory_space<vmem>>) attributes {dimension_semantics = [#tpu.dimension_semantics<parallel>, #tpu.dimension_semantics<parallel>], iteration_bounds = array<i64: 2, 1>, scalar_prefetch = 0 : i64, scratch_operands = 1 : i64, tpu.core_type = #tpu.core_type<tc>, window_params = [{transform_indices = @transform_0, window_bounds = array<i64: 1, 1, 8>}, {transform_indices = @transform_1, window_bounds = array<i64: 1, 8, 32>}, {transform_indices = @transform_2, window_bounds = array<i64: 1, 8, 32>}, {transform_indices = @transform_3, window_bounds = array<i64: 1, 8, 32>}, {transform_indices = @transform_4, window_bounds = array<i64: 1, 8, 32>}]} {
    %c0 = arith.constant 0 : index
    %c0_0 = arith.constant 0 : index
    %c0_1 = arith.constant 0 : index
    %0 = vector.load %arg2[%c0, %c0_0, %c0_1] : memref<1x1x8xf32, #tpu.memory_space<vmem>>, vector<1x1x8xf32>
    %1 = vector.shape_cast %0 : vector<1x1x8xf32> to vector<1x8xf32>
    %2 = tpu.iota {dimensions = array<i32: 0>} : vector<8x8xi32>
    %3 = tpu.iota {dimensions = array<i32: 1>} : vector<8x8xi32>
    %4 = arith.cmpi sle, %3, %2 : vector<8x8xi32>
    %cst = arith.constant 0.000000e+00 : f32
    %cst_2 = arith.constant -1.000000e+30 : f32
    %5 = vector.broadcast %cst : f32 to vector<8x8xf32>
    %6 = vector.broadcast %cst_2 : f32 to vector<8x8xf32>
    %7 = arith.select %4, %5, %6 : vector<8x8xi1>, vector<8x8xf32>
    %8 = vector.broadcast %1 : vector<1x8xf32> to vector<8x8xf32>
    %9 = arith.addf %8, %7 : vector<8x8xf32>
    %c0_3 = arith.constant 0 : index
    %c0_4 = arith.constant 0 : index
    %c0_5 = arith.constant 0 : index
    %10 = vector.load %arg3[%c0_3, %c0_4, %c0_5] : memref<1x8x32xbf16, #tpu.memory_space<vmem>>, vector<1x8x8xbf16>
    %11 = vector.shape_cast %10 : vector<1x8x8xbf16> to vector<8x8xbf16>
    %c0_6 = arith.constant 0 : index
    %c0_7 = arith.constant 0 : index
    %c0_8 = arith.constant 0 : index
    %12 = vector.load %arg4[%c0_6, %c0_7, %c0_8] : memref<1x8x32xbf16, #tpu.memory_space<vmem>>, vector<1x8x8xbf16>
    %13 = vector.shape_cast %12 : vector<1x8x8xbf16> to vector<8x8xbf16>
    %c0_9 = arith.constant 0 : index
    %c0_10 = arith.constant 0 : index
    %c0_11 = arith.constant 0 : index
    %14 = vector.load %arg5[%c0_9, %c0_10, %c0_11] : memref<1x8x32xbf16, #tpu.memory_space<vmem>>, vector<1x8x8xbf16>
    %15 = vector.shape_cast %14 : vector<1x8x8xbf16> to vector<8x8xbf16>
    %cst_12 = arith.constant dense<0.000000e+00> : vector<8x8xf32>
    %16 = tpu.matmul %11, %13, %cst_12 {dimension_numbers = #tpu.dot_dimension_numbers<[1], [1], [0], [0], [0, 0, 1, 0], [], []>} : vector<8x8xbf16>, vector<8x8xbf16>, vector<8x8xf32> -> vector<8x8xf32>
    %17 = arith.addf %16, %9 : vector<8x8xf32>
    %cst_13 = arith.constant dense<0xFF800000> : vector<8xf32>
    %18 = vector.multi_reduction <maximumf>, %17, %cst_13 [1] : vector<8x8xf32> to vector<8xf32>
    %19 = vector.shape_cast %18 : vector<8xf32> to vector<8x1xf32>
    %20 = vector.broadcast %19 : vector<8x1xf32> to vector<8x8xf32>
    %21 = arith.subf %17, %20 : vector<8x8xf32>
    %22 = math.exp %21 : vector<8x8xf32>
    %cst_14 = arith.constant dense<0.000000e+00> : vector<8xf32>
    %23 = vector.multi_reduction <add>, %22, %cst_14 [1] : vector<8x8xf32> to vector<8xf32>
    %24 = vector.shape_cast %23 : vector<8xf32> to vector<8x1xf32>
    %25 = tpu.reciprocal %24 {approx = true} : vector<8x1xf32> -> vector<8x1xf32>
    %26 = vector.broadcast %25 : vector<8x1xf32> to vector<8x8xf32>
    %27 = arith.mulf %22, %26 : vector<8x8xf32>
    %28 = arith.truncf %27 : vector<8x8xf32> to vector<8x8xbf16>
    %cst_15 = arith.constant dense<0.000000e+00> : vector<8x8xf32>
    %29 = tpu.matmul %28, %15, %cst_15 {dimension_numbers = #tpu.dot_dimension_numbers<[1], [0], [0], [1], [0, 0, 1, 1], [], []>} : vector<8x8xbf16>, vector<8x8xbf16>, vector<8x8xf32> -> vector<8x8xf32>
    %c0_16 = arith.constant 0 : index
    %c0_17 = arith.constant 0 : index
    %30 = vector.load %arg7[%c0_16, %c0_17] : memref<8x32xf32, #tpu.memory_space<vmem>>, vector<8x8xf32>
    tpu.vector_store %arg7[%c0_16, %c0_17], %29 {strides = array<i32>} : memref<8x32xf32, #tpu.memory_space<vmem>>, vector<8x8xf32>,
    %c0_18 = arith.constant 0 : index
    %c0_19 = arith.constant 0 : index
    %c8 = arith.constant 8 : index
    %31 = vector.load %arg3[%c0_18, %c0_19, %c8] : memref<1x8x32xbf16, #tpu.memory_space<vmem>>, vector<1x8x8xbf16>
    %32 = vector.shape_cast %31 : vector<1x8x8xbf16> to vector<8x8xbf16>
    %c0_20 = arith.constant 0 : index
    %c0_21 = arith.constant 0 : index
    %c8_22 = arith.constant 8 : index
    %33 = vector.load %arg4[%c0_20, %c0_21, %c8_22] : memref<1x8x32xbf16, #tpu.memory_space<vmem>>, vector<1x8x8xbf16>
    %34 = vector.shape_cast %33 : vector<1x8x8xbf16> to vector<8x8xbf16>
    %c0_23 = arith.constant 0 : index
    %c0_24 = arith.constant 0 : index
    %c8_25 = arith.constant 8 : index
    %35 = vector.load %arg5[%c0_23, %c0_24, %c8_25] : memref<1x8x32xbf16, #tpu.memory_space<vmem>>, vector<1x8x8xbf16>
    %36 = vector.shape_cast %35 : vector<1x8x8xbf16> to vector<8x8xbf16>
    %cst_26 = arith.constant dense<0.000000e+00> : vector<8x8xf32>
    %37 = tpu.matmul %32, %34, %cst_26 {dimension_numbers = #tpu.dot_dimension_numbers<[1], [1], [0], [0], [0, 0, 1, 0], [], []>} : vector<8x8xbf16>, vector<8x8xbf16>, vector<8x8xf32> -> vector<8x8xf32>
    %38 = arith.addf %37, %9 : vector<8x8xf32>
    %cst_27 = arith.constant dense<0xFF800000> : vector<8xf32>
    %39 = vector.multi_reduction <maximumf>, %38, %cst_27 [1] : vector<8x8xf32> to vector<8xf32>
    %40 = vector.shape_cast %39 : vector<8xf32> to vector<8x1xf32>
    %41 = vector.broadcast %40 : vector<8x1xf32> to vector<8x8xf32>
    %42 = arith.subf %38, %41 : vector<8x8xf32>
    %43 = math.exp %42 : vector<8x8xf32>
    %cst_28 = arith.constant dense<0.000000e+00> : vector<8xf32>
    %44 = vector.multi_reduction <add>, %43, %cst_28 [1] : vector<8x8xf32> to vector<8xf32>
    %45 = vector.shape_cast %44 : vector<8xf32> to vector<8x1xf32>
    %46 = tpu.reciprocal %45 {approx = true} : vector<8x1xf32> -> vector<8x1xf32>
    %47 = vector.broadcast %46 : vector<8x1xf32> to vector<8x8xf32>
    %48 = arith.mulf %43, %47 : vector<8x8xf32>
    %49 = arith.truncf %48 : vector<8x8xf32> to vector<8x8xbf16>
    %cst_29 = arith.constant dense<0.000000e+00> : vector<8x8xf32>
    %50 = tpu.matmul %49, %36, %cst_29 {dimension_numbers = #tpu.dot_dimension_numbers<[1], [0], [0], [1], [0, 0, 1, 1], [], []>} : vector<8x8xbf16>, vector<8x8xbf16>, vector<8x8xf32> -> vector<8x8xf32>
    %c0_30 = arith.constant 0 : index
    %c8_31 = arith.constant 8 : index
    %51 = vector.load %arg7[%c0_30, %c8_31] : memref<8x32xf32, #tpu.memory_space<vmem>>, vector<8x8xf32>
    tpu.vector_store %arg7[%c0_30, %c8_31], %50 {strides = array<i32>} : memref<8x32xf32, #tpu.memory_space<vmem>>, vector<8x8xf32>,
    %c0_32 = arith.constant 0 : index
    %c0_33 = arith.constant 0 : index
    %c16 = arith.constant 16 : index
    %52 = vector.load %arg3[%c0_32, %c0_33, %c16] : memref<1x8x32xbf16, #tpu.memory_space<vmem>>, vector<1x8x8xbf16>
    %53 = vector.shape_cast %52 : vector<1x8x8xbf16> to vector<8x8xbf16>
    %c0_34 = arith.constant 0 : index
    %c0_35 = arith.constant 0 : index
    %c16_36 = arith.constant 16 : index
    %54 = vector.load %arg4[%c0_34, %c0_35, %c16_36] : memref<1x8x32xbf16, #tpu.memory_space<vmem>>, vector<1x8x8xbf16>
    %55 = vector.shape_cast %54 : vector<1x8x8xbf16> to vector<8x8xbf16>
    %c0_37 = arith.constant 0 : index
    %c0_38 = arith.constant 0 : index
    %c16_39 = arith.constant 16 : index
    %56 = vector.load %arg5[%c0_37, %c0_38, %c16_39] : memref<1x8x32xbf16, #tpu.memory_space<vmem>>, vector<1x8x8xbf16>
    %57 = vector.shape_cast %56 : vector<1x8x8xbf16> to vector<8x8xbf16>
    %cst_40 = arith.constant dense<0.000000e+00> : vector<8x8xf32>
    %58 = tpu.matmul %53, %55, %cst_40 {dimension_numbers = #tpu.dot_dimension_numbers<[1], [1], [0], [0], [0, 0, 1, 0], [], []>} : vector<8x8xbf16>, vector<8x8xbf16>, vector<8x8xf32> -> vector<8x8xf32>
    %59 = arith.addf %58, %9 : vector<8x8xf32>
    %cst_41 = arith.constant dense<0xFF800000> : vector<8xf32>
    %60 = vector.multi_reduction <maximumf>, %59, %cst_41 [1] : vector<8x8xf32> to vector<8xf32>
    %61 = vector.shape_cast %60 : vector<8xf32> to vector<8x1xf32>
    %62 = vector.broadcast %61 : vector<8x1xf32> to vector<8x8xf32>
    %63 = arith.subf %59, %62 : vector<8x8xf32>
    %64 = math.exp %63 : vector<8x8xf32>
    %cst_42 = arith.constant dense<0.000000e+00> : vector<8xf32>
    %65 = vector.multi_reduction <add>, %64, %cst_42 [1] : vector<8x8xf32> to vector<8xf32>
    %66 = vector.shape_cast %65 : vector<8xf32> to vector<8x1xf32>
    %67 = tpu.reciprocal %66 {approx = true} : vector<8x1xf32> -> vector<8x1xf32>
    %68 = vector.broadcast %67 : vector<8x1xf32> to vector<8x8xf32>
    %69 = arith.mulf %64, %68 : vector<8x8xf32>
    %70 = arith.truncf %69 : vector<8x8xf32> to vector<8x8xbf16>
    %cst_43 = arith.constant dense<0.000000e+00> : vector<8x8xf32>
    %71 = tpu.matmul %70, %57, %cst_43 {dimension_numbers = #tpu.dot_dimension_numbers<[1], [0], [0], [1], [0, 0, 1, 1], [], []>} : vector<8x8xbf16>, vector<8x8xbf16>, vector<8x8xf32> -> vector<8x8xf32>
    %c0_44 = arith.constant 0 : index
    %c16_45 = arith.constant 16 : index
    %72 = vector.load %arg7[%c0_44, %c16_45] : memref<8x32xf32, #tpu.memory_space<vmem>>, vector<8x8xf32>
    tpu.vector_store %arg7[%c0_44, %c16_45], %71 {strides = array<i32>} : memref<8x32xf32, #tpu.memory_space<vmem>>, vector<8x8xf32>,
    %c0_46 = arith.constant 0 : index
    %c0_47 = arith.constant 0 : index
    %c24 = arith.constant 24 : index
    %73 = vector.load %arg3[%c0_46, %c0_47, %c24] : memref<1x8x32xbf16, #tpu.memory_space<vmem>>, vector<1x8x8xbf16>
    %74 = vector.shape_cast %73 : vector<1x8x8xbf16> to vector<8x8xbf16>
    %c0_48 = arith.constant 0 : index
    %c0_49 = arith.constant 0 : index
    %c24_50 = arith.constant 24 : index
    %75 = vector.load %arg4[%c0_48, %c0_49, %c24_50] : memref<1x8x32xbf16, #tpu.memory_space<vmem>>, vector<1x8x8xbf16>
    %76 = vector.shape_cast %75 : vector<1x8x8xbf16> to vector<8x8xbf16>
    %c0_51 = arith.constant 0 : index
    %c0_52 = arith.constant 0 : index
    %c24_53 = arith.constant 24 : index
    %77 = vector.load %arg5[%c0_51, %c0_52, %c24_53] : memref<1x8x32xbf16, #tpu.memory_space<vmem>>, vector<1x8x8xbf16>
    %78 = vector.shape_cast %77 : vector<1x8x8xbf16> to vector<8x8xbf16>
    %cst_54 = arith.constant dense<0.000000e+00> : vector<8x8xf32>
    %79 = tpu.matmul %74, %76, %cst_54 {dimension_numbers = #tpu.dot_dimension_numbers<[1], [1], [0], [0], [0, 0, 1, 0], [], []>} : vector<8x8xbf16>, vector<8x8xbf16>, vector<8x8xf32> -> vector<8x8xf32>
    %80 = arith.addf %79, %9 : vector<8x8xf32>
    %cst_55 = arith.constant dense<0xFF800000> : vector<8xf32>
    %81 = vector.multi_reduction <maximumf>, %80, %cst_55 [1] : vector<8x8xf32> to vector<8xf32>
    %82 = vector.shape_cast %81 : vector<8xf32> to vector<8x1xf32>
    %83 = vector.broadcast %82 : vector<8x1xf32> to vector<8x8xf32>
    %84 = arith.subf %80, %83 : vector<8x8xf32>
    %85 = math.exp %84 : vector<8x8xf32>
    %cst_56 = arith.constant dense<0.000000e+00> : vector<8xf32>
    %86 = vector.multi_reduction <add>, %85, %cst_56 [1] : vector<8x8xf32> to vector<8xf32>
    %87 = vector.shape_cast %86 : vector<8xf32> to vector<8x1xf32>
    %88 = tpu.reciprocal %87 {approx = true} : vector<8x1xf32> -> vector<8x1xf32>
    %89 = vector.broadcast %88 : vector<8x1xf32> to vector<8x8xf32>
    %90 = arith.mulf %85, %89 : vector<8x8xf32>
    %91 = arith.truncf %90 : vector<8x8xf32> to vector<8x8xbf16>
    %cst_57 = arith.constant dense<0.000000e+00> : vector<8x8xf32>
    %92 = tpu.matmul %91, %78, %cst_57 {dimension_numbers = #tpu.dot_dimension_numbers<[1], [0], [0], [1], [0, 0, 1, 1], [], []>} : vector<8x8xbf16>, vector<8x8xbf16>, vector<8x8xf32> -> vector<8x8xf32>
    %c0_58 = arith.constant 0 : index
    %c24_59 = arith.constant 24 : index
    %93 = vector.load %arg7[%c0_58, %c24_59] : memref<8x32xf32, #tpu.memory_space<vmem>>, vector<8x8xf32>
    tpu.vector_store %arg7[%c0_58, %c24_59], %92 {strides = array<i32>} : memref<8x32xf32, #tpu.memory_space<vmem>>, vector<8x8xf32>,
    %c0_60 = arith.constant 0 : index
    %c0_61 = arith.constant 0 : index
    %94 = vector.load %arg7[%c0_60, %c0_61] : memref<8x32xf32, #tpu.memory_space<vmem>>, vector<8x32xf32>
    %95 = arith.truncf %94 : vector<8x32xf32> to vector<8x32xbf16>
    %c0_62 = arith.constant 0 : index
    %c0_63 = arith.constant 0 : index
    %c0_64 = arith.constant 0 : index
    %96 = vector.load %arg6[%c0_62, %c0_63, %c0_64] : memref<1x8x32xbf16, #tpu.memory_space<vmem>>, vector<1x8x32xbf16>
    %97 = vector.shape_cast %96 : vector<1x8x32xbf16> to vector<8x32xbf16>
    %98 = vector.shape_cast %95 : vector<8x32xbf16> to vector<1x8x32xbf16>
    tpu.vector_store %arg6[%c0_62, %c0_63, %c0_64], %98 {strides = array<i32>} : memref<1x8x32xbf16, #tpu.memory_space<vmem>>, vector<1x8x32xbf16>,
    return
  }
  func.func @transform_0(%arg0: i32, %arg1: i32) -> (i32, i32, i32) {
    %c0_i32 = arith.constant 0 : i32
    %c0_i32_0 = arith.constant 0 : i32
    %c0_i32_1 = arith.constant 0 : i32
    return %arg0, %c0_i32, %c0_i32_0 : i32, i32, i32
  }
  func.func @transform_1(%arg0: i32, %arg1: i32) -> (i32, i32, i32) {
    %c0_i32 = arith.constant 0 : i32
    %c0_i32_0 = arith.constant 0 : i32
    return %arg0, %c0_i32, %arg1 : i32, i32, i32
  }
  func.func @transform_2(%arg0: i32, %arg1: i32) -> (i32, i32, i32) {
    %c0_i32 = arith.constant 0 : i32
    %c0_i32_0 = arith.constant 0 : i32
    return %arg0, %c0_i32, %arg1 : i32, i32, i32
  }
  func.func @transform_3(%arg0: i32, %arg1: i32) -> (i32, i32, i32) {
    %c0_i32 = arith.constant 0 : i32
    %c0_i32_0 = arith.constant 0 : i32
    return %arg0, %c0_i32, %arg1 : i32, i32, i32
  }
  func.func @transform_4(%arg0: i32, %arg1: i32) -> (i32, i32, i32) {
    %c0_i32 = arith.constant 0 : i32
    %c0_i32_0 = arith.constant 0 : i32
    return %arg0, %c0_i32, %arg1 : i32, i32, i32
  }
}

module attributes {stable_mosaic.version = 11 : i64} {
  func.func @_fused_linear_kernel(%arg0: i32, %arg1: memref<16x32xbf16, #tpu.memory_space<vmem>>, %arg2: memref<1x32xf32, #tpu.memory_space<vmem>>, %arg3: memref<1x32xf32, #tpu.memory_space<vmem>>, %arg4: memref<32x96xbf16, #tpu.memory_space<vmem>>, %arg5: memref<1x96xf32, #tpu.memory_space<vmem>>, %arg6: memref<16x32xbf16, #tpu.memory_space<vmem>>, %arg7: memref<16x32xbf16, #tpu.memory_space<vmem>>, %arg8: memref<16x32xbf16, #tpu.memory_space<vmem>>) attributes {dimension_semantics = [#tpu.dimension_semantics<parallel>], iteration_bounds = array<i64: 1>, scalar_prefetch = 0 : i64, scratch_operands = 0 : i64, tpu.core_type = #tpu.core_type<tc>, window_params = [{transform_indices = @transform_0, window_bounds = array<i64: 16, 32>}, {pipeline_mode = #tpu.pipeline_mode<synchronous>, transform_indices = @transform_1, window_bounds = array<i64: 1, 32>}, {pipeline_mode = #tpu.pipeline_mode<synchronous>, transform_indices = @transform_2, window_bounds = array<i64: 1, 32>}, {pipeline_mode = #tpu.pipeline_mode<synchronous>, transform_indices = @transform_3, window_bounds = array<i64: 32, 96>}, {pipeline_mode = #tpu.pipeline_mode<synchronous>, transform_indices = @transform_4, window_bounds = array<i64: 1, 96>}, {transform_indices = @transform_5, window_bounds = array<i64: 16, 32>}, {transform_indices = @transform_6, window_bounds = array<i64: 16, 32>}, {transform_indices = @transform_7, window_bounds = array<i64: 16, 32>}]} {
    %c0 = arith.constant 0 : index
    %c0_0 = arith.constant 0 : index
    %0 = vector.load %arg1[%c0, %c0_0] : memref<16x32xbf16, #tpu.memory_space<vmem>>, vector<16x32xbf16>
    %1 = arith.extf %0 : vector<16x32xbf16> to vector<16x32xf32>
    %cst = arith.constant dense<0.000000e+00> : vector<16xf32>
    %2 = vector.multi_reduction <add>, %1, %cst [1] : vector<16x32xf32> to vector<16xf32>
    %3 = vector.shape_cast %2 : vector<16xf32> to vector<16x1xf32>
    %cst_1 = arith.constant 3.200000e+01 : f32
    %4 = vector.broadcast %cst_1 : f32 to vector<16x1xf32>
    %5 = arith.divf %3, %4 : vector<16x1xf32>
    %6 = vector.broadcast %5 : vector<16x1xf32> to vector<16x32xf32>
    %7 = arith.subf %1, %6 : vector<16x32xf32>
    %8 = arith.mulf %7, %7 : vector<16x32xf32>
    %cst_2 = arith.constant dense<0.000000e+00> : vector<16xf32>
    %9 = vector.multi_reduction <add>, %8, %cst_2 [1] : vector<16x32xf32> to vector<16xf32>
    %10 = vector.shape_cast %9 : vector<16xf32> to vector<16x1xf32>
    %cst_3 = arith.constant 3.200000e+01 : f32
    %11 = vector.broadcast %cst_3 : f32 to vector<16x1xf32>
    %12 = arith.divf %10, %11 : vector<16x1xf32>
    %cst_4 = arith.constant 9.99999974E-6 : f32
    %13 = vector.broadcast %cst_4 : f32 to vector<16x1xf32>
    %14 = arith.addf %12, %13 : vector<16x1xf32>
    %15 = math.rsqrt %14 : vector<16x1xf32>
    %16 = vector.broadcast %15 : vector<16x1xf32> to vector<16x32xf32>
    %17 = arith.mulf %7, %16 : vector<16x32xf32>
    %c0_5 = arith.constant 0 : index
    %c0_6 = arith.constant 0 : index
    %18 = vector.load %arg2[%c0_5, %c0_6] : memref<1x32xf32, #tpu.memory_space<vmem>>, vector<1x32xf32>
    %19 = vector.broadcast %18 : vector<1x32xf32> to vector<16x32xf32>
    %20 = arith.mulf %17, %19 : vector<16x32xf32>
    %c0_7 = arith.constant 0 : index
    %c0_8 = arith.constant 0 : index
    %21 = vector.load %arg3[%c0_7, %c0_8] : memref<1x32xf32, #tpu.memory_space<vmem>>, vector<1x32xf32>
    %22 = vector.broadcast %21 : vector<1x32xf32> to vector<16x32xf32>
    %23 = arith.addf %20, %22 : vector<16x32xf32>
    %24 = arith.truncf %23 : vector<16x32xf32> to vector<16x32xbf16>
    %c0_9 = arith.constant 0 : index
    %c0_10 = arith.constant 0 : index
    %25 = vector.load %arg4[%c0_9, %c0_10] : memref<32x96xbf16, #tpu.memory_space<vmem>>, vector<32x96xbf16>
    %cst_11 = arith.constant dense<0.000000e+00> : vector<16x96xf32>
    %26 = tpu.matmul %24, %25, %cst_11 {dimension_numbers = #tpu.dot_dimension_numbers<[1], [0], [0], [1], [0, 0, 1, 1], [], []>} : vector<16x32xbf16>, vector<32x96xbf16>, vector<16x96xf32> -> vector<16x96xf32>
    %c0_12 = arith.constant 0 : index
    %c0_13 = arith.constant 0 : index
    %27 = vector.load %arg5[%c0_12, %c0_13] : memref<1x96xf32, #tpu.memory_space<vmem>>, vector<1x96xf32>
    %28 = vector.broadcast %27 : vector<1x96xf32> to vector<16x96xf32>
    %29 = arith.addf %26, %28 : vector<16x96xf32>
    %30 = vector.extract_strided_slice %29 {offsets = [0, 0], sizes = [16, 32], strides = [1, 1]} : vector<16x96xf32> to vector<16x32xf32>
    %31 = arith.truncf %30 : vector<16x32xf32> to vector<16x32xbf16>
    %c0_14 = arith.constant 0 : index
    %c0_15 = arith.constant 0 : index
    %32 = vector.load %arg6[%c0_14, %c0_15] : memref<16x32xbf16, #tpu.memory_space<vmem>>, vector<16x32xbf16>
    tpu.vector_store %arg6[%c0_14, %c0_15], %31 {strides = array<i32>} : memref<16x32xbf16, #tpu.memory_space<vmem>>, vector<16x32xbf16>,
    %33 = vector.extract_strided_slice %29 {offsets = [0, 32], sizes = [16, 32], strides = [1, 1]} : vector<16x96xf32> to vector<16x32xf32>
    %34 = arith.truncf %33 : vector<16x32xf32> to vector<16x32xbf16>
    %c0_16 = arith.constant 0 : index
    %c0_17 = arith.constant 0 : index
    %35 = vector.load %arg7[%c0_16, %c0_17] : memref<16x32xbf16, #tpu.memory_space<vmem>>, vector<16x32xbf16>
    tpu.vector_store %arg7[%c0_16, %c0_17], %34 {strides = array<i32>} : memref<16x32xbf16, #tpu.memory_space<vmem>>, vector<16x32xbf16>,
    %36 = vector.extract_strided_slice %29 {offsets = [0, 64], sizes = [16, 32], strides = [1, 1]} : vector<16x96xf32> to vector<16x32xf32>
    %37 = arith.truncf %36 : vector<16x32xf32> to vector<16x32xbf16>
    %c0_18 = arith.constant 0 : index
    %c0_19 = arith.constant 0 : index
    %38 = vector.load %arg8[%c0_18, %c0_19] : memref<16x32xbf16, #tpu.memory_space<vmem>>, vector<16x32xbf16>
    tpu.vector_store %arg8[%c0_18, %c0_19], %37 {strides = array<i32>} : memref<16x32xbf16, #tpu.memory_space<vmem>>, vector<16x32xbf16>,
    return
  }
  func.func @transform_0(%arg0: i32) -> (i32, i32) {
    %c0_i32 = arith.constant 0 : i32
    %c0_i32_0 = arith.constant 0 : i32
    return %arg0, %c0_i32 : i32, i32
  }
  func.func @transform_1(%arg0: i32) -> (i32, i32) {
    %c0_i32 = arith.constant 0 : i32
    %c0_i32_0 = arith.constant 0 : i32
    %c0_i32_1 = arith.constant 0 : i32
    return %c0_i32, %c0_i32_0 : i32, i32
  }
  func.func @transform_2(%arg0: i32) -> (i32, i32) {
    %c0_i32 = arith.constant 0 : i32
    %c0_i32_0 = arith.constant 0 : i32
    %c0_i32_1 = arith.constant 0 : i32
    return %c0_i32, %c0_i32_0 : i32, i32
  }
  func.func @transform_3(%arg0: i32) -> (i32, i32) {
    %c0_i32 = arith.constant 0 : i32
    %c0_i32_0 = arith.constant 0 : i32
    %c0_i32_1 = arith.constant 0 : i32
    return %c0_i32, %c0_i32_0 : i32, i32
  }
  func.func @transform_4(%arg0: i32) -> (i32, i32) {
    %c0_i32 = arith.constant 0 : i32
    %c0_i32_0 = arith.constant 0 : i32
    %c0_i32_1 = arith.constant 0 : i32
    return %c0_i32, %c0_i32_0 : i32, i32
  }
  func.func @transform_5(%arg0: i32) -> (i32, i32) {
    %c0_i32 = arith.constant 0 : i32
    %c0_i32_0 = arith.constant 0 : i32
    return %arg0, %c0_i32 : i32, i32
  }
  func.func @transform_6(%arg0: i32) -> (i32, i32) {
    %c0_i32 = arith.constant 0 : i32
    %c0_i32_0 = arith.constant 0 : i32
    return %arg0, %c0_i32 : i32, i32
  }
  func.func @transform_7(%arg0: i32) -> (i32, i32) {
    %c0_i32 = arith.constant 0 : i32
    %c0_i32_0 = arith.constant 0 : i32
    return %arg0, %c0_i32 : i32, i32
  }
}

module attributes {stable_mosaic.version = 11 : i64} {
  func.func @_fused_linear_kernel(%arg0: i32, %arg1: memref<16x32xbf16, #tpu.memory_space<vmem>>, %arg2: memref<32x32xbf16, #tpu.memory_space<vmem>>, %arg3: memref<1x32xf32, #tpu.memory_space<vmem>>, %arg4: memref<16x32xbf16, #tpu.memory_space<vmem>>, %arg5: memref<16x32xbf16, #tpu.memory_space<vmem>>) attributes {dimension_semantics = [#tpu.dimension_semantics<parallel>], iteration_bounds = array<i64: 1>, scalar_prefetch = 0 : i64, scratch_operands = 0 : i64, tpu.core_type = #tpu.core_type<tc>, window_params = [{transform_indices = @transform_0, window_bounds = array<i64: 16, 32>}, {pipeline_mode = #tpu.pipeline_mode<synchronous>, transform_indices = @transform_1, window_bounds = array<i64: 32, 32>}, {pipeline_mode = #tpu.pipeline_mode<synchronous>, transform_indices = @transform_2, window_bounds = array<i64: 1, 32>}, {transform_indices = @transform_3, window_bounds = array<i64: 16, 32>}, {transform_indices = @transform_4, window_bounds = array<i64: 16, 32>}]} {
    %c0 = arith.constant 0 : index
    %c0_0 = arith.constant 0 : index
    %0 = vector.load %arg1[%c0, %c0_0] : memref<16x32xbf16, #tpu.memory_space<vmem>>, vector<16x32xbf16>
    %c0_1 = arith.constant 0 : index
    %c0_2 = arith.constant 0 : index
    %1 = vector.load %arg2[%c0_1, %c0_2] : memref<32x32xbf16, #tpu.memory_space<vmem>>, vector<32x32xbf16>
    %cst = arith.constant dense<0.000000e+00> : vector<16x32xf32>
    %2 = tpu.matmul %0, %1, %cst {dimension_numbers = #tpu.dot_dimension_numbers<[1], [0], [0], [1], [0, 0, 1, 1], [], []>} : vector<16x32xbf16>, vector<32x32xbf16>, vector<16x32xf32> -> vector<16x32xf32>
    %c0_3 = arith.constant 0 : index
    %c0_4 = arith.constant 0 : index
    %3 = vector.load %arg3[%c0_3, %c0_4] : memref<1x32xf32, #tpu.memory_space<vmem>>, vector<1x32xf32>
    %4 = vector.broadcast %3 : vector<1x32xf32> to vector<16x32xf32>
    %5 = arith.addf %2, %4 : vector<16x32xf32>
    %c0_5 = arith.constant 0 : index
    %c0_6 = arith.constant 0 : index
    %6 = vector.load %arg4[%c0_5, %c0_6] : memref<16x32xbf16, #tpu.memory_space<vmem>>, vector<16x32xbf16>
    %7 = arith.extf %6 : vector<16x32xbf16> to vector<16x32xf32>
    %8 = arith.addf %5, %7 : vector<16x32xf32>
    %9 = arith.truncf %8 : vector<16x32xf32> to vector<16x32xbf16>
    %c0_7 = arith.constant 0 : index
    %c0_8 = arith.constant 0 : index
    %10 = vector.load %arg5[%c0_7, %c0_8] : memref<16x32xbf16, #tpu.memory_space<vmem>>, vector<16x32xbf16>
    tpu.vector_store %arg5[%c0_7, %c0_8], %9 {strides = array<i32>} : memref<16x32xbf16, #tpu.memory_space<vmem>>, vector<16x32xbf16>,
    return
  }
  func.func @transform_0(%arg0: i32) -> (i32, i32) {
    %c0_i32 = arith.constant 0 : i32
    %c0_i32_0 = arith.constant 0 : i32
    return %arg0, %c0_i32 : i32, i32
  }
  func.func @transform_1(%arg0: i32) -> (i32, i32) {
    %c0_i32 = arith.constant 0 : i32
    %c0_i32_0 = arith.constant 0 : i32
    %c0_i32_1 = arith.constant 0 : i32
    return %c0_i32, %c0_i32_0 : i32, i32
  }
  func.func @transform_2(%arg0: i32) -> (i32, i32) {
    %c0_i32 = arith.constant 0 : i32
    %c0_i32_0 = arith.constant 0 : i32
    %c0_i32_1 = arith.constant 0 : i32
    return %c0_i32, %c0_i32_0 : i32, i32
  }
  func.func @transform_3(%arg0: i32) -> (i32, i32) {
    %c0_i32 = arith.constant 0 : i32
    %c0_i32_0 = arith.constant 0 : i32
    return %arg0, %c0_i32 : i32, i32
  }
  func.func @transform_4(%arg0: i32) -> (i32, i32) {
    %c0_i32 = arith.constant 0 : i32
    %c0_i32_0 = arith.constant 0 : i32
    return %arg0, %c0_i32 : i32, i32
  }
}

module attributes {stable_mosaic.version = 11 : i64} {
  func.func @_fused_linear_kernel(%arg0: i32, %arg1: memref<16x32xbf16, #tpu.memory_space<vmem>>, %arg2: memref<1x32xf32, #tpu.memory_space<vmem>>, %arg3: memref<1x32xf32, #tpu.memory_space<vmem>>, %arg4: memref<32x32xbf16, #tpu.memory_space<vmem>>, %arg5: memref<1x32xf32, #tpu.memory_space<vmem>>, %arg6: memref<16x32xbf16, #tpu.memory_space<vmem>>) attributes {dimension_semantics = [#tpu.dimension_semantics<parallel>], iteration_bounds = array<i64: 1>, scalar_prefetch = 0 : i64, scratch_operands = 0 : i64, tpu.core_type = #tpu.core_type<tc>, window_params = [{transform_indices = @transform_0, window_bounds = array<i64: 16, 32>}, {pipeline_mode = #tpu.pipeline_mode<synchronous>, transform_indices = @transform_1, window_bounds = array<i64: 1, 32>}, {pipeline_mode = #tpu.pipeline_mode<synchronous>, transform_indices = @transform_2, window_bounds = array<i64: 1, 32>}, {pipeline_mode = #tpu.pipeline_mode<synchronous>, transform_indices = @transform_3, window_bounds = array<i64: 32, 32>}, {pipeline_mode = #tpu.pipeline_mode<synchronous>, transform_indices = @transform_4, window_bounds = array<i64: 1, 32>}, {transform_indices = @transform_5, window_bounds = array<i64: 16, 32>}]} {
    %c0 = arith.constant 0 : index
    %c0_0 = arith.constant 0 : index
    %0 = vector.load %arg1[%c0, %c0_0] : memref<16x32xbf16, #tpu.memory_space<vmem>>, vector<16x32xbf16>
    %1 = arith.extf %0 : vector<16x32xbf16> to vector<16x32xf32>
    %cst = arith.constant dense<0.000000e+00> : vector<16xf32>
    %2 = vector.multi_reduction <add>, %1, %cst [1] : vector<16x32xf32> to vector<16xf32>
    %3 = vector.shape_cast %2 : vector<16xf32> to vector<16x1xf32>
    %cst_1 = arith.constant 3.200000e+01 : f32
    %4 = vector.broadcast %cst_1 : f32 to vector<16x1xf32>
    %5 = arith.divf %3, %4 : vector<16x1xf32>
    %6 = vector.broadcast %5 : vector<16x1xf32> to vector<16x32xf32>
    %7 = arith.subf %1, %6 : vector<16x32xf32>
    %8 = arith.mulf %7, %7 : vector<16x32xf32>
    %cst_2 = arith.constant dense<0.000000e+00> : vector<16xf32>
    %9 = vector.multi_reduction <add>, %8, %cst_2 [1] : vector<16x32xf32> to vector<16xf32>
    %10 = vector.shape_cast %9 : vector<16xf32> to vector<16x1xf32>
    %cst_3 = arith.constant 3.200000e+01 : f32
    %11 = vector.broadcast %cst_3 : f32 to vector<16x1xf32>
    %12 = arith.divf %10, %11 : vector<16x1xf32>
    %cst_4 = arith.constant 9.99999974E-6 : f32
    %13 = vector.broadcast %cst_4 : f32 to vector<16x1xf32>
    %14 = arith.addf %12, %13 : vector<16x1xf32>
    %15 = math.rsqrt %14 : vector<16x1xf32>
    %16 = vector.broadcast %15 : vector<16x1xf32> to vector<16x32xf32>
    %17 = arith.mulf %7, %16 : vector<16x32xf32>
    %c0_5 = arith.constant 0 : index
    %c0_6 = arith.constant 0 : index
    %18 = vector.load %arg2[%c0_5, %c0_6] : memref<1x32xf32, #tpu.memory_space<vmem>>, vector<1x32xf32>
    %19 = vector.broadcast %18 : vector<1x32xf32> to vector<16x32xf32>
    %20 = arith.mulf %17, %19 : vector<16x32xf32>
    %c0_7 = arith.constant 0 : index
    %c0_8 = arith.constant 0 : index
    %21 = vector.load %arg3[%c0_7, %c0_8] : memref<1x32xf32, #tpu.memory_space<vmem>>, vector<1x32xf32>
    %22 = vector.broadcast %21 : vector<1x32xf32> to vector<16x32xf32>
    %23 = arith.addf %20, %22 : vector<16x32xf32>
    %24 = arith.truncf %23 : vector<16x32xf32> to vector<16x32xbf16>
    %c0_9 = arith.constant 0 : index
    %c0_10 = arith.constant 0 : index
    %25 = vector.load %arg4[%c0_9, %c0_10] : memref<32x32xbf16, #tpu.memory_space<vmem>>, vector<32x32xbf16>
    %cst_11 = arith.constant dense<0.000000e+00> : vector<16x32xf32>
    %26 = tpu.matmul %24, %25, %cst_11 {dimension_numbers = #tpu.dot_dimension_numbers<[1], [0], [0], [1], [0, 0, 1, 1], [], []>} : vector<16x32xbf16>, vector<32x32xbf16>, vector<16x32xf32> -> vector<16x32xf32>
    %c0_12 = arith.constant 0 : index
    %c0_13 = arith.constant 0 : index
    %27 = vector.load %arg5[%c0_12, %c0_13] : memref<1x32xf32, #tpu.memory_space<vmem>>, vector<1x32xf32>
    %28 = vector.broadcast %27 : vector<1x32xf32> to vector<16x32xf32>
    %29 = arith.addf %26, %28 : vector<16x32xf32>
    %30 = arith.truncf %29 : vector<16x32xf32> to vector<16x32xbf16>
    %c0_14 = arith.constant 0 : index
    %c0_15 = arith.constant 0 : index
    %31 = vector.load %arg6[%c0_14, %c0_15] : memref<16x32xbf16, #tpu.memory_space<vmem>>, vector<16x32xbf16>
    tpu.vector_store %arg6[%c0_14, %c0_15], %30 {strides = array<i32>} : memref<16x32xbf16, #tpu.memory_space<vmem>>, vector<16x32xbf16>,
    return
  }
  func.func @transform_0(%arg0: i32) -> (i32, i32) {
    %c0_i32 = arith.constant 0 : i32
    %c0_i32_0 = arith.constant 0 : i32
    return %arg0, %c0_i32 : i32, i32
  }
  func.func @transform_1(%arg0: i32) -> (i32, i32) {
    %c0_i32 = arith.constant 0 : i32
    %c0_i32_0 = arith.constant 0 : i32
    %c0_i32_1 = arith.constant 0 : i32
    return %c0_i32, %c0_i32_0 : i32, i32
  }
  func.func @transform_2(%arg0: i32) -> (i32, i32) {
    %c0_i32 = arith.constant 0 : i32
    %c0_i32_0 = arith.constant 0 : i32
    %c0_i32_1 = arith.constant 0 : i32
    return %c0_i32, %c0_i32_0 : i32, i32
  }
  func.func @transform_3(%arg0: i32) -> (i32, i32) {
    %c0_i32 = arith.constant 0 : i32
    %c0_i32_0 = arith.constant 0 : i32
    %c0_i32_1 = arith.constant 0 : i32
    return %c0_i32, %c0_i32_0 : i32, i32
  }
  func.func @transform_4(%arg0: i32) -> (i32, i32) {
    %c0_i32 = arith.constant 0 : i32
    %c0_i32_0 = arith.constant 0 : i32
    %c0_i32_1 = arith.constant 0 : i32
    return %c0_i32, %c0_i32_0 : i32, i32
  }
  func.func @transform_5(%arg0: i32) -> (i32, i32) {
    %c0_i32 = arith.constant 0 : i32
    %c0_i32_0 = arith.constant 0 : i32
    return %arg0, %c0_i32 : i32, i32
  }
}

module attributes {stable_mosaic.version = 11 : i64} {
  func.func @_fused_linear_kernel(%arg0: i32, %arg1: memref<20x32xbf16, #tpu.memory_space<vmem>>, %arg2: memref<32x64xbf16, #tpu.memory_space<vmem>>, %arg3: memref<1x64xf32, #tpu.memory_space<vmem>>, %arg4: memref<20x32xbf16, #tpu.memory_space<vmem>>, %arg5: memref<20x32xbf16, #tpu.memory_space<vmem>>) attributes {dimension_semantics = [#tpu.dimension_semantics<parallel>], iteration_bounds = array<i64: 1>, scalar_prefetch = 0 : i64, scratch_operands = 0 : i64, tpu.core_type = #tpu.core_type<tc>, window_params = [{transform_indices = @transform_0, window_bounds = array<i64: 20, 32>}, {pipeline_mode = #tpu.pipeline_mode<synchronous>, transform_indices = @transform_1, window_bounds = array<i64: 32, 64>}, {pipeline_mode = #tpu.pipeline_mode<synchronous>, transform_indices = @transform_2, window_bounds = array<i64: 1, 64>}, {transform_indices = @transform_3, window_bounds = array<i64: 20, 32>}, {transform_indices = @transform_4, window_bounds = array<i64: 20, 32>}]} {
    %c0 = arith.constant 0 : index
    %c0_0 = arith.constant 0 : index
    %0 = vector.load %arg1[%c0, %c0_0] : memref<20x32xbf16, #tpu.memory_space<vmem>>, vector<20x32xbf16>
    %c0_1 = arith.constant 0 : index
    %c0_2 = arith.constant 0 : index
    %1 = vector.load %arg2[%c0_1, %c0_2] : memref<32x64xbf16, #tpu.memory_space<vmem>>, vector<32x64xbf16>
    %cst = arith.constant dense<0.000000e+00> : vector<20x64xf32>
    %2 = tpu.matmul %0, %1, %cst {dimension_numbers = #tpu.dot_dimension_numbers<[1], [0], [0], [1], [0, 0, 1, 1], [], []>} : vector<20x32xbf16>, vector<32x64xbf16>, vector<20x64xf32> -> vector<20x64xf32>
    %c0_3 = arith.constant 0 : index
    %c0_4 = arith.constant 0 : index
    %3 = vector.load %arg3[%c0_3, %c0_4] : memref<1x64xf32, #tpu.memory_space<vmem>>, vector<1x64xf32>
    %4 = vector.broadcast %3 : vector<1x64xf32> to vector<20x64xf32>
    %5 = arith.addf %2, %4 : vector<20x64xf32>
    %6 = vector.extract_strided_slice %5 {offsets = [0, 0], sizes = [20, 32], strides = [1, 1]} : vector<20x64xf32> to vector<20x32xf32>
    %7 = arith.truncf %6 : vector<20x32xf32> to vector<20x32xbf16>
    %c0_5 = arith.constant 0 : index
    %c0_6 = arith.constant 0 : index
    %8 = vector.load %arg4[%c0_5, %c0_6] : memref<20x32xbf16, #tpu.memory_space<vmem>>, vector<20x32xbf16>
    tpu.vector_store %arg4[%c0_5, %c0_6], %7 {strides = array<i32>} : memref<20x32xbf16, #tpu.memory_space<vmem>>, vector<20x32xbf16>,
    %9 = vector.extract_strided_slice %5 {offsets = [0, 32], sizes = [20, 32], strides = [1, 1]} : vector<20x64xf32> to vector<20x32xf32>
    %10 = arith.truncf %9 : vector<20x32xf32> to vector<20x32xbf16>
    %c0_7 = arith.constant 0 : index
    %c0_8 = arith.constant 0 : index
    %11 = vector.load %arg5[%c0_7, %c0_8] : memref<20x32xbf16, #tpu.memory_space<vmem>>, vector<20x32xbf16>
    tpu.vector_store %arg5[%c0_7, %c0_8], %10 {strides = array<i32>} : memref<20x32xbf16, #tpu.memory_space<vmem>>, vector<20x32xbf16>,
    return
  }
  func.func @transform_0(%arg0: i32) -> (i32, i32) {
    %c0_i32 = arith.constant 0 : i32
    %c0_i32_0 = arith.constant 0 : i32
    return %arg0, %c0_i32 : i32, i32
  }
  func.func @transform_1(%arg0: i32) -> (i32, i32) {
    %c0_i32 = arith.constant 0 : i32
    %c0_i32_0 = arith.constant 0 : i32
    %c0_i32_1 = arith.constant 0 : i32
    return %c0_i32, %c0_i32_0 : i32, i32
  }
  func.func @transform_2(%arg0: i32) -> (i32, i32) {
    %c0_i32 = arith.constant 0 : i32
    %c0_i32_0 = arith.constant 0 : i32
    %c0_i32_1 = arith.constant 0 : i32
    return %c0_i32, %c0_i32_0 : i32, i32
  }
  func.func @transform_3(%arg0: i32) -> (i32, i32) {
    %c0_i32 = arith.constant 0 : i32
    %c0_i32_0 = arith.constant 0 : i32
    return %arg0, %c0_i32 : i32, i32
  }
  func.func @transform_4(%arg0: i32) -> (i32, i32) {
    %c0_i32 = arith.constant 0 : i32
    %c0_i32_0 = arith.constant 0 : i32
    return %arg0, %c0_i32 : i32, i32
  }
}

module attributes {stable_mosaic.version = 11 : i64} {
  func.func @_attn_kernel(%arg0: i32, %arg1: i32, %arg2: memref<1x1x10xf32, #tpu.memory_space<vmem>>, %arg3: memref<1x8x32xbf16, #tpu.memory_space<vmem>>, %arg4: memref<1x10x32xbf16, #tpu.memory_space<vmem>>, %arg5: memref<1x10x32xbf16, #tpu.memory_space<vmem>>, %arg6: memref<1x8x32xbf16, #tpu.memory_space<vmem>>, %arg7: memref<8x32xf32, #tpu.memory_space<vmem>>) attributes {dimension_semantics = [#tpu.dimension_semantics<parallel>, #tpu.dimension_semantics<parallel>], iteration_bounds = array<i64: 2, 1>, scalar_prefetch = 0 : i64, scratch_operands = 1 : i64, tpu.core_type = #tpu.core_type<tc>, window_params = [{transform_indices = @transform_0, window_bounds = array<i64: 1, 1, 10>}, {transform_indices = @transform_1, window_bounds = array<i64: 1, 8, 32>}, {transform_indices = @transform_2, window_bounds = array<i64: 1, 10, 32>}, {transform_indices = @transform_3, window_bounds = array<i64: 1, 10, 32>}, {transform_indices = @transform_4, window_bounds = array<i64: 1, 8, 32>}]} {
    %c0 = arith.constant 0 : index
    %c0_0 = arith.constant 0 : index
    %c0_1 = arith.constant 0 : index
    %0 = vector.load %arg2[%c0, %c0_0, %c0_1] : memref<1x1x10xf32, #tpu.memory_space<vmem>>, vector<1x1x10xf32>
    %1 = vector.shape_cast %0 : vector<1x1x10xf32> to vector<1x10xf32>
    %c0_2 = arith.constant 0 : index
    %c0_3 = arith.constant 0 : index
    %c0_4 = arith.constant 0 : index
    %2 = vector.load %arg3[%c0_2, %c0_3, %c0_4] : memref<1x8x32xbf16, #tpu.memory_space<vmem>>, vector<1x8x8xbf16>
    %3 = vector.shape_cast %2 : vector<1x8x8xbf16> to vector<8x8xbf16>
    %c0_5 = arith.constant 0 : index
    %c0_6 = arith.constant 0 : index
    %c0_7 = arith.constant 0 : index
    %4 = vector.load %arg4[%c0_5, %c0_6, %c0_7] : memref<1x10x32xbf16, #tpu.memory_space<vmem>>, vector<1x10x8xbf16>
    %5 = vector.shape_cast %4 : vector<1x10x8xbf16> to vector<10x8xbf16>
    %c0_8 = arith.constant 0 : index
    %c0_9 = arith.constant 0 : index
    %c0_10 = arith.constant 0 : index
    %6 = vector.load %arg5[%c0_8, %c0_9, %c0_10] : memref<1x10x32xbf16, #tpu.memory_space<vmem>>, vector<1x10x8xbf16>
    %7 = vector.shape_cast %6 : vector<1x10x8xbf16> to vector<10x8xbf16>
    %cst = arith.constant dense<0.000000e+00> : vector<8x10xf32>
    %8 = tpu.matmul %3, %5, %cst {dimension_numbers = #tpu.dot_dimension_numbers<[1], [1], [0], [0], [0, 0, 1, 0], [], []>} : vector<8x8xbf16>, vector<10x8xbf16>, vector<8x10xf32> -> vector<8x10xf32>
    %9 = vector.broadcast %1 : vector<1x10xf32> to vector<8x10xf32>
    %10 = arith.addf %8, %9 : vector<8x10xf32>
    %cst_11 = arith.constant dense<0xFF800000> : vector<8xf32>
    %11 = vector.multi_reduction <maximumf>, %10, %cst_11 [1] : vector<8x10xf32> to vector<8xf32>
    %12 = vector.shape_cast %11 : vector<8xf32> to vector<8x1xf32>
    %13 = vector.broadcast %12 : vector<8x1xf32> to vector<8x10xf32>
    %14 = arith.subf %10, %13 : vector<8x10xf32>
    %15 = math.exp %14 : vector<8x10xf32>
    %cst_12 = arith.constant dense<0.000000e+00> : vector<8xf32>
    %16 = vector.multi_reduction <add>, %15, %cst_12 [1] : vector<8x10xf32> to vector<8xf32>
    %17 = vector.shape_cast %16 : vector<8xf32> to vector<8x1xf32>
    %18 = tpu.reciprocal %17 {approx = true} : vector<8x1xf32> -> vector<8x1xf32>
    %19 = vector.broadcast %18 : vector<8x1xf32> to vector<8x10xf32>
    %20 = arith.mulf %15, %19 : vector<8x10xf32>
    %21 = arith.truncf %20 : vector<8x10xf32> to vector<8x10xbf16>
    %cst_13 = arith.constant dense<0.000000e+00> : vector<8x8xf32>
    %22 = tpu.matmul %21, %7, %cst_13 {dimension_numbers = #tpu.dot_dimension_numbers<[1], [0], [0], [1], [0, 0, 1, 1], [], []>} : vector<8x10xbf16>, vector<10x8xbf16>, vector<8x8xf32> -> vector<8x8xf32>
    %c0_14 = arith.constant 0 : index
    %c0_15 = arith.constant 0 : index
    %23 = vector.load %arg7[%c0_14, %c0_15] : memref<8x32xf32, #tpu.memory_space<vmem>>, vector<8x8xf32>
    tpu.vector_store %arg7[%c0_14, %c0_15], %22 {strides = array<i32>} : memref<8x32xf32, #tpu.memory_space<vmem>>, vector<8x8xf32>,
    %c0_16 = arith.constant 0 : index
    %c0_17 = arith.constant 0 : index
    %c8 = arith.constant 8 : index
    %24 = vector.load %arg3[%c0_16, %c0_17, %c8] : memref<1x8x32xbf16, #tpu.memory_space<vmem>>, vector<1x8x8xbf16>
    %25 = vector.shape_cast %24 : vector<1x8x8xbf16> to vector<8x8xbf16>
    %c0_18 = arith.constant 0 : index
    %c0_19 = arith.constant 0 : index
    %c8_20 = arith.constant 8 : index
    %26 = vector.load %arg4[%c0_18, %c0_19, %c8_20] : memref<1x10x32xbf16, #tpu.memory_space<vmem>>, vector<1x10x8xbf16>
    %27 = vector.shape_cast %26 : vector<1x10x8xbf16> to vector<10x8xbf16>
    %c0_21 = arith.constant 0 : index
    %c0_22 = arith.constant 0 : index
    %c8_23 = arith.constant 8 : index
    %28 = vector.load %arg5[%c0_21, %c0_22, %c8_23] : memref<1x10x32xbf16, #tpu.memory_space<vmem>>, vector<1x10x8xbf16>
    %29 = vector.shape_cast %28 : vector<1x10x8xbf16> to vector<10x8xbf16>
    %cst_24 = arith.constant dense<0.000000e+00> : vector<8x10xf32>
    %30 = tpu.matmul %25, %27, %cst_24 {dimension_numbers = #tpu.dot_dimension_numbers<[1], [1], [0], [0], [0, 0, 1, 0], [], []>} : vector<8x8xbf16>, vector<10x8xbf16>, vector<8x10xf32> -> vector<8x10xf32>
    %31 = vector.broadcast %1 : vector<1x10xf32> to vector<8x10xf32>
    %32 = arith.addf %30, %31 : vector<8x10xf32>
    %cst_25 = arith.constant dense<0xFF800000> : vector<8xf32>
    %33 = vector.multi_reduction <maximumf>, %32, %cst_25 [1] : vector<8x10xf32> to vector<8xf32>
    %34 = vector.shape_cast %33 : vector<8xf32> to vector<8x1xf32>
    %35 = vector.broadcast %34 : vector<8x1xf32> to vector<8x10xf32>
    %36 = arith.subf %32, %35 : vector<8x10xf32>
    %37 = math.exp %36 : vector<8x10xf32>
    %cst_26 = arith.constant dense<0.000000e+00> : vector<8xf32>
    %38 = vector.multi_reduction <add>, %37, %cst_26 [1] : vector<8x10xf32> to vector<8xf32>
    %39 = vector.shape_cast %38 : vector<8xf32> to vector<8x1xf32>
    %40 = tpu.reciprocal %39 {approx = true} : vector<8x1xf32> -> vector<8x1xf32>
    %41 = vector.broadcast %40 : vector<8x1xf32> to vector<8x10xf32>
    %42 = arith.mulf %37, %41 : vector<8x10xf32>
    %43 = arith.truncf %42 : vector<8x10xf32> to vector<8x10xbf16>
    %cst_27 = arith.constant dense<0.000000e+00> : vector<8x8xf32>
    %44 = tpu.matmul %43, %29, %cst_27 {dimension_numbers = #tpu.dot_dimension_numbers<[1], [0], [0], [1], [0, 0, 1, 1], [], []>} : vector<8x10xbf16>, vector<10x8xbf16>, vector<8x8xf32> -> vector<8x8xf32>
    %c0_28 = arith.constant 0 : index
    %c8_29 = arith.constant 8 : index
    %45 = vector.load %arg7[%c0_28, %c8_29] : memref<8x32xf32, #tpu.memory_space<vmem>>, vector<8x8xf32>
    tpu.vector_store %arg7[%c0_28, %c8_29], %44 {strides = array<i32>} : memref<8x32xf32, #tpu.memory_space<vmem>>, vector<8x8xf32>,
    %c0_30 = arith.constant 0 : index
    %c0_31 = arith.constant 0 : index
    %c16 = arith.constant 16 : index
    %46 = vector.load %arg3[%c0_30, %c0_31, %c16] : memref<1x8x32xbf16, #tpu.memory_space<vmem>>, vector<1x8x8xbf16>
    %47 = vector.shape_cast %46 : vector<1x8x8xbf16> to vector<8x8xbf16>
    %c0_32 = arith.constant 0 : index
    %c0_33 = arith.constant 0 : index
    %c16_34 = arith.constant 16 : index
    %48 = vector.load %arg4[%c0_32, %c0_33, %c16_34] : memref<1x10x32xbf16, #tpu.memory_space<vmem>>, vector<1x10x8xbf16>
    %49 = vector.shape_cast %48 : vector<1x10x8xbf16> to vector<10x8xbf16>
    %c0_35 = arith.constant 0 : index
    %c0_36 = arith.constant 0 : index
    %c16_37 = arith.constant 16 : index
    %50 = vector.load %arg5[%c0_35, %c0_36, %c16_37] : memref<1x10x32xbf16, #tpu.memory_space<vmem>>, vector<1x10x8xbf16>
    %51 = vector.shape_cast %50 : vector<1x10x8xbf16> to vector<10x8xbf16>
    %cst_38 = arith.constant dense<0.000000e+00> : vector<8x10xf32>
    %52 = tpu.matmul %47, %49, %cst_38 {dimension_numbers = #tpu.dot_dimension_numbers<[1], [1], [0], [0], [0, 0, 1, 0], [], []>} : vector<8x8xbf16>, vector<10x8xbf16>, vector<8x10xf32> -> vector<8x10xf32>
    %53 = vector.broadcast %1 : vector<1x10xf32> to vector<8x10xf32>
    %54 = arith.addf %52, %53 : vector<8x10xf32>
    %cst_39 = arith.constant dense<0xFF800000> : vector<8xf32>
    %55 = vector.multi_reduction <maximumf>, %54, %cst_39 [1] : vector<8x10xf32> to vector<8xf32>
    %56 = vector.shape_cast %55 : vector<8xf32> to vector<8x1xf32>
    %57 = vector.broadcast %56 : vector<8x1xf32> to vector<8x10xf32>
    %58 = arith.subf %54, %57 : vector<8x10xf32>
    %59 = math.exp %58 : vector<8x10xf32>
    %cst_40 = arith.constant dense<0.000000e+00> : vector<8xf32>
    %60 = vector.multi_reduction <add>, %59, %cst_40 [1] : vector<8x10xf32> to vector<8xf32>
    %61 = vector.shape_cast %60 : vector<8xf32> to vector<8x1xf32>
    %62 = tpu.reciprocal %61 {approx = true} : vector<8x1xf32> -> vector<8x1xf32>
    %63 = vector.broadcast %62 : vector<8x1xf32> to vector<8x10xf32>
    %64 = arith.mulf %59, %63 : vector<8x10xf32>
    %65 = arith.truncf %64 : vector<8x10xf32> to vector<8x10xbf16>
    %cst_41 = arith.constant dense<0.000000e+00> : vector<8x8xf32>
    %66 = tpu.matmul %65, %51, %cst_41 {dimension_numbers = #tpu.dot_dimension_numbers<[1], [0], [0], [1], [0, 0, 1, 1], [], []>} : vector<8x10xbf16>, vector<10x8xbf16>, vector<8x8xf32> -> vector<8x8xf32>
    %c0_42 = arith.constant 0 : index
    %c16_43 = arith.constant 16 : index
    %67 = vector.load %arg7[%c0_42, %c16_43] : memref<8x32xf32, #tpu.memory_space<vmem>>, vector<8x8xf32>
    tpu.vector_store %arg7[%c0_42, %c16_43], %66 {strides = array<i32>} : memref<8x32xf32, #tpu.memory_space<vmem>>, vector<8x8xf32>,
    %c0_44 = arith.constant 0 : index
    %c0_45 = arith.constant 0 : index
    %c24 = arith.constant 24 : index
    %68 = vector.load %arg3[%c0_44, %c0_45, %c24] : memref<1x8x32xbf16, #tpu.memory_space<vmem>>, vector<1x8x8xbf16>
    %69 = vector.shape_cast %68 : vector<1x8x8xbf16> to vector<8x8xbf16>
    %c0_46 = arith.constant 0 : index
    %c0_47 = arith.constant 0 : index
    %c24_48 = arith.constant 24 : index
    %70 = vector.load %arg4[%c0_46, %c0_47, %c24_48] : memref<1x10x32xbf16, #tpu.memory_space<vmem>>, vector<1x10x8xbf16>
    %71 = vector.shape_cast %70 : vector<1x10x8xbf16> to vector<10x8xbf16>
    %c0_49 = arith.constant 0 : index
    %c0_50 = arith.constant 0 : index
    %c24_51 = arith.constant 24 : index
    %72 = vector.load %arg5[%c0_49, %c0_50, %c24_51] : memref<1x10x32xbf16, #tpu.memory_space<vmem>>, vector<1x10x8xbf16>
    %73 = vector.shape_cast %72 : vector<1x10x8xbf16> to vector<10x8xbf16>
    %cst_52 = arith.constant dense<0.000000e+00> : vector<8x10xf32>
    %74 = tpu.matmul %69, %71, %cst_52 {dimension_numbers = #tpu.dot_dimension_numbers<[1], [1], [0], [0], [0, 0, 1, 0], [], []>} : vector<8x8xbf16>, vector<10x8xbf16>, vector<8x10xf32> -> vector<8x10xf32>
    %75 = vector.broadcast %1 : vector<1x10xf32> to vector<8x10xf32>
    %76 = arith.addf %74, %75 : vector<8x10xf32>
    %cst_53 = arith.constant dense<0xFF800000> : vector<8xf32>
    %77 = vector.multi_reduction <maximumf>, %76, %cst_53 [1] : vector<8x10xf32> to vector<8xf32>
    %78 = vector.shape_cast %77 : vector<8xf32> to vector<8x1xf32>
    %79 = vector.broadcast %78 : vector<8x1xf32> to vector<8x10xf32>
    %80 = arith.subf %76, %79 : vector<8x10xf32>
    %81 = math.exp %80 : vector<8x10xf32>
    %cst_54 = arith.constant dense<0.000000e+00> : vector<8xf32>
    %82 = vector.multi_reduction <add>, %81, %cst_54 [1] : vector<8x10xf32> to vector<8xf32>
    %83 = vector.shape_cast %82 : vector<8xf32> to vector<8x1xf32>
    %84 = tpu.reciprocal %83 {approx = true} : vector<8x1xf32> -> vector<8x1xf32>
    %85 = vector.broadcast %84 : vector<8x1xf32> to vector<8x10xf32>
    %86 = arith.mulf %81, %85 : vector<8x10xf32>
    %87 = arith.truncf %86 : vector<8x10xf32> to vector<8x10xbf16>
    %cst_55 = arith.constant dense<0.000000e+00> : vector<8x8xf32>
    %88 = tpu.matmul %87, %73, %cst_55 {dimension_numbers = #tpu.dot_dimension_numbers<[1], [0], [0], [1], [0, 0, 1, 1], [], []>} : vector<8x10xbf16>, vector<10x8xbf16>, vector<8x8xf32> -> vector<8x8xf32>
    %c0_56 = arith.constant 0 : index
    %c24_57 = arith.constant 24 : index
    %89 = vector.load %arg7[%c0_56, %c24_57] : memref<8x32xf32, #tpu.memory_space<vmem>>, vector<8x8xf32>
    tpu.vector_store %arg7[%c0_56, %c24_57], %88 {strides = array<i32>} : memref<8x32xf32, #tpu.memory_space<vmem>>, vector<8x8xf32>,
    %c0_58 = arith.constant 0 : index
    %c0_59 = arith.constant 0 : index
    %90 = vector.load %arg7[%c0_58, %c0_59] : memref<8x32xf32, #tpu.memory_space<vmem>>, vector<8x32xf32>
    %91 = arith.truncf %90 : vector<8x32xf32> to vector<8x32xbf16>
    %c0_60 = arith.constant 0 : index
    %c0_61 = arith.constant 0 : index
    %c0_62 = arith.constant 0 : index
    %92 = vector.load %arg6[%c0_60, %c0_61, %c0_62] : memref<1x8x32xbf16, #tpu.memory_space<vmem>>, vector<1x8x32xbf16>
    %93 = vector.shape_cast %92 : vector<1x8x32xbf16> to vector<8x32xbf16>
    %94 = vector.shape_cast %91 : vector<8x32xbf16> to vector<1x8x32xbf16>
    tpu.vector_store %arg6[%c0_60, %c0_61, %c0_62], %94 {strides = array<i32>} : memref<1x8x32xbf16, #tpu.memory_space<vmem>>, vector<1x8x32xbf16>,
    return
  }
  func.func @transform_0(%arg0: i32, %arg1: i32) -> (i32, i32, i32) {
    %c0_i32 = arith.constant 0 : i32
    %c0_i32_0 = arith.constant 0 : i32
    %c0_i32_1 = arith.constant 0 : i32
    return %arg0, %c0_i32, %c0_i32_0 : i32, i32, i32
  }
  func.func @transform_1(%arg0: i32, %arg1: i32) -> (i32, i32, i32) {
    %c0_i32 = arith.constant 0 : i32
    %c0_i32_0 = arith.constant 0 : i32
    return %arg0, %c0_i32, %arg1 : i32, i32, i32
  }
  func.func @transform_2(%arg0: i32, %arg1: i32) -> (i32, i32, i32) {
    %c0_i32 = arith.constant 0 : i32
    %c0_i32_0 = arith.constant 0 : i32
    return %arg0, %c0_i32, %arg1 : i32, i32, i32
  }
  func.func @transform_3(%arg0: i32, %arg1: i32) -> (i32, i32, i32) {
    %c0_i32 = arith.constant 0 : i32
    %c0_i32_0 = arith.constant 0 : i32
    return %arg0, %c0_i32, %arg1 : i32, i32, i32
  }
  func.func @transform_4(%arg0: i32, %arg1: i32) -> (i32, i32, i32) {
    %c0_i32 = arith.constant 0 : i32
    %c0_i32_0 = arith.constant 0 : i32
    return %arg0, %c0_i32, %arg1 : i32, i32, i32
  }
}

module attributes {stable_mosaic.version = 11 : i64} {
  func.func @_ffn_kernel(%arg0: i32, %arg1: memref<16x32xbf16, #tpu.memory_space<vmem>>, %arg2: memref<1x32xf32, #tpu.memory_space<vmem>>, %arg3: memref<1x32xf32, #tpu.memory_space<vmem>>, %arg4: memref<32x64xbf16, #tpu.memory_space<vmem>>, %arg5: memref<1x64xf32, #tpu.memory_space<vmem>>, %arg6: memref<64x32xbf16, #tpu.memory_space<vmem>>, %arg7: memref<1x32xf32, #tpu.memory_space<vmem>>, %arg8: memref<16x32xbf16, #tpu.memory_space<vmem>>) attributes {dimension_semantics = [#tpu.dimension_semantics<parallel>], iteration_bounds = array<i64: 1>, scalar_prefetch = 0 : i64, scratch_operands = 0 : i64, tpu.core_type = #tpu.core_type<tc>, window_params = [{transform_indices = @transform_0, window_bounds = array<i64: 16, 32>}, {pipeline_mode = #tpu.pipeline_mode<synchronous>, transform_indices = @transform_1, window_bounds = array<i64: 1, 32>}, {pipeline_mode = #tpu.pipeline_mode<synchronous>, transform_indices = @transform_2, window_bounds = array<i64: 1, 32>}, {pipeline_mode = #tpu.pipeline_mode<synchronous>, transform_indices = @transform_3, window_bounds = array<i64: 32, 64>}, {pipeline_mode = #tpu.pipeline_mode<synchronous>, transform_indices = @transform_4, window_bounds = array<i64: 1, 64>}, {pipeline_mode = #tpu.pipeline_mode<synchronous>, transform_indices = @transform_5, window_bounds = array<i64: 64, 32>}, {pipeline_mode = #tpu.pipeline_mode<synchronous>, transform_indices = @transform_6, window_bounds = array<i64: 1, 32>}, {transform_indices = @transform_7, window_bounds = array<i64: 16, 32>}]} {
    %c0 = arith.constant 0 : index
    %c0_0 = arith.constant 0 : index
    %0 = vector.load %arg1[%c0, %c0_0] : memref<16x32xbf16, #tpu.memory_space<vmem>>, vector<16x32xbf16>
    %1 = arith.extf %0 : vector<16x32xbf16> to vector<16x32xf32>
    %cst = arith.constant dense<0.000000e+00> : vector<16xf32>
    %2 = vector.multi_reduction <add>, %1, %cst [1] : vector<16x32xf32> to vector<16xf32>
    %3 = vector.shape_cast %2 : vector<16xf32> to vector<16x1xf32>
    %cst_1 = arith.constant 3.200000e+01 : f32
    %4 = vector.broadcast %cst_1 : f32 to vector<16x1xf32>
    %5 = arith.divf %3, %4 : vector<16x1xf32>
    %6 = vector.broadcast %5 : vector<16x1xf32> to vector<16x32xf32>
    %7 = arith.subf %1, %6 : vector<16x32xf32>
    %8 = arith.mulf %7, %7 : vector<16x32xf32>
    %cst_2 = arith.constant dense<0.000000e+00> : vector<16xf32>
    %9 = vector.multi_reduction <add>, %8, %cst_2 [1] : vector<16x32xf32> to vector<16xf32>
    %10 = vector.shape_cast %9 : vector<16xf32> to vector<16x1xf32>
    %cst_3 = arith.constant 3.200000e+01 : f32
    %11 = vector.broadcast %cst_3 : f32 to vector<16x1xf32>
    %12 = arith.divf %10, %11 : vector<16x1xf32>
    %cst_4 = arith.constant 9.99999974E-6 : f32
    %13 = vector.broadcast %cst_4 : f32 to vector<16x1xf32>
    %14 = arith.addf %12, %13 : vector<16x1xf32>
    %15 = math.rsqrt %14 : vector<16x1xf32>
    %16 = vector.broadcast %15 : vector<16x1xf32> to vector<16x32xf32>
    %17 = arith.mulf %7, %16 : vector<16x32xf32>
    %c0_5 = arith.constant 0 : index
    %c0_6 = arith.constant 0 : index
    %18 = vector.load %arg2[%c0_5, %c0_6] : memref<1x32xf32, #tpu.memory_space<vmem>>, vector<1x32xf32>
    %19 = vector.broadcast %18 : vector<1x32xf32> to vector<16x32xf32>
    %20 = arith.mulf %17, %19 : vector<16x32xf32>
    %c0_7 = arith.constant 0 : index
    %c0_8 = arith.constant 0 : index
    %21 = vector.load %arg3[%c0_7, %c0_8] : memref<1x32xf32, #tpu.memory_space<vmem>>, vector<1x32xf32>
    %22 = vector.broadcast %21 : vector<1x32xf32> to vector<16x32xf32>
    %23 = arith.addf %20, %22 : vector<16x32xf32>
    %24 = arith.truncf %23 : vector<16x32xf32> to vector<16x32xbf16>
    %c0_9 = arith.constant 0 : index
    %c0_10 = arith.constant 0 : index
    %25 = vector.load %arg4[%c0_9, %c0_10] : memref<32x64xbf16, #tpu.memory_space<vmem>>, vector<32x64xbf16>
    %cst_11 = arith.constant dense<0.000000e+00> : vector<16x64xf32>
    %26 = tpu.matmul %24, %25, %cst_11 {dimension_numbers = #tpu.dot_dimension_numbers<[1], [0], [0], [1], [0, 0, 1, 1], [], []>} : vector<16x32xbf16>, vector<32x64xbf16>, vector<16x64xf32> -> vector<16x64xf32>
    %c0_12 = arith.constant 0 : index
    %c0_13 = arith.constant 0 : index
    %27 = vector.load %arg5[%c0_12, %c0_13] : memref<1x64xf32, #tpu.memory_space<vmem>>, vector<1x64xf32>
    %28 = vector.broadcast %27 : vector<1x64xf32> to vector<16x64xf32>
    %29 = arith.addf %26, %28 : vector<16x64xf32>
    %cst_14 = arith.constant 0.000000e+00 : f32
    %30 = vector.broadcast %cst_14 : f32 to vector<16x64xf32>
    %31 = arith.maximumf %29, %30 : vector<16x64xf32>
    %32 = arith.truncf %31 : vector<16x64xf32> to vector<16x64xbf16>
    %c0_15 = arith.constant 0 : index
    %c0_16 = arith.constant 0 : index
    %33 = vector.load %arg6[%c0_15, %c0_16] : memref<64x32xbf16, #tpu.memory_space<vmem>>, vector<64x32xbf16>
    %cst_17 = arith.constant dense<0.000000e+00> : vector<16x32xf32>
    %34 = tpu.matmul %32, %33, %cst_17 {dimension_numbers = #tpu.dot_dimension_numbers<[1], [0], [0], [1], [0, 0, 1, 1], [], []>} : vector<16x64xbf16>, vector<64x32xbf16>, vector<16x32xf32> -> vector<16x32xf32>
    %c0_18 = arith.constant 0 : index
    %c0_19 = arith.constant 0 : index
    %35 = vector.load %arg7[%c0_18, %c0_19] : memref<1x32xf32, #tpu.memory_space<vmem>>, vector<1x32xf32>
    %36 = vector.broadcast %35 : vector<1x32xf32> to vector<16x32xf32>
    %37 = arith.addf %34, %36 : vector<16x32xf32>
    %38 = arith.addf %1, %37 : vector<16x32xf32>
    %39 = arith.truncf %38 : vector<16x32xf32> to vector<16x32xbf16>
    %c0_20 = arith.constant 0 : index
    %c0_21 = arith.constant 0 : index
    %40 = vector.load %arg8[%c0_20, %c0_21] : memref<16x32xbf16, #tpu.memory_space<vmem>>, vector<16x32xbf16>
    tpu.vector_store %arg8[%c0_20, %c0_21], %39 {strides = array<i32>} : memref<16x32xbf16, #tpu.memory_space<vmem>>, vector<16x32xbf16>,
    return
  }
  func.func @transform_0(%arg0: i32) -> (i32, i32) {
    %c0_i32 = arith.constant 0 : i32
    %c0_i32_0 = arith.constant 0 : i32
    return %arg0, %c0_i32 : i32, i32
  }
  func.func @transform_1(%arg0: i32) -> (i32, i32) {
    %c0_i32 = arith.constant 0 : i32
    %c0_i32_0 = arith.constant 0 : i32
    %c0_i32_1 = arith.constant 0 : i32
    return %c0_i32, %c0_i32_0 : i32, i32
  }
  func.func @transform_2(%arg0: i32) -> (i32, i32) {
    %c0_i32 = arith.constant 0 : i32
    %c0_i32_0 = arith.constant 0 : i32
    %c0_i32_1 = arith.constant 0 : i32
    return %c0_i32, %c0_i32_0 : i32, i32
  }
  func.func @transform_3(%arg0: i32) -> (i32, i32) {
    %c0_i32 = arith.constant 0 : i32
    %c0_i32_0 = arith.constant 0 : i32
    %c0_i32_1 = arith.constant 0 : i32
    return %c0_i32, %c0_i32_0 : i32, i32
  }
  func.func @transform_4(%arg0: i32) -> (i32, i32) {
    %c0_i32 = arith.constant 0 : i32
    %c0_i32_0 = arith.constant 0 : i32
    %c0_i32_1 = arith.constant 0 : i32
    return %c0_i32, %c0_i32_0 : i32, i32
  }
  func.func @transform_5(%arg0: i32) -> (i32, i32) {
    %c0_i32 = arith.constant 0 : i32
    %c0_i32_0 = arith.constant 0 : i32
    %c0_i32_1 = arith.constant 0 : i32
    return %c0_i32, %c0_i32_0 : i32, i32
  }
  func.func @transform_6(%arg0: i32) -> (i32, i32) {
    %c0_i32 = arith.constant 0 : i32
    %c0_i32_0 = arith.constant 0 : i32
    %c0_i32_1 = arith.constant 0 : i32
    return %c0_i32, %c0_i32_0 : i32, i32
  }
  func.func @transform_7(%arg0: i32) -> (i32, i32) {
    %c0_i32 = arith.constant 0 : i32
    %c0_i32_0 = arith.constant 0 : i32
    return %arg0, %c0_i32 : i32, i32
  }
}

module attributes {stable_mosaic.version = 11 : i64} {
  func.func @_fused_linear_kernel(%arg0: i32, %arg1: memref<16x32xbf16, #tpu.memory_space<vmem>>, %arg2: memref<1x32xf32, #tpu.memory_space<vmem>>, %arg3: memref<1x32xf32, #tpu.memory_space<vmem>>, %arg4: memref<32x16xbf16, #tpu.memory_space<vmem>>, %arg5: memref<1x16xf32, #tpu.memory_space<vmem>>, %arg6: memref<16x16xf32, #tpu.memory_space<vmem>>) attributes {dimension_semantics = [#tpu.dimension_semantics<parallel>], iteration_bounds = array<i64: 1>, scalar_prefetch = 0 : i64, scratch_operands = 0 : i64, tpu.core_type = #tpu.core_type<tc>, window_params = [{transform_indices = @transform_0, window_bounds = array<i64: 16, 32>}, {pipeline_mode = #tpu.pipeline_mode<synchronous>, transform_indices = @transform_1, window_bounds = array<i64: 1, 32>}, {pipeline_mode = #tpu.pipeline_mode<synchronous>, transform_indices = @transform_2, window_bounds = array<i64: 1, 32>}, {pipeline_mode = #tpu.pipeline_mode<synchronous>, transform_indices = @transform_3, window_bounds = array<i64: 32, 16>}, {pipeline_mode = #tpu.pipeline_mode<synchronous>, transform_indices = @transform_4, window_bounds = array<i64: 1, 16>}, {transform_indices = @transform_5, window_bounds = array<i64: 16, 16>}]} {
    %c0 = arith.constant 0 : index
    %c0_0 = arith.constant 0 : index
    %0 = vector.load %arg1[%c0, %c0_0] : memref<16x32xbf16, #tpu.memory_space<vmem>>, vector<16x32xbf16>
    %1 = arith.extf %0 : vector<16x32xbf16> to vector<16x32xf32>
    %cst = arith.constant dense<0.000000e+00> : vector<16xf32>
    %2 = vector.multi_reduction <add>, %1, %cst [1] : vector<16x32xf32> to vector<16xf32>
    %3 = vector.shape_cast %2 : vector<16xf32> to vector<16x1xf32>
    %cst_1 = arith.constant 3.200000e+01 : f32
    %4 = vector.broadcast %cst_1 : f32 to vector<16x1xf32>
    %5 = arith.divf %3, %4 : vector<16x1xf32>
    %6 = vector.broadcast %5 : vector<16x1xf32> to vector<16x32xf32>
    %7 = arith.subf %1, %6 : vector<16x32xf32>
    %8 = arith.mulf %7, %7 : vector<16x32xf32>
    %cst_2 = arith.constant dense<0.000000e+00> : vector<16xf32>
    %9 = vector.multi_reduction <add>, %8, %cst_2 [1] : vector<16x32xf32> to vector<16xf32>
    %10 = vector.shape_cast %9 : vector<16xf32> to vector<16x1xf32>
    %cst_3 = arith.constant 3.200000e+01 : f32
    %11 = vector.broadcast %cst_3 : f32 to vector<16x1xf32>
    %12 = arith.divf %10, %11 : vector<16x1xf32>
    %cst_4 = arith.constant 9.99999974E-6 : f32
    %13 = vector.broadcast %cst_4 : f32 to vector<16x1xf32>
    %14 = arith.addf %12, %13 : vector<16x1xf32>
    %15 = math.rsqrt %14 : vector<16x1xf32>
    %16 = vector.broadcast %15 : vector<16x1xf32> to vector<16x32xf32>
    %17 = arith.mulf %7, %16 : vector<16x32xf32>
    %c0_5 = arith.constant 0 : index
    %c0_6 = arith.constant 0 : index
    %18 = vector.load %arg2[%c0_5, %c0_6] : memref<1x32xf32, #tpu.memory_space<vmem>>, vector<1x32xf32>
    %19 = vector.broadcast %18 : vector<1x32xf32> to vector<16x32xf32>
    %20 = arith.mulf %17, %19 : vector<16x32xf32>
    %c0_7 = arith.constant 0 : index
    %c0_8 = arith.constant 0 : index
    %21 = vector.load %arg3[%c0_7, %c0_8] : memref<1x32xf32, #tpu.memory_space<vmem>>, vector<1x32xf32>
    %22 = vector.broadcast %21 : vector<1x32xf32> to vector<16x32xf32>
    %23 = arith.addf %20, %22 : vector<16x32xf32>
    %24 = arith.truncf %23 : vector<16x32xf32> to vector<16x32xbf16>
    %c0_9 = arith.constant 0 : index
    %c0_10 = arith.constant 0 : index
    %25 = vector.load %arg4[%c0_9, %c0_10] : memref<32x16xbf16, #tpu.memory_space<vmem>>, vector<32x16xbf16>
    %cst_11 = arith.constant dense<0.000000e+00> : vector<16x16xf32>
    %26 = tpu.matmul %24, %25, %cst_11 {dimension_numbers = #tpu.dot_dimension_numbers<[1], [0], [0], [1], [0, 0, 1, 1], [], []>} : vector<16x32xbf16>, vector<32x16xbf16>, vector<16x16xf32> -> vector<16x16xf32>
    %c0_12 = arith.constant 0 : index
    %c0_13 = arith.constant 0 : index
    %27 = vector.load %arg5[%c0_12, %c0_13] : memref<1x16xf32, #tpu.memory_space<vmem>>, vector<1x16xf32>
    %28 = vector.broadcast %27 : vector<1x16xf32> to vector<16x16xf32>
    %29 = arith.addf %26, %28 : vector<16x16xf32>
    %c0_14 = arith.constant 0 : index
    %c0_15 = arith.constant 0 : index
    %30 = vector.load %arg6[%c0_14, %c0_15] : memref<16x16xf32, #tpu.memory_space<vmem>>, vector<16x16xf32>
    tpu.vector_store %arg6[%c0_14, %c0_15], %29 {strides = array<i32>} : memref<16x16xf32, #tpu.memory_space<vmem>>, vector<16x16xf32>,
    return
  }
  func.func @transform_0(%arg0: i32) -> (i32, i32) {
    %c0_i32 = arith.constant 0 : i32
    %c0_i32_0 = arith.constant 0 : i32
    return %arg0, %c0_i32 : i32, i32
  }
  func.func @transform_1(%arg0: i32) -> (i32, i32) {
    %c0_i32 = arith.constant 0 : i32
    %c0_i32_0 = arith.constant 0 : i32
    %c0_i32_1 = arith.constant 0 : i32
    return %c0_i32, %c0_i32_0 : i32, i32
  }
  func.func @transform_2(%arg0: i32) -> (i32, i32) {
    %c0_i32 = arith.constant 0 : i32
    %c0_i32_0 = arith.constant 0 : i32
    %c0_i32_1 = arith.constant 0 : i32
    return %c0_i32, %c0_i32_0 : i32, i32
  }
  func.func @transform_3(%arg0: i32) -> (i32, i32) {
    %c0_i32 = arith.constant 0 : i32
    %c0_i32_0 = arith.constant 0 : i32
    %c0_i32_1 = arith.constant 0 : i32
    return %c0_i32, %c0_i32_0 : i32, i32
  }
  func.func @transform_4(%arg0: i32) -> (i32, i32) {
    %c0_i32 = arith.constant 0 : i32
    %c0_i32_0 = arith.constant 0 : i32
    %c0_i32_1 = arith.constant 0 : i32
    return %c0_i32, %c0_i32_0 : i32, i32
  }
  func.func @transform_5(%arg0: i32) -> (i32, i32) {
    %c0_i32 = arith.constant 0 : i32
    %c0_i32_0 = arith.constant 0 : i32
    return %arg0, %c0_i32 : i32, i32
  }
}

</mosaic_0001>

<llo_original>
// kernel: tpu_custom_call.1
$region0: #{tpu_custom_call.1}
  #allocation0 [shape = 'u32[]', space=smem, size = 0x4, offset = 0x4, fixed_abs, tag = 'smem constant byte address 0x4 - core index']
  #allocation1 [shape = 'u32[144,128]{1,0:T(1,128)}', space=vmem, size = 0x12000, scoped, tag = 'internal scratch']
  %s0 = inlined_call_operand.hbm [shape: f32[8,128], index: 0, kind: input, shape index: {}]
  %s1 = inlined_call_operand.hbm [shape: f32[16,128], index: 1, kind: input, shape index: {}]
  %s2 = inlined_call_operand.hbm [shape: f32[16,128], index: 2, kind: output, shape index: {}]
  %s3 = sld [smem:[#allocation0]]
  $region49: #{tpu_custom_call.1} parent=0
    _
  %s5 = ssub.s32 1, %s3
  %s6 = scalar_select 0, %s5, %s3
  $region1: #{tpu_custom_call.1} parent=0
    #allocation2 [shape = 'u8[4096]{0}', space=vmem, size = 0x1000, scoped, tag = 'input window, operand 0, single buffered']
    #allocation3 [shape = 's32[2]{0}', space=sflag, size = 0x8, scoped, tag = 'scoped memory for tpu_custom_call.1']
    #allocation4 [shape = 's32[2]{0}', space=sflag, size = 0x8, scoped, tag = 'scoped memory for tpu_custom_call.1']
    #allocation5 [shape = 'u8[8192]{0}', space=vmem, size = 0x2000, scoped, tag = 'input window, operand 1']
    #allocation6 [shape = 's32[2]{0}', space=sflag, size = 0x8, scoped, tag = 'scoped memory for tpu_custom_call.1']
    #allocation7 [shape = 'u8[8192]{0}', space=vmem, size = 0x2000, scoped, tag = 'output window, operand 0']
    %7 = vsyncpa [#allocation3], 0
    %8 = vsyncpa [#allocation6], 0
    %s9 = scalar_lea.sflag [#allocation6], 1
    %10 = vsyncpa %s9, 0
    %11 = vsyncpa [#allocation4], 0
    %s12 = scalar_lea.sflag [#allocation4], 1
    %13 = vsyncpa %s12, 0
    loop: start=0, step=1, limit=4
    $region2: #{tpu_custom_call.1} parent=1 // loop_pre_header
      _
    $region3: #{tpu_custom_call.1} parent=1 // loop_header
      %s15 = sphi 0, %s19
      %p16 = scmp.ge.s32.totalorder %s15, 4
      %s23 = sphi 0, %s23
      %s25 = sphi 0, %s23
      %s26 = sphi 0, %s25
      %s40 = sphi 0, %s26
      %s46 = sphi 0, %s48
      %s49 = sphi 0, %s46
      %s50 = sphi 0, %s49
      %s66 = sphi 0, %s50
      %s72 = sphi 0, %s74
      %s75 = sphi 0, %s72
      %s76 = sphi 0, %s75
      %s92 = sphi 0, %s76
    $region4: #{tpu_custom_call.1} parent=1 // loop_header_branch
      %18 = sbr.rel (%p16) target = $region8
    $region5: #{tpu_custom_call.1} parent=1 // loop_body
      %s20 = ssub.s32 %s15, 1
      %s21 = ssub.s32 %s15, 2
      %s22 = sadd.s32 %s15, 1
      %s24 = sadd.s32 %s23, 1
      %p27 = scmp.eq.s32.totalorder %s15, 1
      %p28 = scmp.ne.s32.totalorder %s23, %s25
      %p29 = scmp.eq.s32.totalorder %s15, 0
      %p30 = por %p28, %p29
      %p31 = scmp.ne.s32.totalorder %s23, %s25
      %p32 = scmp.eq.s32.totalorder %s20, 1
      %p33 = por %p31, %p32
      %p34 = scmp.ne.s32.totalorder %s25, %s26
      %p35 = scmp.eq.s32.totalorder %s20, 0
      %p36 = por %p34, %p35
      %p37 = scmp.ne.s32.totalorder %s25, %s26
      %p38 = scmp.eq.s32.totalorder %s21, 1
      %p39 = por %p37, %p38
      %p41 = scmp.ne.s32.totalorder %s26, %s40
      %p42 = scmp.eq.s32.totalorder %s21, 0
      %p43 = por %p41, %p42
      %s44 = ssub.s32 %s15, %s22
      %p45 = scmp.eq.s32.totalorder %s44, 0
      %s47 = sadd.s32 %s46, 1
      %s48 = scalar_select %p45, %s46, %s47
      %p51 = pneg %p45
      %p52 = scmp.eq.s32.totalorder %s15, 1
      %p53 = por %p51, %p52
      %p54 = scmp.ne.s32.totalorder %s46, %s49
      %p55 = scmp.eq.s32.totalorder %s15, 0
      %p56 = por %p54, %p55
      %p57 = scmp.ne.s32.totalorder %s46, %s49
      %p58 = scmp.eq.s32.totalorder %s20, 1
      %p59 = por %p57, %p58
      %p60 = scmp.ne.s32.totalorder %s49, %s50
      %p61 = scmp.eq.s32.totalorder %s20, 0
      %p62 = por %p60, %p61
      %p63 = scmp.ne.s32.totalorder %s49, %s50
      %p64 = scmp.eq.s32.totalorder %s21, 1
      %p65 = por %p63, %p64
      %p67 = scmp.ne.s32.totalorder %s50, %s66
      %p68 = scmp.eq.s32.totalorder %s21, 0
      %p69 = por %p67, %p68
      %s70 = ssub.s32 %s15, %s22
      %p71 = scmp.eq.s32.totalorder %s70, 0
      %s73 = sadd.s32 %s72, 1
      %s74 = scalar_select %p71, %s72, %s73
      %p77 = pneg %p71
      %p78 = scmp.eq.s32.totalorder %s15, 1
      %p79 = por %p77, %p78
      %p80 = scmp.ne.s32.totalorder %s72, %s75
      %p81 = scmp.eq.s32.totalorder %s15, 0
      %p82 = por %p80, %p81
      %p83 = scmp.ne.s32.totalorder %s72, %s75
      %p84 = scmp.eq.s32.totalorder %s20, 1
      %p85 = por %p83, %p84
      %p86 = scmp.ne.s32.totalorder %s75, %s76
      %p87 = scmp.eq.s32.totalorder %s20, 0
      %p88 = por %p86, %p87
      %p89 = scmp.ne.s32.totalorder %s75, %s76
      %p90 = scmp.eq.s32.totalorder %s21, 1
      %p91 = por %p89, %p90
      %p93 = scmp.ne.s32.totalorder %s76, %s92
      %p94 = scmp.eq.s32.totalorder %s21, 0
      %p95 = por %p93, %p94
      %p96 = scmp.le.s32.totalorder 1, %s15
      %p97 = scmp.lt.s32.totalorder %s15, 3
      %p98 = pnand %p96, %p97
      %p99 = pneg %p98
      // Predicated region
      $region9: #{tpu_custom_call.1} parent=5 // pred_check
        _
      $region10: #{tpu_custom_call.1} parent=5 // pred_check_branch
        %101 = sbr.rel (%p98) target = $region12
      $region11: #{tpu_custom_call.1} parent=5 // pred_region
        %s102 = ssub.s32 %s15, 1
        // Predicated region
        $region13: #{tpu_custom_call.1} parent=11 // pred_check
          %p103 = pneg %p36
        $region14: #{tpu_custom_call.1} parent=11 // pred_check_branch
          %105 = sbr.rel (%p103) target = $region16
        $region15: #{tpu_custom_call.1} parent=11 // pred_region
          %s107 = ssub.s32 128, 128
          %108 = vsyncadd [#allocation3], %s107
          %s110 = sshll.u32 [#allocation2], 4
          %s111 = int_to_ptr.vmem [resolvable:$true] %s110
          %113 = dma.hbm_to_vmem [thread:$0]  %s0, 128, %s111, [#allocation3]
        $region16: #{tpu_custom_call.1} parent=11 // pred_fallthru
          _
      $region12: #{tpu_custom_call.1} parent=5 // pred_fallthru
        _
      %p114 = scmp.lt.s32.totalorder %s15, 2
      // Predicated region
      $region17: #{tpu_custom_call.1} parent=5 // pred_check
        %p115 = pneg %p114
      $region18: #{tpu_custom_call.1} parent=5 // pred_check_branch
        %117 = sbr.rel (%p115) target = $region20
      $region19: #{tpu_custom_call.1} parent=5 // pred_region
        // Predicated region
        $region21: #{tpu_custom_call.1} parent=19 // pred_check
          %p118 = pneg %p56
        $region22: #{tpu_custom_call.1} parent=19 // pred_check_branch
          %120 = sbr.rel (%p118) target = $region24
        $region23: #{tpu_custom_call.1} parent=19 // pred_region
          %s121 = sand.u32 %s46, 1
          %s122 = scalar_lea.sflag [#allocation6], %s121
          %s123 = sand.u32 %s46, 1
          %s124 = smul.addr %s123, 8
          %s125 = scalar_lea.vmem [#allocation5], %s124
          %s127 = ssub.s32 128, 128
          %128 = vsyncadd %s122, %s127
          %s129 = smul.addr %s15, 128
          %s130 = scalar_lea.hbm %s1, %s129
          %s132 = sshll.u32 %s125, 4
          %s133 = int_to_ptr.vmem [resolvable:$true] %s132
          %135 = dma.hbm_to_vmem [thread:$0]  %s130, 128, %s133, %s122
        $region24: #{tpu_custom_call.1} parent=19 // pred_fallthru
          _
      $region20: #{tpu_custom_call.1} parent=5 // pred_fallthru
        _
      %p136 = scmp.le.s32.totalorder 1, %s15
      %p137 = scmp.lt.s32.totalorder %s15, 3
      %p138 = pnand %p136, %p137
      %p139 = pneg %p138
      // Predicated region
      $region25: #{tpu_custom_call.1} parent=5 // pred_check
        _
      $region26: #{tpu_custom_call.1} parent=5 // pred_check_branch
        %141 = sbr.rel (%p138) target = $region28
      $region27: #{tpu_custom_call.1} parent=5 // pred_region
        %s142 = ssub.s32 %s15, 1
        // Predicated region
        $region29: #{tpu_custom_call.1} parent=27 // pred_check
          %p143 = pneg %p36
        $region30: #{tpu_custom_call.1} parent=27 // pred_check_branch
          %145 = sbr.rel (%p143) target = $region32
        $region31: #{tpu_custom_call.1} parent=27 // pred_region
          %146 = dma.done [#allocation3], 128
        $region32: #{tpu_custom_call.1} parent=27 // pred_fallthru
          _
        %s147 = sand.u32 %s49, 1
        %s148 = scalar_lea.sflag [#allocation6], %s147
        %s149 = sand.u32 %s49, 1
        %s150 = smul.addr %s149, 8
        %s151 = scalar_lea.vmem [#allocation5], %s150
        // Predicated region
        $region33: #{tpu_custom_call.1} parent=27 // pred_check
          %p152 = pneg %p62
        $region34: #{tpu_custom_call.1} parent=27 // pred_check_branch
          %154 = sbr.rel (%p152) target = $region36
        $region35: #{tpu_custom_call.1} parent=27 // pred_region
          %155 = dma.done %s148, 128
        $region36: #{tpu_custom_call.1} parent=27 // pred_fallthru
          _
        %p156 = pneg %p36
        %p157 = pneg %p33
        %s158 = sand.u32 %s49, 1
        %s159 = scalar_lea.sflag [#allocation6], %s158
        %s160 = sand.u32 %s49, 1
        %s161 = smul.addr %s160, 8
        %s162 = scalar_lea.vmem [#allocation5], %s161
        %p163 = pneg %p62
        %p164 = pneg %p59
        %p165 = pneg %p88
        %p166 = pneg %p85
        %s167 = sand.u32 %s75, 1
        %s168 = scalar_lea.sflag [#allocation4], %s167
        %s169 = sand.u32 %s75, 1
        %s170 = smul.addr %s169, 8
        %s171 = scalar_lea.vmem [#allocation7], %s170
        %v172 = vld [vmem:[%s151] sm:$0xff]
        %v173 = vld [vmem:[#allocation2] sm:$0xff]
        %v174 = vadd.f32 %v172, %v173
        %175 = vst [vmem:[%s171] sm:$0xff] %v174
        %s176 = sand.u32 %s75, 1
        %s177 = scalar_lea.sflag [#allocation4], %s176
        %s178 = sand.u32 %s75, 1
        %s179 = smul.addr %s178, 8
        %s180 = scalar_lea.vmem [#allocation7], %s179
        // Predicated region
        $region37: #{tpu_custom_call.1} parent=27 // pred_check
          %p181 = pneg %p85
        $region38: #{tpu_custom_call.1} parent=27 // pred_check_branch
          %183 = sbr.rel (%p181) target = $region40
        $region39: #{tpu_custom_call.1} parent=27 // pred_region
          %s185 = ssub.s32 128, 128
          %186 = vsyncadd %s177, %s185
          %s187 = smul.addr %s20, 128
          %s188 = scalar_lea.hbm %s2, %s187
          %s190 = sshll.u32 %s180, 4
          %s191 = int_to_ptr.vmem [resolvable:$true] %s190
          %193 = dma.vmem_to_hbm [thread:$0]  %s191, 128, %s188, %s177
        $region40: #{tpu_custom_call.1} parent=27 // pred_fallthru
          _
      $region28: #{tpu_custom_call.1} parent=5 // pred_fallthru
        _
      %p194 = scmp.le.s32.totalorder 2, %s15
      // Predicated region
      $region41: #{tpu_custom_call.1} parent=5 // pred_check
        %p195 = pneg %p194
      $region42: #{tpu_custom_call.1} parent=5 // pred_check_branch
        %197 = sbr.rel (%p195) target = $region44
      $region43: #{tpu_custom_call.1} parent=5 // pred_region
        %s198 = ssub.s32 %s15, 2
        // Predicated region
        $region45: #{tpu_custom_call.1} parent=43 // pred_check
          %p199 = pneg %p91
        $region46: #{tpu_custom_call.1} parent=43 // pred_check_branch
          %201 = sbr.rel (%p199) target = $region48
        $region47: #{tpu_custom_call.1} parent=43 // pred_region
          %s202 = sand.u32 %s76, 1
          %s203 = scalar_lea.sflag [#allocation4], %s202
          %s204 = sand.u32 %s76, 1
          %s205 = smul.addr %s204, 8
          %s206 = scalar_lea.vmem [#allocation7], %s205
          %207 = dma.done %s203, 128
        $region48: #{tpu_custom_call.1} parent=43 // pred_fallthru
          _
      $region44: #{tpu_custom_call.1} parent=5 // pred_fallthru
        _
    $region6: #{tpu_custom_call.1} parent=1 // loop_footer
      %s19 = sadd.s32 1, %s15
    $region7: #{tpu_custom_call.1} parent=1 // loop_footer_branch
      %14 = sbr.rel target = $region3
    $region8: #{tpu_custom_call.1} parent=1 // loop_exit
      _
    %208 = vsyncpa [#allocation3], 1
    %s209 = scalar_lea.sflag [#allocation3], 1
    %210 = vsyncpa %s209, 1
    %211 = vsyncpa [#allocation6], 1
    %s212 = scalar_lea.sflag [#allocation6], 1
    %213 = vsyncpa %s212, 1
    %214 = vsyncpa [#allocation4], 1
    %s215 = scalar_lea.sflag [#allocation4], 1
    %216 = vsyncpa %s215, 1

// kernel: _lambda_.19
$region0: #{_lambda_.19}
  #allocation0 [shape = 'u32[]', space=smem, size = 0x4, offset = 0x4, fixed_abs, tag = 'smem constant byte address 0x4 - core index']
  #allocation1 [shape = 'u32[144,128]{1,0:T(1,128)}', space=vmem, size = 0x12000, scoped, tag = 'internal scratch']
  %s0 = inlined_call_operand.hbm [shape: bf16[16,32], index: 0, kind: input, shape index: {}]
  %s1 = inlined_call_operand.hbm [shape: bf16[32,32], index: 1, kind: input, shape index: {}]
  %s2 = inlined_call_operand.hbm [shape: f32[1,32], index: 2, kind: input, shape index: {}]
  %s3 = inlined_call_operand.hbm [shape: bf16[16,32], index: 3, kind: input, shape index: {}]
  %s4 = inlined_call_operand.hbm [shape: bf16[16,32], index: 4, kind: output, shape index: {}]
  %s5 = sld [smem:[#allocation0]]
  $region42: #{_lambda_.19} parent=0
    _
  %s7 = ssub.s32 1, %s5
  %s8 = scalar_select 0, %s7, %s5
  $region1: #{_lambda_.19} parent=0
    #allocation2 [shape = 'u8[4096]{0}', space=vmem, size = 0x1000, scoped, tag = 'input window, operand 0, single buffered']
    #allocation3 [shape = 's32[1]{0}', space=sflag, size = 0x4, scoped, tag = 'scoped memory for _lambda_.19']
    #allocation4 [shape = 's32[1]{0}', space=sflag, size = 0x4, scoped, tag = 'scoped memory for _lambda_.19']
    #allocation5 [shape = 'u8[8192]{0}', space=vmem, size = 0x2000, scoped, tag = 'input window, operand 1, single buffered']
    #allocation6 [shape = 's32[1]{0}', space=sflag, size = 0x4, scoped, tag = 'scoped memory for _lambda_.19']
    #allocation7 [shape = 'u8[512]{0}', space=vmem, size = 0x400, scoped, tag = 'input window, operand 2, single buffered']
    #allocation8 [shape = 'u8[4096]{0}', space=vmem, size = 0x1000, scoped, tag = 'input window, operand 3, single buffered']
    #allocation9 [shape = 's32[1]{0}', space=sflag, size = 0x4, scoped, tag = 'scoped memory for _lambda_.19']
    #allocation10 [shape = 'u8[4096]{0}', space=vmem, size = 0x1000, scoped, tag = 'output window, operand 0, single buffered']
    %9 = vsyncpa [#allocation3], 0
    %10 = vsyncpa [#allocation6], 0
    %11 = vsyncpa [#allocation9], 0
    %12 = vsyncpa [#allocation4], 0
    // Predicated region
    $region2: #{_lambda_.19} parent=1 // pred_check
      _
    $region3: #{_lambda_.19} parent=1 // pred_check_branch
      %14 = sbr.rel (0) target = $region5
    $region4: #{_lambda_.19} parent=1 // pred_region
      %s16 = ssub.s32 128, 128
      %17 = vsyncadd [#allocation3], %s16
      %s18 = sshll.u32 [#allocation2], 4
      %s19 = int_to_ptr.vmem [resolvable:$true] %s18
      %24 = dma.hbm_to_vmem [thread:$0]  %s0, 128, %s19, [#allocation3], 64, 64, 4
    $region5: #{_lambda_.19} parent=1 // pred_fallthru
      _
    // Predicated region
    $region6: #{_lambda_.19} parent=1 // pred_check
      _
    $region7: #{_lambda_.19} parent=1 // pred_check_branch
      %26 = sbr.rel (0) target = $region9
    $region8: #{_lambda_.19} parent=1 // pred_region
      %s28 = ssub.s32 256, 256
      %29 = vsyncadd [#allocation6], %s28
      %s30 = sshll.u32 [#allocation5], 4
      %s31 = int_to_ptr.vmem [resolvable:$true] %s30
      %36 = dma.hbm_to_vmem [thread:$0]  %s1, 256, %s31, [#allocation6], 64, 64, 4
    $region9: #{_lambda_.19} parent=1 // pred_fallthru
      _
    // Predicated region
    $region10: #{_lambda_.19} parent=1 // pred_check
      _
    $region11: #{_lambda_.19} parent=1 // pred_check_branch
      %38 = sbr.rel (0) target = $region13
    $region12: #{_lambda_.19} parent=1 // pred_region
      %s40 = ssub.s32 16, 16
      %41 = vsyncadd [#allocation6], %s40
      %s43 = sshll.u32 [#allocation7], 4
      %s44 = int_to_ptr.vmem [resolvable:$true] %s43
      %46 = dma.hbm_to_vmem [thread:$0]  %s2, 16, %s44, [#allocation6]
    $region13: #{_lambda_.19} parent=1 // pred_fallthru
      _
    // Predicated region
    $region14: #{_lambda_.19} parent=1 // pred_check
      _
    $region15: #{_lambda_.19} parent=1 // pred_check_branch
      %48 = sbr.rel (0) target = $region17
    $region16: #{_lambda_.19} parent=1 // pred_region
      %s50 = ssub.s32 128, 128
      %51 = vsyncadd [#allocation9], %s50
      %s52 = sshll.u32 [#allocation8], 4
      %s53 = int_to_ptr.vmem [resolvable:$true] %s52
      %58 = dma.hbm_to_vmem [thread:$0]  %s3, 128, %s53, [#allocation9], 64, 64, 4
    $region17: #{_lambda_.19} parent=1 // pred_fallthru
      _
    // Predicated region
    $region18: #{_lambda_.19} parent=1 // pred_check
      _
    $region19: #{_lambda_.19} parent=1 // pred_check_branch
      %60 = sbr.rel (0) target = $region21
    $region20: #{_lambda_.19} parent=1 // pred_region
      %61 = dma.done [#allocation3], 128
    $region21: #{_lambda_.19} parent=1 // pred_fallthru
      _
    // Predicated region
    $region22: #{_lambda_.19} parent=1 // pred_check
      _
    $region23: #{_lambda_.19} parent=1 // pred_check_branch
      %63 = sbr.rel (0) target = $region25
    $region24: #{_lambda_.19} parent=1 // pred_region
      %64 = dma.done [#allocation6], 256
    $region25: #{_lambda_.19} parent=1 // pred_fallthru
      _
    // Predicated region
    $region26: #{_lambda_.19} parent=1 // pred_check
      _
    $region27: #{_lambda_.19} parent=1 // pred_check_branch
      %66 = sbr.rel (0) target = $region29
    $region28: #{_lambda_.19} parent=1 // pred_region
      %67 = dma.done [#allocation6], 16
    $region29: #{_lambda_.19} parent=1 // pred_fallthru
      _
    // Predicated region
    $region30: #{_lambda_.19} parent=1 // pred_check
      _
    $region31: #{_lambda_.19} parent=1 // pred_check_branch
      %69 = sbr.rel (0) target = $region33
    $region32: #{_lambda_.19} parent=1 // pred_region
      %70 = dma.done [#allocation9], 128
    $region33: #{_lambda_.19} parent=1 // pred_fallthru
      _
    %v72 = vld [vmem:[#allocation2] sm:$0xf]
    %v73 = vld [vmem:[#allocation2 + $0x4] sm:$0xf]
    %v74 = vld [vmem:[#allocation5] sm:$0xf]
    %v75 = vld [vmem:[#allocation5 + $0x4] sm:$0xf]
    %v76 = vld [vmem:[#allocation5 + $0x8] sm:$0xf]
    %v77 = vld [vmem:[#allocation5 + $0xc] sm:$0xf]
    %v78 = vld [vmem:[#allocation7] sm:$0x1]
    %v80 = vlaneseq
    %v81 = vshrl.u32 %v80, 7
    %v82 = vsub.s32 0, %v81
    %v83 = vrot.slane %v78, %v82
    %v87 = vunpack.c.l.b16 %v72
    %v88 = vunpack.c.l.b16 %v73
    %v89 = vpack.c.b16 %v88, %v87
    %v94 = vunpack.c.l.b16 %v74
    %v95 = vunpack.c.l.b16 %v75
    %v96 = vunpack.c.l.b16 %v76
    %v97 = vunpack.c.l.b16 %v77
    %v98 = vpack.c.b16 %v95, %v94
    %v99 = vpack.c.b16 %v97, %v96
    %vm102 = vcmask 261120
    %v104 = vsel %vm102, %v89, 0
    %106 = vmatprep.subr.bf16.mxu0 0
    %107 = vmatpush1.bf16.msra.mxu0 %v98
    %108 = vmatprep.subr.bf16.mxu0 0
    %109 = vmatpush1.bf16.msra.mxu0 %v99
    %110 = vmatprep.subr.bf16.mxu0 0
    %111 = vmatpush1.bf16.msra.mxu0 0
    %112 = vmatprep.subr.bf16.mxu0 0
    %113 = vmatpush1.bf16.msra.mxu0 0
    %114 = vmatprep.subr.bf16.mxu0 0
    %115 = vmatpush1.bf16.msra.mxu0 0
    %116 = vmatprep.subr.bf16.mxu0 0
    %117 = vmatpush1.bf16.msra.mxu0 0
    %118 = vmatprep.subr.bf16.mxu0 0
    %119 = vmatpush1.bf16.msra.mxu0 0
    %120 = vmatprep.subr.bf16.mxu0 0
    %121 = vmatpush1.bf16.msra.mxu0 0
    %122 = vmatprep.subr.bf16.mxu0 0
    %123 = vmatpush1.bf16.msra.mxu0 0
    %124 = vmatprep.subr.bf16.mxu0 0
    %125 = vmatpush1.bf16.msra.mxu0 0
    %126 = vmatprep.subr.bf16.mxu0 0
    %127 = vmatpush1.bf16.msra.mxu0 0
    %128 = vmatprep.subr.bf16.mxu0 0
    %129 = vmatpush1.bf16.msra.mxu0 0
    %130 = vmatprep.subr.bf16.mxu0 0
    %131 = vmatpush1.bf16.msra.mxu0 0
    %132 = vmatprep.subr.bf16.mxu0 0
    %133 = vmatpush1.bf16.msra.mxu0 0
    %134 = vmatprep.subr.bf16.mxu0 0
    %135 = vmatpush1.bf16.msra.mxu0 0
    %136 = vmatprep.subr.bf16.mxu0 0
    %137 = vmatpush1.bf16.msra.mxu0 0
    %138 = vmatprep.mubr.bf16.mxu0 0
    %139 = vmatmul.mubr.bf16.gmra.mrb[0].mxu0 %v104
    %v140 = vpop.f32.mrb[0].mxu0
    %v141 = vadd.f32 %v83, %v140
    %v142 = vpop.f32.mrb[0].mxu0
    %v143 = vpop.f32.mrb[0].mxu0
    %v144 = vadd.f32 %v83, %v143
    %v145 = vpop.f32.mrb[0].mxu0
    %146 = vdwg.mxu0
    %v147 = vld [vmem:[#allocation8] sm:$0xf]
    %v148 = vld [vmem:[#allocation8 + $0x4] sm:$0xf]
    %v149 = vunpack.c.l.bf16 %v147
    %v150 = vunpack.c.l.bf16 %v148
    %v151 = vadd.f32 %v141, %v149
    %v152 = vadd.f32 %v144, %v150
    %v153 = vpack.c.bf16 %v152, %v151
    %v155 = vunpack.c.l.b16 %v153
    %v156 = vunpack.c.h.b16 %v153
    %v157 = vpack.c.b16 %v155, %v155
    %v158 = vpack.c.b16 %v156, %v156
    %vm161 = vcmask 257024
    %162 = vst.msk [vmem:[#allocation10] sm:$0xf] %vm161, %v157
    %163 = vst.msk [vmem:[#allocation10 + $0x4] sm:$0xf] %vm161, %v158
    // Predicated region
    $region34: #{_lambda_.19} parent=1 // pred_check
      _
    $region35: #{_lambda_.19} parent=1 // pred_check_branch
      %165 = sbr.rel (0) target = $region37
    $region36: #{_lambda_.19} parent=1 // pred_region
      %s167 = ssub.s32 128, 128
      %168 = vsyncadd [#allocation4], %s167
      %s169 = sshll.u32 [#allocation10], 4
      %s170 = int_to_ptr.vmem [resolvable:$true] %s169
      %175 = dma.vmem_to_hbm [thread:$0]  %s170, 128, %s4, [#allocation4], 64, 64, 4
    $region37: #{_lambda_.19} parent=1 // pred_fallthru
      _
    // Predicated region
    $region38: #{_lambda_.19} parent=1 // pred_check
      _
    $region39: #{_lambda_.19} parent=1 // pred_check_branch
      %177 = sbr.rel (0) target = $region41
    $region40: #{_lambda_.19} parent=1 // pred_region
      %178 = dma.done [#allocation4], 128
    $region41: #{_lambda_.19} parent=1 // pred_fallthru
      _
    %179 = vsyncpa [#allocation3], 1
    %180 = vsyncpa [#allocation6], 1
    %181 = vsyncpa [#allocation9], 1
    %182 = vsyncpa [#allocation4], 1

// kernel: _lambda_.20
$region0: #{_lambda_.20}
  #allocation0 [shape = 'u32[]', space=smem, size = 0x4, offset = 0x4, fixed_abs, tag = 'smem constant byte address 0x4 - core index']
  #allocation1 [shape = 'u32[144,128]{1,0:T(1,128)}', space=vmem, size = 0x12000, scoped, tag = 'internal scratch']
  %s0 = inlined_call_operand.hbm [shape: bf16[16,32], index: 0, kind: input, shape index: {}]
  %s1 = inlined_call_operand.hbm [shape: f32[1,32], index: 1, kind: input, shape index: {}]
  %s2 = inlined_call_operand.hbm [shape: f32[1,32], index: 2, kind: input, shape index: {}]
  %s3 = inlined_call_operand.hbm [shape: bf16[32,32], index: 3, kind: input, shape index: {}]
  %s4 = inlined_call_operand.hbm [shape: f32[1,32], index: 4, kind: input, shape index: {}]
  %s5 = inlined_call_operand.hbm [shape: bf16[16,32], index: 5, kind: output, shape index: {}]
  %s6 = sld [smem:[#allocation0]]
  $region50: #{_lambda_.20} parent=0
    _
  %s8 = ssub.s32 1, %s6
  %s9 = scalar_select 0, %s8, %s6
  $region1: #{_lambda_.20} parent=0
    #allocation2 [shape = 'u8[4096]{0}', space=vmem, size = 0x1000, scoped, tag = 'input window, operand 0, single buffered']
    #allocation3 [shape = 's32[1]{0}', space=sflag, size = 0x4, scoped, tag = 'scoped memory for _lambda_.20']
    #allocation4 [shape = 's32[1]{0}', space=sflag, size = 0x4, scoped, tag = 'scoped memory for _lambda_.20']
    #allocation5 [shape = 'u8[512]{0}', space=vmem, size = 0x400, scoped, tag = 'input window, operand 1, single buffered']
    #allocation6 [shape = 's32[1]{0}', space=sflag, size = 0x4, scoped, tag = 'scoped memory for _lambda_.20']
    #allocation7 [shape = 'u8[512]{0}', space=vmem, size = 0x400, scoped, tag = 'input window, operand 2, single buffered']
    #allocation8 [shape = 'u8[8192]{0}', space=vmem, size = 0x2000, scoped, tag = 'input window, operand 3, single buffered']
    #allocation9 [shape = 's32[1]{0}', space=sflag, size = 0x4, scoped, tag = 'scoped memory for _lambda_.20']
    #allocation10 [shape = 'u8[512]{0}', space=vmem, size = 0x400, scoped, tag = 'input window, operand 4, single buffered']
    #allocation11 [shape = 'u8[4096]{0}', space=vmem, size = 0x1000, scoped, tag = 'output window, operand 0, single buffered']
    %10 = vsyncpa [#allocation3], 0
    %11 = vsyncpa [#allocation6], 0
    %12 = vsyncpa [#allocation9], 0
    %13 = vsyncpa [#allocation4], 0
    // Predicated region
    $region2: #{_lambda_.20} parent=1 // pred_check
      _
    $region3: #{_lambda_.20} parent=1 // pred_check_branch
      %15 = sbr.rel (0) target = $region5
    $region4: #{_lambda_.20} parent=1 // pred_region
      %s17 = ssub.s32 128, 128
      %18 = vsyncadd [#allocation3], %s17
      %s19 = sshll.u32 [#allocation2], 4
      %s20 = int_to_ptr.vmem [resolvable:$true] %s19
      %25 = dma.hbm_to_vmem [thread:$0]  %s0, 128, %s20, [#allocation3], 64, 64, 4
    $region5: #{_lambda_.20} parent=1 // pred_fallthru
      _
    // Predicated region
    $region6: #{_lambda_.20} parent=1 // pred_check
      _
    $region7: #{_lambda_.20} parent=1 // pred_check_branch
      %27 = sbr.rel (0) target = $region9
    $region8: #{_lambda_.20} parent=1 // pred_region
      %s29 = ssub.s32 16, 16
      %30 = vsyncadd [#allocation6], %s29
      %s32 = sshll.u32 [#allocation5], 4
      %s33 = int_to_ptr.vmem [resolvable:$true] %s32
      %35 = dma.hbm_to_vmem [thread:$0]  %s1, 16, %s33, [#allocation6]
    $region9: #{_lambda_.20} parent=1 // pred_fallthru
      _
    // Predicated region
    $region10: #{_lambda_.20} parent=1 // pred_check
      _
    $region11: #{_lambda_.20} parent=1 // pred_check_branch
      %37 = sbr.rel (0) target = $region13
    $region12: #{_lambda_.20} parent=1 // pred_region
      %s39 = ssub.s32 16, 16
      %40 = vsyncadd [#allocation6], %s39
      %s42 = sshll.u32 [#allocation7], 4
      %s43 = int_to_ptr.vmem [resolvable:$true] %s42
      %45 = dma.hbm_to_vmem [thread:$0]  %s2, 16, %s43, [#allocation6]
    $region13: #{_lambda_.20} parent=1 // pred_fallthru
      _
    // Predicated region
    $region14: #{_lambda_.20} parent=1 // pred_check
      _
    $region15: #{_lambda_.20} parent=1 // pred_check_branch
      %47 = sbr.rel (0) target = $region17
    $region16: #{_lambda_.20} parent=1 // pred_region
      %s49 = ssub.s32 256, 256
      %50 = vsyncadd [#allocation9], %s49
      %s51 = sshll.u32 [#allocation8], 4
      %s52 = int_to_ptr.vmem [resolvable:$true] %s51
      %57 = dma.hbm_to_vmem [thread:$0]  %s3, 256, %s52, [#allocation9], 64, 64, 4
    $region17: #{_lambda_.20} parent=1 // pred_fallthru
      _
    // Predicated region
    $region18: #{_lambda_.20} parent=1 // pred_check
      _
    $region19: #{_lambda_.20} parent=1 // pred_check_branch
      %59 = sbr.rel (0) target = $region21
    $region20: #{_lambda_.20} parent=1 // pred_region
      %s61 = ssub.s32 16, 16
      %62 = vsyncadd [#allocation9], %s61
      %s64 = sshll.u32 [#allocation10], 4
      %s65 = int_to_ptr.vmem [resolvable:$true] %s64
      %67 = dma.hbm_to_vmem [thread:$0]  %s4, 16, %s65, [#allocation9]
    $region21: #{_lambda_.20} parent=1 // pred_fallthru
      _
    // Predicated region
    $region22: #{_lambda_.20} parent=1 // pred_check
      _
    $region23: #{_lambda_.20} parent=1 // pred_check_branch
      %69 = sbr.rel (0) target = $region25
    $region24: #{_lambda_.20} parent=1 // pred_region
      %70 = dma.done [#allocation3], 128
    $region25: #{_lambda_.20} parent=1 // pred_fallthru
      _
    // Predicated region
    $region26: #{_lambda_.20} parent=1 // pred_check
      _
    $region27: #{_lambda_.20} parent=1 // pred_check_branch
      %72 = sbr.rel (0) target = $region29
    $region28: #{_lambda_.20} parent=1 // pred_region
      %73 = dma.done [#allocation6], 16
    $region29: #{_lambda_.20} parent=1 // pred_fallthru
      _
    // Predicated region
    $region30: #{_lambda_.20} parent=1 // pred_check
      _
    $region31: #{_lambda_.20} parent=1 // pred_check_branch
      %75 = sbr.rel (0) target = $region33
    $region32: #{_lambda_.20} parent=1 // pred_region
      %76 = dma.done [#allocation6], 16
    $region33: #{_lambda_.20} parent=1 // pred_fallthru
      _
    // Predicated region
    $region34: #{_lambda_.20} parent=1 // pred_check
      _
    $region35: #{_lambda_.20} parent=1 // pred_check_branch
      %78 = sbr.rel (0) target = $region37
    $region36: #{_lambda_.20} parent=1 // pred_region
      %79 = dma.done [#allocation9], 256
    $region37: #{_lambda_.20} parent=1 // pred_fallthru
      _
    // Predicated region
    $region38: #{_lambda_.20} parent=1 // pred_check
      _
    $region39: #{_lambda_.20} parent=1 // pred_check_branch
      %81 = sbr.rel (0) target = $region41
    $region40: #{_lambda_.20} parent=1 // pred_region
      %82 = dma.done [#allocation9], 16
    $region41: #{_lambda_.20} parent=1 // pred_fallthru
      _
    %v84 = vld [vmem:[#allocation2] sm:$0xf]
    %v85 = vld [vmem:[#allocation2 + $0x4] sm:$0xf]
    %v86 = vunpack.c.l.bf16 %v84
    %v87 = vunpack.c.l.bf16 %v85
    %vm88 = vcmask 261120
    %v89 = vsel %vm88, %v86, 0.0
    %90 = vadd.xlane.f32.xlu0 %v89
    %v91 = vpop.xlane.xlu0 %90
    %v92 = vsel %vm88, %v87, 0.0
    %93 = vadd.xlane.f32.xlu0 %v92
    %v94 = vpop.xlane.xlu0 %93
    %v95 = vrcp.pop 32.0
    %v96 = vmul.f32 %v91, %v95
    %v97 = vmul.f32 %v94, %v95
    %v98 = vsub.f32 %v86, %v96
    %v99 = vsub.f32 %v87, %v97
    %v100 = vmul.f32 %v98, %v98
    %v101 = vmul.f32 %v99, %v99
    %v102 = vsel %vm88, %v100, 0.0
    %103 = vadd.xlane.f32.xlu0 %v102
    %v104 = vpop.xlane.xlu0 %103
    %v105 = vsel %vm88, %v101, 0.0
    %106 = vadd.xlane.f32.xlu0 %v105
    %v107 = vpop.xlane.xlu0 %106
    %v108 = vmul.f32 %v104, %v95
    %v109 = vmul.f32 %v107, %v95
    %v110 = vadd.f32 %v108, 1e-05
    %v111 = vadd.f32 %v109, 1e-05
    %v112 = vrsqrt.pop %v110
    %v113 = vrsqrt.pop %v111
    %v114 = vmul.f32 %v98, %v112
    %v115 = vmul.f32 %v99, %v113
    %v116 = vld [vmem:[#allocation5] sm:$0x1]
    %v118 = vlaneseq
    %v119 = vshrl.u32 %v118, 7
    %v120 = vsub.s32 0, %v119
    %v121 = vrot.slane %v116, %v120
    %v123 = vmul.f32 %v114, %v121
    %v124 = vmul.f32 %v115, %v121
    %v125 = vld [vmem:[#allocation7] sm:$0x1]
    %v127 = vlaneseq
    %v128 = vshrl.u32 %v127, 7
    %v129 = vsub.s32 0, %v128
    %v130 = vrot.slane %v125, %v129
    %v132 = vadd.f32 %v123, %v130
    %v133 = vadd.f32 %v124, %v130
    %v134 = vpack.c.bf16 %v133, %v132
    %v135 = vld [vmem:[#allocation8] sm:$0xf]
    %v136 = vld [vmem:[#allocation8 + $0x4] sm:$0xf]
    %v137 = vld [vmem:[#allocation8 + $0x8] sm:$0xf]
    %v138 = vld [vmem:[#allocation8 + $0xc] sm:$0xf]
    %v139 = vld [vmem:[#allocation10] sm:$0x1]
    %v141 = vlaneseq
    %v142 = vshrl.u32 %v141, 7
    %v143 = vsub.s32 0, %v142
    %v144 = vrot.slane %v139, %v143
    %v150 = vunpack.c.l.b16 %v135
    %v151 = vunpack.c.l.b16 %v136
    %v152 = vunpack.c.l.b16 %v137
    %v153 = vunpack.c.l.b16 %v138
    %v154 = vpack.c.b16 %v151, %v150
    %v155 = vpack.c.b16 %v153, %v152
    %v159 = vsel %vm88, %v134, 0
    %161 = vmatprep.subr.bf16.mxu0 0
    %162 = vmatpush1.bf16.msra.mxu0 %v154
    %163 = vmatprep.subr.bf16.mxu0 0
    %164 = vmatpush1.bf16.msra.mxu0 %v155
    %165 = vmatprep.subr.bf16.mxu0 0
    %166 = vmatpush1.bf16.msra.mxu0 0
    %167 = vmatprep.subr.bf16.mxu0 0
    %168 = vmatpush1.bf16.msra.mxu0 0
    %169 = vmatprep.subr.bf16.mxu0 0
    %170 = vmatpush1.bf16.msra.mxu0 0
    %171 = vmatprep.subr.bf16.mxu0 0
    %172 = vmatpush1.bf16.msra.mxu0 0
    %173 = vmatprep.subr.bf16.mxu0 0
    %174 = vmatpush1.bf16.msra.mxu0 0
    %175 = vmatprep.subr.bf16.mxu0 0
    %176 = vmatpush1.bf16.msra.mxu0 0
    %177 = vmatprep.subr.bf16.mxu0 0
    %178 = vmatpush1.bf16.msra.mxu0 0
    %179 = vmatprep.subr.bf16.mxu0 0
    %180 = vmatpush1.bf16.msra.mxu0 0
    %181 = vmatprep.subr.bf16.mxu0 0
    %182 = vmatpush1.bf16.msra.mxu0 0
    %183 = vmatprep.subr.bf16.mxu0 0
    %184 = vmatpush1.bf16.msra.mxu0 0
    %185 = vmatprep.subr.bf16.mxu0 0
    %186 = vmatpush1.bf16.msra.mxu0 0
    %187 = vmatprep.subr.bf16.mxu0 0
    %188 = vmatpush1.bf16.msra.mxu0 0
    %189 = vmatprep.subr.bf16.mxu0 0
    %190 = vmatpush1.bf16.msra.mxu0 0
    %191 = vmatprep.subr.bf16.mxu0 0
    %192 = vmatpush1.bf16.msra.mxu0 0
    %193 = vmatprep.mubr.bf16.mxu0 0
    %194 = vmatmul.mubr.bf16.gmra.mrb[0].mxu0 %v159
    %v195 = vpop.f32.mrb[0].mxu0
    %v196 = vadd.f32 %v144, %v195
    %v197 = vpop.f32.mrb[0].mxu0
    %v198 = vpop.f32.mrb[0].mxu0
    %v199 = vadd.f32 %v144, %v198
    %v200 = vpop.f32.mrb[0].mxu0
    %201 = vdwg.mxu0
    %v202 = vpack.c.bf16 %v199, %v196
    %v204 = vunpack.c.l.b16 %v202
    %v205 = vunpack.c.h.b16 %v202
    %v206 = vpack.c.b16 %v204, %v204
    %v207 = vpack.c.b16 %v205, %v205
    %vm210 = vcmask 257024
    %211 = vst.msk [vmem:[#allocation11] sm:$0xf] %vm210, %v206
    %212 = vst.msk [vmem:[#allocation11 + $0x4] sm:$0xf] %vm210, %v207
    // Predicated region
    $region42: #{_lambda_.20} parent=1 // pred_check
      _
    $region43: #{_lambda_.20} parent=1 // pred_check_branch
      %214 = sbr.rel (0) target = $region45
    $region44: #{_lambda_.20} parent=1 // pred_region
      %s216 = ssub.s32 128, 128
      %217 = vsyncadd [#allocation4], %s216
      %s218 = sshll.u32 [#allocation11], 4
      %s219 = int_to_ptr.vmem [resolvable:$true] %s218
      %224 = dma.vmem_to_hbm [thread:$0]  %s219, 128, %s5, [#allocation4], 64, 64, 4
    $region45: #{_lambda_.20} parent=1 // pred_fallthru
      _
    // Predicated region
    $region46: #{_lambda_.20} parent=1 // pred_check
      _
    $region47: #{_lambda_.20} parent=1 // pred_check_branch
      %226 = sbr.rel (0) target = $region49
    $region48: #{_lambda_.20} parent=1 // pred_region
      %227 = dma.done [#allocation4], 128
    $region49: #{_lambda_.20} parent=1 // pred_fallthru
      _
    %228 = vsyncpa [#allocation3], 1
    %229 = vsyncpa [#allocation6], 1
    %230 = vsyncpa [#allocation9], 1
    %231 = vsyncpa [#allocation4], 1

// kernel: _lambda_.17
$region0: #{_lambda_.17}
  #allocation0 [shape = 'u32[]', space=smem, size = 0x4, offset = 0x4, fixed_abs, tag = 'smem constant byte address 0x4 - core index']
  #allocation1 [shape = 'u32[144,128]{1,0:T(1,128)}', space=vmem, size = 0x12000, scoped, tag = 'internal scratch']
  %s0 = inlined_call_operand.hbm [shape: bf16[16,32], index: 0, kind: input, shape index: {}]
  %s1 = inlined_call_operand.hbm [shape: f32[1,32], index: 1, kind: input, shape index: {}]
  %s2 = inlined_call_operand.hbm [shape: f32[1,32], index: 2, kind: input, shape index: {}]
  %s3 = inlined_call_operand.hbm [shape: bf16[32,96], index: 3, kind: input, shape index: {}]
  %s4 = inlined_call_operand.hbm [shape: f32[1,96], index: 4, kind: input, shape index: {}]
  %s5 = inlined_call_operand.hbm [shape: bf16[16,32], index: 5, kind: output, shape index: {0}]
  %s6 = inlined_call_operand.hbm [shape: bf16[16,32], index: 6, kind: output, shape index: {1}]
  %s7 = inlined_call_operand.hbm [shape: bf16[16,32], index: 7, kind: output, shape index: {2}]
  %8 = xla_tuple %s5, %s6, %s7
  %s9 = sld [smem:[#allocation0]]
  $region66: #{_lambda_.17} parent=0
    _
  %s11 = ssub.s32 1, %s9
  %s12 = scalar_select 0, %s11, %s9
  $region1: #{_lambda_.17} parent=0
    #allocation2 [shape = 'u8[4096]{0}', space=vmem, size = 0x1000, scoped, tag = 'input window, operand 0, single buffered']
    #allocation3 [shape = 's32[1]{0}', space=sflag, size = 0x4, scoped, tag = 'scoped memory for _lambda_.17']
    #allocation4 [shape = 's32[1]{0}', space=sflag, size = 0x4, scoped, tag = 'scoped memory for _lambda_.17']
    #allocation5 [shape = 'u8[512]{0}', space=vmem, size = 0x400, scoped, tag = 'input window, operand 1, single buffered']
    #allocation6 [shape = 's32[1]{0}', space=sflag, size = 0x4, scoped, tag = 'scoped memory for _lambda_.17']
    #allocation7 [shape = 'u8[512]{0}', space=vmem, size = 0x400, scoped, tag = 'input window, operand 2, single buffered']
    #allocation8 [shape = 'u8[8192]{0}', space=vmem, size = 0x2000, scoped, tag = 'input window, operand 3, single buffered']
    #allocation9 [shape = 's32[1]{0}', space=sflag, size = 0x4, scoped, tag = 'scoped memory for _lambda_.17']
    #allocation10 [shape = 'u8[512]{0}', space=vmem, size = 0x400, scoped, tag = 'input window, operand 4, single buffered']
    #allocation11 [shape = 'u8[4096]{0}', space=vmem, size = 0x1000, scoped, tag = 'output window, operand 0, single buffered']
    #allocation12 [shape = 'u8[4096]{0}', space=vmem, size = 0x1000, scoped, tag = 'output window, operand 1, single buffered']
    #allocation13 [shape = 's32[1]{0}', space=sflag, size = 0x4, scoped, tag = 'scoped memory for _lambda_.17']
    #allocation14 [shape = 'u8[4096]{0}', space=vmem, size = 0x1000, scoped, tag = 'output window, operand 2, single buffered']
    %13 = vsyncpa [#allocation3], 0
    %14 = vsyncpa [#allocation6], 0
    %15 = vsyncpa [#allocation9], 0
    %16 = vsyncpa [#allocation4], 0
    %17 = vsyncpa [#allocation13], 0
    // Predicated region
    $region2: #{_lambda_.17} parent=1 // pred_check
      _
    $region3: #{_lambda_.17} parent=1 // pred_check_branch
      %19 = sbr.rel (0) target = $region5
    $region4: #{_lambda_.17} parent=1 // pred_region
      %s21 = ssub.s32 128, 128
      %22 = vsyncadd [#allocation3], %s21
      %s23 = sshll.u32 [#allocation2], 4
      %s24 = int_to_ptr.vmem [resolvable:$true] %s23
      %29 = dma.hbm_to_vmem [thread:$0]  %s0, 128, %s24, [#allocation3], 64, 64, 4
    $region5: #{_lambda_.17} parent=1 // pred_fallthru
      _
    // Predicated region
    $region6: #{_lambda_.17} parent=1 // pred_check
      _
    $region7: #{_lambda_.17} parent=1 // pred_check_branch
      %31 = sbr.rel (0) target = $region9
    $region8: #{_lambda_.17} parent=1 // pred_region
      %s33 = ssub.s32 16, 16
      %34 = vsyncadd [#allocation6], %s33
      %s36 = sshll.u32 [#allocation5], 4
      %s37 = int_to_ptr.vmem [resolvable:$true] %s36
      %39 = dma.hbm_to_vmem [thread:$0]  %s1, 16, %s37, [#allocation6]
    $region9: #{_lambda_.17} parent=1 // pred_fallthru
      _
    // Predicated region
    $region10: #{_lambda_.17} parent=1 // pred_check
      _
    $region11: #{_lambda_.17} parent=1 // pred_check_branch
      %41 = sbr.rel (0) target = $region13
    $region12: #{_lambda_.17} parent=1 // pred_region
      %s43 = ssub.s32 16, 16
      %44 = vsyncadd [#allocation6], %s43
      %s46 = sshll.u32 [#allocation7], 4
      %s47 = int_to_ptr.vmem [resolvable:$true] %s46
      %49 = dma.hbm_to_vmem [thread:$0]  %s2, 16, %s47, [#allocation6]
    $region13: #{_lambda_.17} parent=1 // pred_fallthru
      _
    // Predicated region
    $region14: #{_lambda_.17} parent=1 // pred_check
      _
    $region15: #{_lambda_.17} parent=1 // pred_check_branch
      %51 = sbr.rel (0) target = $region17
    $region16: #{_lambda_.17} parent=1 // pred_region
      %s53 = ssub.s32 256, 256
      %54 = vsyncadd [#allocation9], %s53
      %s55 = sshll.u32 [#allocation8], 4
      %s56 = int_to_ptr.vmem [resolvable:$true] %s55
      %61 = dma.hbm_to_vmem [thread:$0]  %s3, 256, %s56, [#allocation9], 64, 64, 4
    $region17: #{_lambda_.17} parent=1 // pred_fallthru
      _
    // Predicated region
    $region18: #{_lambda_.17} parent=1 // pred_check
      _
    $region19: #{_lambda_.17} parent=1 // pred_check_branch
      %63 = sbr.rel (0) target = $region21
    $region20: #{_lambda_.17} parent=1 // pred_region
      %s65 = ssub.s32 16, 16
      %66 = vsyncadd [#allocation9], %s65
      %s68 = sshll.u32 [#allocation10], 4
      %s69 = int_to_ptr.vmem [resolvable:$true] %s68
      %71 = dma.hbm_to_vmem [thread:$0]  %s4, 16, %s69, [#allocation9]
    $region21: #{_lambda_.17} parent=1 // pred_fallthru
      _
    // Predicated region
    $region22: #{_lambda_.17} parent=1 // pred_check
      _
    $region23: #{_lambda_.17} parent=1 // pred_check_branch
      %73 = sbr.rel (0) target = $region25
    $region24: #{_lambda_.17} parent=1 // pred_region
      %74 = dma.done [#allocation3], 128
    $region25: #{_lambda_.17} parent=1 // pred_fallthru
      _
    // Predicated region
    $region26: #{_lambda_.17} parent=1 // pred_check
      _
    $region27: #{_lambda_.17} parent=1 // pred_check_branch
      %76 = sbr.rel (0) target = $region29
    $region28: #{_lambda_.17} parent=1 // pred_region
      %77 = dma.done [#allocation6], 16
    $region29: #{_lambda_.17} parent=1 // pred_fallthru
      _
    // Predicated region
    $region30: #{_lambda_.17} parent=1 // pred_check
      _
    $region31: #{_lambda_.17} parent=1 // pred_check_branch
      %79 = sbr.rel (0) target = $region33
    $region32: #{_lambda_.17} parent=1 // pred_region
      %80 = dma.done [#allocation6], 16
    $region33: #{_lambda_.17} parent=1 // pred_fallthru
      _
    // Predicated region
    $region34: #{_lambda_.17} parent=1 // pred_check
      _
    $region35: #{_lambda_.17} parent=1 // pred_check_branch
      %82 = sbr.rel (0) target = $region37
    $region36: #{_lambda_.17} parent=1 // pred_region
      %83 = dma.done [#allocation9], 256
    $region37: #{_lambda_.17} parent=1 // pred_fallthru
      _
    // Predicated region
    $region38: #{_lambda_.17} parent=1 // pred_check
      _
    $region39: #{_lambda_.17} parent=1 // pred_check_branch
      %85 = sbr.rel (0) target = $region41
    $region40: #{_lambda_.17} parent=1 // pred_region
      %86 = dma.done [#allocation9], 16
    $region41: #{_lambda_.17} parent=1 // pred_fallthru
      _
    %v88 = vld [vmem:[#allocation2] sm:$0xf]
    %v89 = vld [vmem:[#allocation2 + $0x4] sm:$0xf]
    %v90 = vunpack.c.l.bf16 %v88
    %v91 = vunpack.c.l.bf16 %v89
    %vm92 = vcmask 261120
    %v93 = vsel %vm92, %v90, 0.0
    %94 = vadd.xlane.f32.xlu0 %v93
    %v95 = vpop.xlane.xlu0 %94
    %v96 = vsel %vm92, %v91, 0.0
    %97 = vadd.xlane.f32.xlu0 %v96
    %v98 = vpop.xlane.xlu0 %97
    %v99 = vrcp.pop 32.0
    %v100 = vmul.f32 %v95, %v99
    %v101 = vmul.f32 %v98, %v99
    %v102 = vsub.f32 %v90, %v100
    %v103 = vsub.f32 %v91, %v101
    %v104 = vmul.f32 %v102, %v102
    %v105 = vmul.f32 %v103, %v103
    %v106 = vsel %vm92, %v104, 0.0
    %107 = vadd.xlane.f32.xlu0 %v106
    %v108 = vpop.xlane.xlu0 %107
    %v109 = vsel %vm92, %v105, 0.0
    %110 = vadd.xlane.f32.xlu0 %v109
    %v111 = vpop.xlane.xlu0 %110
    %v112 = vmul.f32 %v108, %v99
    %v113 = vmul.f32 %v111, %v99
    %v114 = vadd.f32 %v112, 1e-05
    %v115 = vadd.f32 %v113, 1e-05
    %v116 = vrsqrt.pop %v114
    %v117 = vrsqrt.pop %v115
    %v118 = vmul.f32 %v102, %v116
    %v119 = vmul.f32 %v103, %v117
    %v120 = vld [vmem:[#allocation5] sm:$0x1]
    %v122 = vlaneseq
    %v123 = vshrl.u32 %v122, 7
    %v124 = vsub.s32 0, %v123
    %v125 = vrot.slane %v120, %v124
    %v127 = vmul.f32 %v118, %v125
    %v128 = vmul.f32 %v119, %v125
    %v129 = vld [vmem:[#allocation7] sm:$0x1]
    %v131 = vlaneseq
    %v132 = vshrl.u32 %v131, 7
    %v133 = vsub.s32 0, %v132
    %v134 = vrot.slane %v129, %v133
    %v136 = vadd.f32 %v127, %v134
    %v137 = vadd.f32 %v128, %v134
    %v138 = vpack.c.bf16 %v137, %v136
    %v139 = vld [vmem:[#allocation8] sm:$0xf]
    %v140 = vld [vmem:[#allocation8 + $0x4] sm:$0xf]
    %v141 = vld [vmem:[#allocation8 + $0x8] sm:$0xf]
    %v142 = vld [vmem:[#allocation8 + $0xc] sm:$0xf]
    %v143 = vld [vmem:[#allocation10] sm:$0x1]
    %v145 = vlaneseq
    %v146 = vshrl.u32 %v145, 7
    %v147 = vsub.s32 0, %v146
    %v148 = vrot.slane %v143, %v147
    %v154 = vunpack.c.l.b16 %v139
    %v155 = vunpack.c.l.b16 %v140
    %v156 = vunpack.c.l.b16 %v141
    %v157 = vunpack.c.l.b16 %v142
    %v158 = vpack.c.b16 %v155, %v154
    %v159 = vpack.c.b16 %v157, %v156
    %v163 = vsel %vm92, %v138, 0
    %165 = vmatprep.subr.bf16.mxu0 0
    %166 = vmatpush1.bf16.msra.mxu0 %v158
    %167 = vmatprep.subr.bf16.mxu0 0
    %168 = vmatpush1.bf16.msra.mxu0 %v159
    %169 = vmatprep.subr.bf16.mxu0 0
    %170 = vmatpush1.bf16.msra.mxu0 0
    %171 = vmatprep.subr.bf16.mxu0 0
    %172 = vmatpush1.bf16.msra.mxu0 0
    %173 = vmatprep.subr.bf16.mxu0 0
    %174 = vmatpush1.bf16.msra.mxu0 0
    %175 = vmatprep.subr.bf16.mxu0 0
    %176 = vmatpush1.bf16.msra.mxu0 0
    %177 = vmatprep.subr.bf16.mxu0 0
    %178 = vmatpush1.bf16.msra.mxu0 0
    %179 = vmatprep.subr.bf16.mxu0 0
    %180 = vmatpush1.bf16.msra.mxu0 0
    %181 = vmatprep.subr.bf16.mxu0 0
    %182 = vmatpush1.bf16.msra.mxu0 0
    %183 = vmatprep.subr.bf16.mxu0 0
    %184 = vmatpush1.bf16.msra.mxu0 0
    %185 = vmatprep.subr.bf16.mxu0 0
    %186 = vmatpush1.bf16.msra.mxu0 0
    %187 = vmatprep.subr.bf16.mxu0 0
    %188 = vmatpush1.bf16.msra.mxu0 0
    %189 = vmatprep.subr.bf16.mxu0 0
    %190 = vmatpush1.bf16.msra.mxu0 0
    %191 = vmatprep.subr.bf16.mxu0 0
    %192 = vmatpush1.bf16.msra.mxu0 0
    %193 = vmatprep.subr.bf16.mxu0 0
    %194 = vmatpush1.bf16.msra.mxu0 0
    %195 = vmatprep.subr.bf16.mxu0 0
    %196 = vmatpush1.bf16.msra.mxu0 0
    %197 = vmatprep.mubr.bf16.mxu0 0
    %198 = vmatmul.mubr.bf16.gmra.mrb[0].mxu0 %v163
    %v199 = vpop.f32.mrb[0].mxu0
    %v200 = vadd.f32 %v148, %v199
    %v201 = vpop.f32.mrb[0].mxu0
    %v202 = vpop.f32.mrb[0].mxu0
    %v203 = vadd.f32 %v148, %v202
    %v204 = vpop.f32.mrb[0].mxu0
    %205 = vdwg.mxu0
    %v206 = vpack.c.bf16 %v203, %v200
    %v208 = vunpack.c.l.b16 %v206
    %v209 = vunpack.c.h.b16 %v206
    %v210 = vpack.c.b16 %v208, %v208
    %v211 = vpack.c.b16 %v209, %v209
    %vm214 = vcmask 257024
    %215 = vst.msk [vmem:[#allocation11] sm:$0xf] %vm214, %v210
    %216 = vst.msk [vmem:[#allocation11 + $0x4] sm:$0xf] %vm214, %v211
    %217 = vrot.lane.b32.xlu0 %v210, 96
    %v218 = vpop.permute.xlu0 %217
    %219 = vrot.lane.b32.xlu0 %v211, 96
    %v220 = vpop.permute.xlu0 %219
    %223 = vst.msk [vmem:[#allocation12] sm:$0xf] %vm214, %v218
    %224 = vst.msk [vmem:[#allocation12 + $0x4] sm:$0xf] %vm214, %v220
    %225 = vrot.lane.b32.xlu0 %v210, 64
    %v226 = vpop.permute.xlu0 %225
    %227 = vrot.lane.b32.xlu0 %v211, 64
    %v228 = vpop.permute.xlu0 %227
    %231 = vst.msk [vmem:[#allocation14] sm:$0xf] %vm214, %v226
    %232 = vst.msk [vmem:[#allocation14 + $0x4] sm:$0xf] %vm214, %v228
    // Predicated region
    $region42: #{_lambda_.17} parent=1 // pred_check
      _
    $region43: #{_lambda_.17} parent=1 // pred_check_branch
      %234 = sbr.rel (0) target = $region45
    $region44: #{_lambda_.17} parent=1 // pred_region
      %s236 = ssub.s32 128, 128
      %237 = vsyncadd [#allocation4], %s236
      %s238 = sshll.u32 [#allocation11], 4
      %s239 = int_to_ptr.vmem [resolvable:$true] %s238
      %244 = dma.vmem_to_hbm [thread:$0]  %s239, 128, %s5, [#allocation4], 64, 64, 4
    $region45: #{_lambda_.17} parent=1 // pred_fallthru
      _
    // Predicated region
    $region46: #{_lambda_.17} parent=1 // pred_check
      _
    $region47: #{_lambda_.17} parent=1 // pred_check_branch
      %246 = sbr.rel (0) target = $region49
    $region48: #{_lambda_.17} parent=1 // pred_region
      %s248 = ssub.s32 128, 128
      %249 = vsyncadd [#allocation13], %s248
      %s250 = sshll.u32 [#allocation12], 4
      %s251 = int_to_ptr.vmem [resolvable:$true] %s250
      %256 = dma.vmem_to_hbm [thread:$0]  %s251, 128, %s6, [#allocation13], 64, 64, 4
    $region49: #{_lambda_.17} parent=1 // pred_fallthru
      _
    // Predicated region
    $region50: #{_lambda_.17} parent=1 // pred_check
      _
    $region51: #{_lambda_.17} parent=1 // pred_check_branch
      %258 = sbr.rel (0) target = $region53
    $region52: #{_lambda_.17} parent=1 // pred_region
      %s260 = ssub.s32 128, 128
      %261 = vsyncadd [#allocation13], %s260
      %s262 = sshll.u32 [#allocation14], 4
      %s263 = int_to_ptr.vmem [resolvable:$true] %s262
      %268 = dma.vmem_to_hbm [thread:$0]  %s263, 128, %s7, [#allocation13], 64, 64, 4
    $region53: #{_lambda_.17} parent=1 // pred_fallthru
      _
    // Predicated region
    $region54: #{_lambda_.17} parent=1 // pred_check
      _
    $region55: #{_lambda_.17} parent=1 // pred_check_branch
      %270 = sbr.rel (0) target = $region57
    $region56: #{_lambda_.17} parent=1 // pred_region
      %271 = dma.done [#allocation4], 128
    $region57: #{_lambda_.17} parent=1 // pred_fallthru
      _
    // Predicated region
    $region58: #{_lambda_.17} parent=1 // pred_check
      _
    $region59: #{_lambda_.17} parent=1 // pred_check_branch
      %273 = sbr.rel (0) target = $region61
    $region60: #{_lambda_.17} parent=1 // pred_region
      %274 = dma.done [#allocation13], 128
    $region61: #{_lambda_.17} parent=1 // pred_fallthru
      _
    // Predicated region
    $region62: #{_lambda_.17} parent=1 // pred_check
      _
    $region63: #{_lambda_.17} parent=1 // pred_check_branch
      %276 = sbr.rel (0) target = $region65
    $region64: #{_lambda_.17} parent=1 // pred_region
      %277 = dma.done [#allocation13], 128
    $region65: #{_lambda_.17} parent=1 // pred_fallthru
      _
    %278 = vsyncpa [#allocation3], 1
    %279 = vsyncpa [#allocation6], 1
    %280 = vsyncpa [#allocation9], 1
    %281 = vsyncpa [#allocation4], 1
    %282 = vsyncpa [#allocation13], 1

// kernel: _lambda_.18
$region0: #{_lambda_.18}
  #allocation0 [shape = 'u32[]', space=smem, size = 0x4, offset = 0x4, fixed_abs, tag = 'smem constant byte address 0x4 - core index']
  #allocation1 [shape = 'u32[144,128]{1,0:T(1,128)}', space=vmem, size = 0x12000, scoped, tag = 'internal scratch']
  #allocation2 [shape = 'f32[8,32]{1,0:T(8,128)}', space=vmem, size = 0x1000, scoped, tag = 'scratch operand']
  %s0 = inlined_call_operand.hbm [shape: f32[2,1,8], index: 0, kind: input, shape index: {}]
  %s1 = inlined_call_operand.hbm [shape: bf16[2,8,32], index: 1, kind: input, shape index: {}]
  %s2 = inlined_call_operand.hbm [shape: bf16[2,8,32], index: 2, kind: input, shape index: {}]
  %s3 = inlined_call_operand.hbm [shape: bf16[2,8,32], index: 3, kind: input, shape index: {}]
  %s4 = inlined_call_operand.hbm [shape: bf16[2,8,32], index: 4, kind: output, shape index: {}]
  %s5 = sld [smem:[#allocation0]]
  $region65: #{_lambda_.18} parent=0
    _
  %s7 = ssub.s32 1, %s5
  %s8 = scalar_select 0, %s7, %s5
  $region1: #{_lambda_.18} parent=0
    #allocation3 [shape = 'u8[1024]{0}', space=vmem, size = 0x400, scoped, tag = 'input window, operand 0']
    #allocation4 [shape = 's32[2]{0}', space=sflag, size = 0x8, scoped, tag = 'scoped memory for _lambda_.18']
    #allocation5 [shape = 's32[2]{0}', space=sflag, size = 0x8, scoped, tag = 'scoped memory for _lambda_.18']
    #allocation6 [shape = 'u8[4096]{0}', space=vmem, size = 0x1000, scoped, tag = 'input window, operand 1']
    #allocation7 [shape = 's32[2]{0}', space=sflag, size = 0x8, scoped, tag = 'scoped memory for _lambda_.18']
    #allocation8 [shape = 'u8[4096]{0}', space=vmem, size = 0x1000, scoped, tag = 'input window, operand 2']
    #allocation9 [shape = 'u8[4096]{0}', space=vmem, size = 0x1000, scoped, tag = 'input window, operand 3']
    #allocation10 [shape = 's32[2]{0}', space=sflag, size = 0x8, scoped, tag = 'scoped memory for _lambda_.18']
    #allocation11 [shape = 'u8[4096]{0}', space=vmem, size = 0x1000, scoped, tag = 'output window, operand 0']
    %9 = vsyncpa [#allocation4], 0
    %s10 = scalar_lea.sflag [#allocation4], 1
    %11 = vsyncpa %s10, 0
    %12 = vsyncpa [#allocation7], 0
    %s13 = scalar_lea.sflag [#allocation7], 1
    %14 = vsyncpa %s13, 0
    %15 = vsyncpa [#allocation10], 0
    %s16 = scalar_lea.sflag [#allocation10], 1
    %17 = vsyncpa %s16, 0
    %18 = vsyncpa [#allocation5], 0
    %s19 = scalar_lea.sflag [#allocation5], 1
    %20 = vsyncpa %s19, 0
    loop: start=0, step=1, limit=4
    $region2: #{_lambda_.18} parent=1 // loop_pre_header
      _
    $region3: #{_lambda_.18} parent=1 // loop_header
      %s22 = sphi 0, %s26
      %p23 = scmp.ge.s32.totalorder %s22, 4
      %s29 = sphi 0, %s41
      %s30 = sphi 0, %s37
      %s31 = sphi 0, %s29
      %s32 = sphi 0, %s30
      %s33 = sphi 0, %s31
      %s34 = sphi 0, %s32
      %s44 = sphi 0, %s46
      %s47 = sphi 0, %s44
      %s48 = sphi 0, %s47
      %s64 = sphi 0, %s48
      %s72 = sphi 0, %s74
      %s75 = sphi 0, %s72
      %s76 = sphi 0, %s75
      %s92 = sphi 0, %s76
      %s100 = sphi 0, %s102
      %s103 = sphi 0, %s100
      %s104 = sphi 0, %s103
      %s120 = sphi 0, %s104
      %s128 = sphi 0, %s130
      %s131 = sphi 0, %s128
      %s132 = sphi 0, %s131
      %s148 = sphi 0, %s132
      %s156 = sphi 0, %s158
      %s159 = sphi 0, %s156
      %s160 = sphi 0, %s159
      %s176 = sphi 0, %s160
    $region4: #{_lambda_.18} parent=1 // loop_header_branch
      %25 = sbr.rel (%p23) target = $region8
    $region5: #{_lambda_.18} parent=1 // loop_body
      %s27 = ssub.s32 %s22, 1
      %s28 = ssub.s32 %s22, 2
      %s35 = sadd.s32 1, %s30
      %p36 = scmp.ge.s32.totalorder %s35, 1
      %s37 = scalar_select %p36, 0, %s35
      %s38 = sadd.s32 1, %s29
      %s39 = scalar_select %p36, %s38, %s29
      %p40 = scmp.ge.s32.totalorder %s39, 2
      %s41 = scalar_select %p40, 0, %s39
      %s42 = ssub.s32 %s29, %s41
      %p43 = scmp.eq.s32.totalorder %s42, 0
      %s45 = sadd.s32 %s44, 1
      %s46 = scalar_select %p43, %s44, %s45
      %p49 = pneg %p43
      %p50 = scmp.eq.s32.totalorder %s22, 1
      %p51 = por %p49, %p50
      %p52 = scmp.ne.s32.totalorder %s44, %s47
      %p53 = scmp.eq.s32.totalorder %s22, 0
      %p54 = por %p52, %p53
      %p55 = scmp.ne.s32.totalorder %s44, %s47
      %p56 = scmp.eq.s32.totalorder %s27, 1
      %p57 = por %p55, %p56
      %p58 = scmp.ne.s32.totalorder %s47, %s48
      %p59 = scmp.eq.s32.totalorder %s27, 0
      %p60 = por %p58, %p59
      %p61 = scmp.ne.s32.totalorder %s47, %s48
      %p62 = scmp.eq.s32.totalorder %s28, 1
      %p63 = por %p61, %p62
      %p65 = scmp.ne.s32.totalorder %s48, %s64
      %p66 = scmp.eq.s32.totalorder %s28, 0
      %p67 = por %p65, %p66
      %s68 = ssub.s32 %s29, %s41
      %s69 = ssub.s32 %s30, %s37
      %s70 = sor.u32 %s68, %s69
      %p71 = scmp.eq.s32.totalorder %s70, 0
      %s73 = sadd.s32 %s72, 1
      %s74 = scalar_select %p71, %s72, %s73
      %p77 = pneg %p71
      %p78 = scmp.eq.s32.totalorder %s22, 1
      %p79 = por %p77, %p78
      %p80 = scmp.ne.s32.totalorder %s72, %s75
      %p81 = scmp.eq.s32.totalorder %s22, 0
      %p82 = por %p80, %p81
      %p83 = scmp.ne.s32.totalorder %s72, %s75
      %p84 = scmp.eq.s32.totalorder %s27, 1
      %p85 = por %p83, %p84
      %p86 = scmp.ne.s32.totalorder %s75, %s76
      %p87 = scmp.eq.s32.totalorder %s27, 0
      %p88 = por %p86, %p87
      %p89 = scmp.ne.s32.totalorder %s75, %s76
      %p90 = scmp.eq.s32.totalorder %s28, 1
      %p91 = por %p89, %p90
      %p93 = scmp.ne.s32.totalorder %s76, %s92
      %p94 = scmp.eq.s32.totalorder %s28, 0
      %p95 = por %p93, %p94
      %s96 = ssub.s32 %s29, %s41
      %s97 = ssub.s32 %s30, %s37
      %s98 = sor.u32 %s96, %s97
      %p99 = scmp.eq.s32.totalorder %s98, 0
      %s101 = sadd.s32 %s100, 1
      %s102 = scalar_select %p99, %s100, %s101
      %p105 = pneg %p99
      %p106 = scmp.eq.s32.totalorder %s22, 1
      %p107 = por %p105, %p106
      %p108 = scmp.ne.s32.totalorder %s100, %s103
      %p109 = scmp.eq.s32.totalorder %s22, 0
      %p110 = por %p108, %p109
      %p111 = scmp.ne.s32.totalorder %s100, %s103
      %p112 = scmp.eq.s32.totalorder %s27, 1
      %p113 = por %p111, %p112
      %p114 = scmp.ne.s32.totalorder %s103, %s104
      %p115 = scmp.eq.s32.totalorder %s27, 0
      %p116 = por %p114, %p115
      %p117 = scmp.ne.s32.totalorder %s103, %s104
      %p118 = scmp.eq.s32.totalorder %s28, 1
      %p119 = por %p117, %p118
      %p121 = scmp.ne.s32.totalorder %s104, %s120
      %p122 = scmp.eq.s32.totalorder %s28, 0
      %p123 = por %p121, %p122
      %s124 = ssub.s32 %s29, %s41
      %s125 = ssub.s32 %s30, %s37
      %s126 = sor.u32 %s124, %s125
      %p127 = scmp.eq.s32.totalorder %s126, 0
      %s129 = sadd.s32 %s128, 1
      %s130 = scalar_select %p127, %s128, %s129
      %p133 = pneg %p127
      %p134 = scmp.eq.s32.totalorder %s22, 1
      %p135 = por %p133, %p134
      %p136 = scmp.ne.s32.totalorder %s128, %s131
      %p137 = scmp.eq.s32.totalorder %s22, 0
      %p138 = por %p136, %p137
      %p139 = scmp.ne.s32.totalorder %s128, %s131
      %p140 = scmp.eq.s32.totalorder %s27, 1
      %p141 = por %p139, %p140
      %p142 = scmp.ne.s32.totalorder %s131, %s132
      %p143 = scmp.eq.s32.totalorder %s27, 0
      %p144 = por %p142, %p143
      %p145 = scmp.ne.s32.totalorder %s131, %s132
      %p146 = scmp.eq.s32.totalorder %s28, 1
      %p147 = por %p145, %p146
      %p149 = scmp.ne.s32.totalorder %s132, %s148
      %p150 = scmp.eq.s32.totalorder %s28, 0
      %p151 = por %p149, %p150
      %s152 = ssub.s32 %s29, %s41
      %s153 = ssub.s32 %s30, %s37
      %s154 = sor.u32 %s152, %s153
      %p155 = scmp.eq.s32.totalorder %s154, 0
      %s157 = sadd.s32 %s156, 1
      %s158 = scalar_select %p155, %s156, %s157
      %p161 = pneg %p155
      %p162 = scmp.eq.s32.totalorder %s22, 1
      %p163 = por %p161, %p162
      %p164 = scmp.ne.s32.totalorder %s156, %s159
      %p165 = scmp.eq.s32.totalorder %s22, 0
      %p166 = por %p164, %p165
      %p167 = scmp.ne.s32.totalorder %s156, %s159
      %p168 = scmp.eq.s32.totalorder %s27, 1
      %p169 = por %p167, %p168
      %p170 = scmp.ne.s32.totalorder %s159, %s160
      %p171 = scmp.eq.s32.totalorder %s27, 0
      %p172 = por %p170, %p171
      %p173 = scmp.ne.s32.totalorder %s159, %s160
      %p174 = scmp.eq.s32.totalorder %s28, 1
      %p175 = por %p173, %p174
      %p177 = scmp.ne.s32.totalorder %s160, %s176
      %p178 = scmp.eq.s32.totalorder %s28, 0
      %p179 = por %p177, %p178
      %p180 = scmp.le.s32.totalorder 1, %s22
      %p181 = scmp.lt.s32.totalorder %s22, 3
      %p182 = pnand %p180, %p181
      %p183 = pneg %p182
      // Predicated region
      $region9: #{_lambda_.18} parent=5 // pred_check
        _
      $region10: #{_lambda_.18} parent=5 // pred_check_branch
        %185 = sbr.rel (%p182) target = $region12
      $region11: #{_lambda_.18} parent=5 // pred_region
        %s186 = ssub.s32 %s22, 1
      $region12: #{_lambda_.18} parent=5 // pred_fallthru
        _
      %p187 = scmp.lt.s32.totalorder %s22, 2
      // Predicated region
      $region13: #{_lambda_.18} parent=5 // pred_check
        %p188 = pneg %p187
      $region14: #{_lambda_.18} parent=5 // pred_check_branch
        %190 = sbr.rel (%p188) target = $region16
      $region15: #{_lambda_.18} parent=5 // pred_region
        // Predicated region
        $region17: #{_lambda_.18} parent=15 // pred_check
          %p191 = pneg %p54
        $region18: #{_lambda_.18} parent=15 // pred_check_branch
          %193 = sbr.rel (%p191) target = $region20
        $region19: #{_lambda_.18} parent=15 // pred_region
          %s194 = sand.u32 %s44, 1
          %s195 = scalar_lea.sflag [#allocation4], %s194
          %s196 = sand.u32 %s44, 1
          %s197 = scalar_lea.vmem [#allocation3], %s196
          %s199 = ssub.s32 16, 16
          %200 = vsyncadd %s195, %s199
          %s201 = smul.addr %s29, 16
          %s202 = scalar_lea.hbm %s0, %s201
          %s204 = sshll.u32 %s197, 4
          %s205 = int_to_ptr.vmem [resolvable:$true] %s204
          %207 = dma.hbm_to_vmem [thread:$0]  %s202, 16, %s205, %s195
        $region20: #{_lambda_.18} parent=15 // pred_fallthru
          _
        // Predicated region
        $region21: #{_lambda_.18} parent=15 // pred_check
          %p208 = pneg %p82
        $region22: #{_lambda_.18} parent=15 // pred_check_branch
          %210 = sbr.rel (%p208) target = $region24
        $region23: #{_lambda_.18} parent=15 // pred_region
          %s211 = sand.u32 %s22, 1
          %s212 = scalar_lea.sflag [#allocation7], %s211
          %s213 = sand.u32 %s72, 1
          %s214 = smul.addr %s213, 4
          %s215 = scalar_lea.vmem [#allocation6], %s214
          %s217 = ssub.s32 64, 64
          %218 = vsyncadd %s212, %s217
          %s219 = sadd.s32 %s30, %s29
          %s220 = smul.addr %s219, 64
          %s221 = scalar_lea.hbm %s1, %s220
          %s223 = sshll.u32 %s215, 4
          %s224 = int_to_ptr.vmem [resolvable:$true] %s223
          %226 = dma.hbm_to_vmem [thread:$0]  %s221, 64, %s224, %s212
        $region24: #{_lambda_.18} parent=15 // pred_fallthru
          _
        // Predicated region
        $region25: #{_lambda_.18} parent=15 // pred_check
          %p227 = pneg %p110
        $region26: #{_lambda_.18} parent=15 // pred_check_branch
          %229 = sbr.rel (%p227) target = $region28
        $region27: #{_lambda_.18} parent=15 // pred_region
          %s230 = sand.u32 %s22, 1
          %s231 = scalar_lea.sflag [#allocation7], %s230
          %s232 = sand.u32 %s100, 1
          %s233 = smul.addr %s232, 4
          %s234 = scalar_lea.vmem [#allocation8], %s233
          %s236 = ssub.s32 64, 64
          %237 = vsyncadd %s231, %s236
          %s238 = sadd.s32 %s30, %s29
          %s239 = smul.addr %s238, 64
          %s240 = scalar_lea.hbm %s2, %s239
          %s242 = sshll.u32 %s234, 4
          %s243 = int_to_ptr.vmem [resolvable:$true] %s242
          %245 = dma.hbm_to_vmem [thread:$0]  %s240, 64, %s243, %s231
        $region28: #{_lambda_.18} parent=15 // pred_fallthru
          _
        // Predicated region
        $region29: #{_lambda_.18} parent=15 // pred_check
          %p246 = pneg %p138
        $region30: #{_lambda_.18} parent=15 // pred_check_branch
          %248 = sbr.rel (%p246) target = $region32
        $region31: #{_lambda_.18} parent=15 // pred_region
          %s249 = sand.u32 %s128, 1
          %s250 = scalar_lea.sflag [#allocation10], %s249
          %s251 = sand.u32 %s128, 1
          %s252 = smul.addr %s251, 4
          %s253 = scalar_lea.vmem [#allocation9], %s252
          %s255 = ssub.s32 64, 64
          %256 = vsyncadd %s250, %s255
          %s257 = sadd.s32 %s30, %s29
          %s258 = smul.addr %s257, 64
          %s259 = scalar_lea.hbm %s3, %s258
          %s261 = sshll.u32 %s253, 4
          %s262 = int_to_ptr.vmem [resolvable:$true] %s261
          %264 = dma.hbm_to_vmem [thread:$0]  %s259, 64, %s262, %s250
        $region32: #{_lambda_.18} parent=15 // pred_fallthru
          _
      $region16: #{_lambda_.18} parent=5 // pred_fallthru
        _
      %p265 = scmp.le.s32.totalorder 1, %s22
      %p266 = scmp.lt.s32.totalorder %s22, 3
      %p267 = pnand %p265, %p266
      %p268 = pneg %p267
      // Predicated region
      $region33: #{_lambda_.18} parent=5 // pred_check
        _
      $region34: #{_lambda_.18} parent=5 // pred_check_branch
        %270 = sbr.rel (%p267) target = $region36
      $region35: #{_lambda_.18} parent=5 // pred_region
        %s271 = ssub.s32 %s22, 1
        %s272 = sand.u32 %s47, 1
        %s273 = scalar_lea.sflag [#allocation4], %s272
        %s274 = sand.u32 %s47, 1
        %s275 = scalar_lea.vmem [#allocation3], %s274
        // Predicated region
        $region37: #{_lambda_.18} parent=35 // pred_check
          %p276 = pneg %p60
        $region38: #{_lambda_.18} parent=35 // pred_check_branch
          %278 = sbr.rel (%p276) target = $region40
        $region39: #{_lambda_.18} parent=35 // pred_region
          %279 = dma.done %s273, 16
        $region40: #{_lambda_.18} parent=35 // pred_fallthru
          _
        %s280 = sand.u32 %s27, 1
        %s281 = scalar_lea.sflag [#allocation7], %s280
        %s282 = sand.u32 %s75, 1
        %s283 = smul.addr %s282, 4
        %s284 = scalar_lea.vmem [#allocation6], %s283
        // Predicated region
        $region41: #{_lambda_.18} parent=35 // pred_check
          %p285 = pneg %p88
        $region42: #{_lambda_.18} parent=35 // pred_check_branch
          %287 = sbr.rel (%p285) target = $region44
        $region43: #{_lambda_.18} parent=35 // pred_region
          %288 = dma.done %s281, 64
        $region44: #{_lambda_.18} parent=35 // pred_fallthru
          _
        %s289 = sand.u32 %s27, 1
        %s290 = scalar_lea.sflag [#allocation7], %s289
        %s291 = sand.u32 %s103, 1
        %s292 = smul.addr %s291, 4
        %s293 = scalar_lea.vmem [#allocation8], %s292
        // Predicated region
        $region45: #{_lambda_.18} parent=35 // pred_check
          %p294 = pneg %p116
        $region46: #{_lambda_.18} parent=35 // pred_check_branch
          %296 = sbr.rel (%p294) target = $region48
        $region47: #{_lambda_.18} parent=35 // pred_region
          %297 = dma.done %s290, 64
        $region48: #{_lambda_.18} parent=35 // pred_fallthru
          _
        %s298 = sand.u32 %s131, 1
        %s299 = scalar_lea.sflag [#allocation10], %s298
        %s300 = sand.u32 %s131, 1
        %s301 = smul.addr %s300, 4
        %s302 = scalar_lea.vmem [#allocation9], %s301
        // Predicated region
        $region49: #{_lambda_.18} parent=35 // pred_check
          %p303 = pneg %p144
        $region50: #{_lambda_.18} parent=35 // pred_check_branch
          %305 = sbr.rel (%p303) target = $region52
        $region51: #{_lambda_.18} parent=35 // pred_region
          %306 = dma.done %s299, 64
        $region52: #{_lambda_.18} parent=35 // pred_fallthru
          _
        %s307 = sand.u32 %s47, 1
        %s308 = scalar_lea.sflag [#allocation4], %s307
        %s309 = sand.u32 %s47, 1
        %s310 = scalar_lea.vmem [#allocation3], %s309
        %p311 = pneg %p60
        %p312 = pneg %p57
        %s313 = sand.u32 %s27, 1
        %s314 = scalar_lea.sflag [#allocation7], %s313
        %s315 = sand.u32 %s75, 1
        %s316 = smul.addr %s315, 4
        %s317 = scalar_lea.vmem [#allocation6], %s316
        %p318 = pneg %p88
        %p319 = pneg %p85
        %s320 = sand.u32 %s27, 1
        %s321 = scalar_lea.sflag [#allocation7], %s320
        %s322 = sand.u32 %s103, 1
        %s323 = smul.addr %s322, 4
        %s324 = scalar_lea.vmem [#allocation8], %s323
        %p325 = pneg %p116
        %p326 = pneg %p113
        %s327 = sand.u32 %s131, 1
        %s328 = scalar_lea.sflag [#allocation10], %s327
        %s329 = sand.u32 %s131, 1
        %s330 = smul.addr %s329, 4
        %s331 = scalar_lea.vmem [#allocation9], %s330
        %p332 = pneg %p144
        %p333 = pneg %p141
        %p334 = pneg %p172
        %p335 = pneg %p169
        %s336 = sand.u32 %s159, 1
        %s337 = scalar_lea.sflag [#allocation5], %s336
        %s338 = sand.u32 %s159, 1
        %s339 = smul.addr %s338, 4
        %s340 = scalar_lea.vmem [#allocation11], %s339
        %v342 = vld [vmem:[%s275] sm:$0x1]
        %v343 = vlaneseq
        %v344 = vshrl.u32 %v343, 7
        %v345 = vlaneseq
        %v346 = vand.u32 %v345, 127
        %vm347 = vcmp.le.s32.totalorder %v346, %v344
        %v348 = vsel %vm347, 0.0, -1e+30
        %v350 = vlaneseq
        %v351 = vshrl.u32 %v350, 7
        %v352 = vsub.s32 0, %v351
        %v353 = vrot.slane %v342, %v352
        %v355 = vadd.f32 %v353, %v348
        %v356 = vld [vmem:[%s284] sm:$0xf]
        %v357 = vld [vmem:[%s293] sm:$0xf]
        %v358 = vld [vmem:[%s302] sm:$0xf]
        %vm359 = vcmask 64512
        %v361 = vsel %vm359, %v356, 0
        %v364 = vsel %vm359, %v357, 0
        %366 = vmatprep.subr.bf16.mxu0 0
        %367 = vmatpush1.bf16.xpose.msra.mxu0 %v364
        %368 = vmatprep.subr.bf16.mxu0 0
        %369 = vmatpush1.bf16.xpose.msra.mxu0 0
        %370 = vmatprep.subr.bf16.mxu0 0
        %371 = vmatpush1.bf16.xpose.msra.mxu0 0
        %372 = vmatprep.subr.bf16.mxu0 0
        %373 = vmatpush1.bf16.xpose.msra.mxu0 0
        %374 = vmatprep.subr.bf16.mxu0 0
        %375 = vmatpush1.bf16.xpose.msra.mxu0 0
        %376 = vmatprep.subr.bf16.mxu0 0
        %377 = vmatpush1.bf16.xpose.msra.mxu0 0
        %378 = vmatprep.subr.bf16.mxu0 0
        %379 = vmatpush1.bf16.xpose.msra.mxu0 0
        %380 = vmatprep.subr.bf16.mxu0 0
        %381 = vmatpush1.bf16.xpose.msra.mxu0 0
        %382 = vmatprep.subr.bf16.mxu0 0
        %383 = vmatpush1.bf16.xpose.msra.mxu0 0
        %384 = vmatprep.subr.bf16.mxu0 0
        %385 = vmatpush1.bf16.xpose.msra.mxu0 0
        %386 = vmatprep.subr.bf16.mxu0 0
        %387 = vmatpush1.bf16.xpose.msra.mxu0 0
        %388 = vmatprep.subr.bf16.mxu0 0
        %389 = vmatpush1.bf16.xpose.msra.mxu0 0
        %390 = vmatprep.subr.bf16.mxu0 0
        %391 = vmatpush1.bf16.xpose.msra.mxu0 0
        %392 = vmatprep.subr.bf16.mxu0 0
        %393 = vmatpush1.bf16.xpose.msra.mxu0 0
        %394 = vmatprep.subr.bf16.mxu0 0
        %395 = vmatpush1.bf16.xpose.msra.mxu0 0
        %396 = vmatprep.subr.bf16.mxu0 0
        %397 = vmatpush1.bf16.xpose.msra.mxu0 0
        %398 = vmatprep.mubr.bf16.mxu0 0
        %399 = vmatmul.mubr.bf16.gmra.mrb[0].mxu0 %v361
        %v400 = vpop.f32.mrb[0].mxu0
        %v401 = vadd.f32 %v355, %v400
        %v402 = vpop.f32.mrb[0].mxu0
        %v403 = vpop.f32.mrb[0].mxu0
        %v404 = vpop.f32.mrb[0].mxu0
        %405 = vdwg.mxu0
        %v406 = vsel %vm359, %v401, -inf
        %407 = vmax.xlane.f32.xlu0 %v406
        %v408 = vpop.xlane.xlu0 %407
        %v409 = vsub.f32 %v401, %v408
        %v410 = vmul.f32 %v409, 1.442695
        %v411 = vpow.pop %v410
        %v412 = vsel %vm359, %v411, 0.0
        %413 = vadd.xlane.f32.xlu0 %v412
        %v414 = vpop.xlane.xlu0 %413
        %v415 = vrcp.pop %v414
        %v416 = vmul.f32 %v411, %v415
        %v417 = vpack.c.bf16 %v416, %v416
        %v419 = vsel %vm359, %v417, 0
        %vm421 = vcmask 1043456
        %v423 = vsel %vm421, %v358, 0
        %425 = vmatprep.subr.bf16.mxu0 0
        %426 = vmatpush1.bf16.msra.mxu0 %v423
        %427 = vmatprep.subr.bf16.mxu0 0
        %428 = vmatpush1.bf16.msra.mxu0 0
        %429 = vmatprep.subr.bf16.mxu0 0
        %430 = vmatpush1.bf16.msra.mxu0 0
        %431 = vmatprep.subr.bf16.mxu0 0
        %432 = vmatpush1.bf16.msra.mxu0 0
        %433 = vmatprep.subr.bf16.mxu0 0
        %434 = vmatpush1.bf16.msra.mxu0 0
        %435 = vmatprep.subr.bf16.mxu0 0
        %436 = vmatpush1.bf16.msra.mxu0 0
        %437 = vmatprep.subr.bf16.mxu0 0
        %438 = vmatpush1.bf16.msra.mxu0 0
        %439 = vmatprep.subr.bf16.mxu0 0
        %440 = vmatpush1.bf16.msra.mxu0 0
        %441 = vmatprep.subr.bf16.mxu0 0
        %442 = vmatpush1.bf16.msra.mxu0 0
        %443 = vmatprep.subr.bf16.mxu0 0
        %444 = vmatpush1.bf16.msra.mxu0 0
        %445 = vmatprep.subr.bf16.mxu0 0
        %446 = vmatpush1.bf16.msra.mxu0 0
        %447 = vmatprep.subr.bf16.mxu0 0
        %448 = vmatpush1.bf16.msra.mxu0 0
        %449 = vmatprep.subr.bf16.mxu0 0
        %450 = vmatpush1.bf16.msra.mxu0 0
        %451 = vmatprep.subr.bf16.mxu0 0
        %452 = vmatpush1.bf16.msra.mxu0 0
        %453 = vmatprep.subr.bf16.mxu0 0
        %454 = vmatpush1.bf16.msra.mxu0 0
        %455 = vmatprep.subr.bf16.mxu0 0
        %456 = vmatpush1.bf16.msra.mxu0 0
        %457 = vmatprep.mubr.bf16.mxu0 0
        %458 = vmatmul.mubr.bf16.gmra.mrb[0].mxu0 %v419
        %v459 = vpop.f32.mrb[0].mxu0
        %v460 = vadd.f32 0.0, %v459
        %v461 = vpop.f32.mrb[0].mxu0
        %v462 = vpop.f32.mrb[0].mxu0
        %v463 = vpop.f32.mrb[0].mxu0
        %464 = vdwg.mxu0
        %465 = vst.msk [vmem:[#allocation2] sm:$0xff] %vm359, %v460
        %v466 = vld [vmem:[%s284] sm:$0xf]
        %v467 = vld [vmem:[%s293] sm:$0xf]
        %v468 = vld [vmem:[%s302] sm:$0xf]
        %v470 = vunpack.c.l.b16 %v466
        %v471 = vpack.c.b16 %v470, %v470
        %472 = vrot.lane.b32.xlu0 %v471, 120
        %v473 = vpop.permute.xlu0 %472
        %v475 = vunpack.c.l.b16 %v467
        %v476 = vpack.c.b16 %v475, %v475
        %477 = vrot.lane.b32.xlu0 %v476, 120
        %v478 = vpop.permute.xlu0 %477
        %v480 = vsel %vm359, %v473, 0
        %v483 = vsel %vm359, %v478, 0
        %485 = vmatprep.subr.bf16.mxu0 0
        %486 = vmatpush1.bf16.xpose.msra.mxu0 %v483
        %487 = vmatprep.subr.bf16.mxu0 0
        %488 = vmatpush1.bf16.xpose.msra.mxu0 0
        %489 = vmatprep.subr.bf16.mxu0 0
        %490 = vmatpush1.bf16.xpose.msra.mxu0 0
        %491 = vmatprep.subr.bf16.mxu0 0
        %492 = vmatpush1.bf16.xpose.msra.mxu0 0
        %493 = vmatprep.subr.bf16.mxu0 0
        %494 = vmatpush1.bf16.xpose.msra.mxu0 0
        %495 = vmatprep.subr.bf16.mxu0 0
        %496 = vmatpush1.bf16.xpose.msra.mxu0 0
        %497 = vmatprep.subr.bf16.mxu0 0
        %498 = vmatpush1.bf16.xpose.msra.mxu0 0
        %499 = vmatprep.subr.bf16.mxu0 0
        %500 = vmatpush1.bf16.xpose.msra.mxu0 0
        %501 = vmatprep.subr.bf16.mxu0 0
        %502 = vmatpush1.bf16.xpose.msra.mxu0 0
        %503 = vmatprep.subr.bf16.mxu0 0
        %504 = vmatpush1.bf16.xpose.msra.mxu0 0
        %505 = vmatprep.subr.bf16.mxu0 0
        %506 = vmatpush1.bf16.xpose.msra.mxu0 0
        %507 = vmatprep.subr.bf16.mxu0 0
        %508 = vmatpush1.bf16.xpose.msra.mxu0 0
        %509 = vmatprep.subr.bf16.mxu0 0
        %510 = vmatpush1.bf16.xpose.msra.mxu0 0
        %511 = vmatprep.subr.bf16.mxu0 0
        %512 = vmatpush1.bf16.xpose.msra.mxu0 0
        %513 = vmatprep.subr.bf16.mxu0 0
        %514 = vmatpush1.bf16.xpose.msra.mxu0 0
        %515 = vmatprep.subr.bf16.mxu0 0
        %516 = vmatpush1.bf16.xpose.msra.mxu0 0
        %517 = vmatprep.mubr.bf16.mxu0 0
        %518 = vmatmul.mubr.bf16.gmra.mrb[0].mxu0 %v480
        %v519 = vpop.f32.mrb[0].mxu0
        %v520 = vadd.f32 %v355, %v519
        %v521 = vpop.f32.mrb[0].mxu0
        %v522 = vpop.f32.mrb[0].mxu0
        %v523 = vpop.f32.mrb[0].mxu0
        %524 = vdwg.mxu0
        %v525 = vsel %vm359, %v520, -inf
        %526 = vmax.xlane.f32.xlu0 %v525
        %v527 = vpop.xlane.xlu0 %526
        %v528 = vsub.f32 %v520, %v527
        %v529 = vmul.f32 %v528, 1.442695
        %v530 = vpow.pop %v529
        %v531 = vsel %vm359, %v530, 0.0
        %532 = vadd.xlane.f32.xlu0 %v531
        %v533 = vpop.xlane.xlu0 %532
        %v534 = vrcp.pop %v533
        %v535 = vmul.f32 %v530, %v534
        %v536 = vpack.c.bf16 %v535, %v535
        %v538 = vunpack.c.l.b16 %v468
        %v539 = vpack.c.b16 %v538, %v538
        %540 = vrot.lane.b32.xlu0 %v539, 120
        %v541 = vpop.permute.xlu0 %540
        %v543 = vsel %vm359, %v536, 0
        %v546 = vsel %vm421, %v541, 0
        %548 = vmatprep.subr.bf16.mxu0 0
        %549 = vmatpush1.bf16.msra.mxu0 %v546
        %550 = vmatprep.subr.bf16.mxu0 0
        %551 = vmatpush1.bf16.msra.mxu0 0
        %552 = vmatprep.subr.bf16.mxu0 0
        %553 = vmatpush1.bf16.msra.mxu0 0
        %554 = vmatprep.subr.bf16.mxu0 0
        %555 = vmatpush1.bf16.msra.mxu0 0
        %556 = vmatprep.subr.bf16.mxu0 0
        %557 = vmatpush1.bf16.msra.mxu0 0
        %558 = vmatprep.subr.bf16.mxu0 0
        %559 = vmatpush1.bf16.msra.mxu0 0
        %560 = vmatprep.subr.bf16.mxu0 0
        %561 = vmatpush1.bf16.msra.mxu0 0
        %562 = vmatprep.subr.bf16.mxu0 0
        %563 = vmatpush1.bf16.msra.mxu0 0
        %564 = vmatprep.subr.bf16.mxu0 0
        %565 = vmatpush1.bf16.msra.mxu0 0
        %566 = vmatprep.subr.bf16.mxu0 0
        %567 = vmatpush1.bf16.msra.mxu0 0
        %568 = vmatprep.subr.bf16.mxu0 0
        %569 = vmatpush1.bf16.msra.mxu0 0
        %570 = vmatprep.subr.bf16.mxu0 0
        %571 = vmatpush1.bf16.msra.mxu0 0
        %572 = vmatprep.subr.bf16.mxu0 0
        %573 = vmatpush1.bf16.msra.mxu0 0
        %574 = vmatprep.subr.bf16.mxu0 0
        %575 = vmatpush1.bf16.msra.mxu0 0
        %576 = vmatprep.subr.bf16.mxu0 0
        %577 = vmatpush1.bf16.msra.mxu0 0
        %578 = vmatprep.subr.bf16.mxu0 0
        %579 = vmatpush1.bf16.msra.mxu0 0
        %580 = vmatprep.mubr.bf16.mxu0 0
        %581 = vmatmul.mubr.bf16.gmra.mrb[0].mxu0 %v543
        %v582 = vpop.f32.mrb[0].mxu0
        %v583 = vadd.f32 0.0, %v582
        %v584 = vpop.f32.mrb[0].mxu0
        %v585 = vpop.f32.mrb[0].mxu0
        %v586 = vpop.f32.mrb[0].mxu0
        %587 = vdwg.mxu0
        %589 = vrot.lane.b32.xlu0 %v583, 8
        %v590 = vpop.permute.xlu0 %589
        %vm592 = vcmask 130112
        %593 = vst.msk [vmem:[#allocation2] sm:$0xff] %vm592, %v590
        %v594 = vld [vmem:[%s284] sm:$0xf]
        %v595 = vld [vmem:[%s293] sm:$0xf]
        %v596 = vld [vmem:[%s302] sm:$0xf]
        %v598 = vunpack.c.l.b16 %v594
        %v599 = vpack.c.b16 %v598, %v598
        %600 = vrot.lane.b32.xlu0 %v599, 112
        %v601 = vpop.permute.xlu0 %600
        %v603 = vunpack.c.l.b16 %v595
        %v604 = vpack.c.b16 %v603, %v603
        %605 = vrot.lane.b32.xlu0 %v604, 112
        %v606 = vpop.permute.xlu0 %605
        %v608 = vsel %vm359, %v601, 0
        %v611 = vsel %vm359, %v606, 0
        %613 = vmatprep.subr.bf16.mxu0 0
        %614 = vmatpush1.bf16.xpose.msra.mxu0 %v611
        %615 = vmatprep.subr.bf16.mxu0 0
        %616 = vmatpush1.bf16.xpose.msra.mxu0 0
        %617 = vmatprep.subr.bf16.mxu0 0
        %618 = vmatpush1.bf16.xpose.msra.mxu0 0
        %619 = vmatprep.subr.bf16.mxu0 0
        %620 = vmatpush1.bf16.xpose.msra.mxu0 0
        %621 = vmatprep.subr.bf16.mxu0 0
        %622 = vmatpush1.bf16.xpose.msra.mxu0 0
        %623 = vmatprep.subr.bf16.mxu0 0
        %624 = vmatpush1.bf16.xpose.msra.mxu0 0
        %625 = vmatprep.subr.bf16.mxu0 0
        %626 = vmatpush1.bf16.xpose.msra.mxu0 0
        %627 = vmatprep.subr.bf16.mxu0 0
        %628 = vmatpush1.bf16.xpose.msra.mxu0 0
        %629 = vmatprep.subr.bf16.mxu0 0
        %630 = vmatpush1.bf16.xpose.msra.mxu0 0
        %631 = vmatprep.subr.bf16.mxu0 0
        %632 = vmatpush1.bf16.xpose.msra.mxu0 0
        %633 = vmatprep.subr.bf16.mxu0 0
        %634 = vmatpush1.bf16.xpose.msra.mxu0 0
        %635 = vmatprep.subr.bf16.mxu0 0
        %636 = vmatpush1.bf16.xpose.msra.mxu0 0
        %637 = vmatprep.subr.bf16.mxu0 0
        %638 = vmatpush1.bf16.xpose.msra.mxu0 0
        %639 = vmatprep.subr.bf16.mxu0 0
        %640 = vmatpush1.bf16.xpose.msra.mxu0 0
        %641 = vmatprep.subr.bf16.mxu0 0
        %642 = vmatpush1.bf16.xpose.msra.mxu0 0
        %643 = vmatprep.subr.bf16.mxu0 0
        %644 = vmatpush1.bf16.xpose.msra.mxu0 0
        %645 = vmatprep.mubr.bf16.mxu0 0
        %646 = vmatmul.mubr.bf16.gmra.mrb[0].mxu0 %v608
        %v647 = vpop.f32.mrb[0].mxu0
        %v648 = vadd.f32 %v355, %v647
        %v649 = vpop.f32.mrb[0].mxu0
        %v650 = vpop.f32.mrb[0].mxu0
        %v651 = vpop.f32.mrb[0].mxu0
        %652 = vdwg.mxu0
        %v653 = vsel %vm359, %v648, -inf
        %654 = vmax.xlane.f32.xlu0 %v653
        %v655 = vpop.xlane.xlu0 %654
        %v656 = vsub.f32 %v648, %v655
        %v657 = vmul.f32 %v656, 1.442695
        %v658 = vpow.pop %v657
        %v659 = vsel %vm359, %v658, 0.0
        %660 = vadd.xlane.f32.xlu0 %v659
        %v661 = vpop.xlane.xlu0 %660
        %v662 = vrcp.pop %v661
        %v663 = vmul.f32 %v658, %v662
        %v664 = vpack.c.bf16 %v663, %v663
        %v666 = vunpack.c.l.b16 %v596
        %v667 = vpack.c.b16 %v666, %v666
        %668 = vrot.lane.b32.xlu0 %v667, 112
        %v669 = vpop.permute.xlu0 %668
        %v671 = vsel %vm359, %v664, 0
        %v674 = vsel %vm421, %v669, 0
        %676 = vmatprep.subr.bf16.mxu0 0
        %677 = vmatpush1.bf16.msra.mxu0 %v674
        %678 = vmatprep.subr.bf16.mxu0 0
        %679 = vmatpush1.bf16.msra.mxu0 0
        %680 = vmatprep.subr.bf16.mxu0 0
        %681 = vmatpush1.bf16.msra.mxu0 0
        %682 = vmatprep.subr.bf16.mxu0 0
        %683 = vmatpush1.bf16.msra.mxu0 0
        %684 = vmatprep.subr.bf16.mxu0 0
        %685 = vmatpush1.bf16.msra.mxu0 0
        %686 = vmatprep.subr.bf16.mxu0 0
        %687 = vmatpush1.bf16.msra.mxu0 0
        %688 = vmatprep.subr.bf16.mxu0 0
        %689 = vmatpush1.bf16.msra.mxu0 0
        %690 = vmatprep.subr.bf16.mxu0 0
        %691 = vmatpush1.bf16.msra.mxu0 0
        %692 = vmatprep.subr.bf16.mxu0 0
        %693 = vmatpush1.bf16.msra.mxu0 0
        %694 = vmatprep.subr.bf16.mxu0 0
        %695 = vmatpush1.bf16.msra.mxu0 0
        %696 = vmatprep.subr.bf16.mxu0 0
        %697 = vmatpush1.bf16.msra.mxu0 0
        %698 = vmatprep.subr.bf16.mxu0 0
        %699 = vmatpush1.bf16.msra.mxu0 0
        %700 = vmatprep.subr.bf16.mxu0 0
        %701 = vmatpush1.bf16.msra.mxu0 0
        %702 = vmatprep.subr.bf16.mxu0 0
        %703 = vmatpush1.bf16.msra.mxu0 0
        %704 = vmatprep.subr.bf16.mxu0 0
        %705 = vmatpush1.bf16.msra.mxu0 0
        %706 = vmatprep.subr.bf16.mxu0 0
        %707 = vmatpush1.bf16.msra.mxu0 0
        %708 = vmatprep.mubr.bf16.mxu0 0
        %709 = vmatmul.mubr.bf16.gmra.mrb[0].mxu0 %v671
        %v710 = vpop.f32.mrb[0].mxu0
        %v711 = vadd.f32 0.0, %v710
        %v712 = vpop.f32.mrb[0].mxu0
        %v713 = vpop.f32.mrb[0].mxu0
        %v714 = vpop.f32.mrb[0].mxu0
        %715 = vdwg.mxu0
        %717 = vrot.lane.b32.xlu0 %v711, 16
        %v718 = vpop.permute.xlu0 %717
        %vm720 = vcmask 195712
        %721 = vst.msk [vmem:[#allocation2] sm:$0xff] %vm720, %v718
        %v722 = vld [vmem:[%s284] sm:$0xf]
        %v723 = vld [vmem:[%s293] sm:$0xf]
        %v724 = vld [vmem:[%s302] sm:$0xf]
        %v726 = vunpack.c.l.b16 %v722
        %v727 = vpack.c.b16 %v726, %v726
        %728 = vrot.lane.b32.xlu0 %v727, 104
        %v729 = vpop.permute.xlu0 %728
        %v731 = vunpack.c.l.b16 %v723
        %v732 = vpack.c.b16 %v731, %v731
        %733 = vrot.lane.b32.xlu0 %v732, 104
        %v734 = vpop.permute.xlu0 %733
        %v736 = vsel %vm359, %v729, 0
        %v739 = vsel %vm359, %v734, 0
        %741 = vmatprep.subr.bf16.mxu0 0
        %742 = vmatpush1.bf16.xpose.msra.mxu0 %v739
        %743 = vmatprep.subr.bf16.mxu0 0
        %744 = vmatpush1.bf16.xpose.msra.mxu0 0
        %745 = vmatprep.subr.bf16.mxu0 0
        %746 = vmatpush1.bf16.xpose.msra.mxu0 0
        %747 = vmatprep.subr.bf16.mxu0 0
        %748 = vmatpush1.bf16.xpose.msra.mxu0 0
        %749 = vmatprep.subr.bf16.mxu0 0
        %750 = vmatpush1.bf16.xpose.msra.mxu0 0
        %751 = vmatprep.subr.bf16.mxu0 0
        %752 = vmatpush1.bf16.xpose.msra.mxu0 0
        %753 = vmatprep.subr.bf16.mxu0 0
        %754 = vmatpush1.bf16.xpose.msra.mxu0 0
        %755 = vmatprep.subr.bf16.mxu0 0
        %756 = vmatpush1.bf16.xpose.msra.mxu0 0
        %757 = vmatprep.subr.bf16.mxu0 0
        %758 = vmatpush1.bf16.xpose.msra.mxu0 0
        %759 = vmatprep.subr.bf16.mxu0 0
        %760 = vmatpush1.bf16.xpose.msra.mxu0 0
        %761 = vmatprep.subr.bf16.mxu0 0
        %762 = vmatpush1.bf16.xpose.msra.mxu0 0
        %763 = vmatprep.subr.bf16.mxu0 0
        %764 = vmatpush1.bf16.xpose.msra.mxu0 0
        %765 = vmatprep.subr.bf16.mxu0 0
        %766 = vmatpush1.bf16.xpose.msra.mxu0 0
        %767 = vmatprep.subr.bf16.mxu0 0
        %768 = vmatpush1.bf16.xpose.msra.mxu0 0
        %769 = vmatprep.subr.bf16.mxu0 0
        %770 = vmatpush1.bf16.xpose.msra.mxu0 0
        %771 = vmatprep.subr.bf16.mxu0 0
        %772 = vmatpush1.bf16.xpose.msra.mxu0 0
        %773 = vmatprep.mubr.bf16.mxu0 0
        %774 = vmatmul.mubr.bf16.gmra.mrb[0].mxu0 %v736
        %v775 = vpop.f32.mrb[0].mxu0
        %v776 = vadd.f32 %v355, %v775
        %v777 = vpop.f32.mrb[0].mxu0
        %v778 = vpop.f32.mrb[0].mxu0
        %v779 = vpop.f32.mrb[0].mxu0
        %780 = vdwg.mxu0
        %v781 = vsel %vm359, %v776, -inf
        %782 = vmax.xlane.f32.xlu0 %v781
        %v783 = vpop.xlane.xlu0 %782
        %v784 = vsub.f32 %v776, %v783
        %v785 = vmul.f32 %v784, 1.442695
        %v786 = vpow.pop %v785
        %v787 = vsel %vm359, %v786, 0.0
        %788 = vadd.xlane.f32.xlu0 %v787
        %v789 = vpop.xlane.xlu0 %788
        %v790 = vrcp.pop %v789
        %v791 = vmul.f32 %v786, %v790
        %v792 = vpack.c.bf16 %v791, %v791
        %v794 = vunpack.c.l.b16 %v724
        %v795 = vpack.c.b16 %v794, %v794
        %796 = vrot.lane.b32.xlu0 %v795, 104
        %v797 = vpop.permute.xlu0 %796
        %v799 = vsel %vm359, %v792, 0
        %v802 = vsel %vm421, %v797, 0
        %804 = vmatprep.subr.bf16.mxu0 0
        %805 = vmatpush1.bf16.msra.mxu0 %v802
        %806 = vmatprep.subr.bf16.mxu0 0
        %807 = vmatpush1.bf16.msra.mxu0 0
        %808 = vmatprep.subr.bf16.mxu0 0
        %809 = vmatpush1.bf16.msra.mxu0 0
        %810 = vmatprep.subr.bf16.mxu0 0
        %811 = vmatpush1.bf16.msra.mxu0 0
        %812 = vmatprep.subr.bf16.mxu0 0
        %813 = vmatpush1.bf16.msra.mxu0 0
        %814 = vmatprep.subr.bf16.mxu0 0
        %815 = vmatpush1.bf16.msra.mxu0 0
        %816 = vmatprep.subr.bf16.mxu0 0
        %817 = vmatpush1.bf16.msra.mxu0 0
        %818 = vmatprep.subr.bf16.mxu0 0
        %819 = vmatpush1.bf16.msra.mxu0 0
        %820 = vmatprep.subr.bf16.mxu0 0
        %821 = vmatpush1.bf16.msra.mxu0 0
        %822 = vmatprep.subr.bf16.mxu0 0
        %823 = vmatpush1.bf16.msra.mxu0 0
        %824 = vmatprep.subr.bf16.mxu0 0
        %825 = vmatpush1.bf16.msra.mxu0 0
        %826 = vmatprep.subr.bf16.mxu0 0
        %827 = vmatpush1.bf16.msra.mxu0 0
        %828 = vmatprep.subr.bf16.mxu0 0
        %829 = vmatpush1.bf16.msra.mxu0 0
        %830 = vmatprep.subr.bf16.mxu0 0
        %831 = vmatpush1.bf16.msra.mxu0 0
        %832 = vmatprep.subr.bf16.mxu0 0
        %833 = vmatpush1.bf16.msra.mxu0 0
        %834 = vmatprep.subr.bf16.mxu0 0
        %835 = vmatpush1.bf16.msra.mxu0 0
        %836 = vmatprep.mubr.bf16.mxu0 0
        %837 = vmatmul.mubr.bf16.gmra.mrb[0].mxu0 %v799
        %v838 = vpop.f32.mrb[0].mxu0
        %v839 = vadd.f32 0.0, %v838
        %v840 = vpop.f32.mrb[0].mxu0
        %v841 = vpop.f32.mrb[0].mxu0
        %v842 = vpop.f32.mrb[0].mxu0
        %843 = vdwg.mxu0
        %845 = vrot.lane.b32.xlu0 %v839, 24
        %v846 = vpop.permute.xlu0 %845
        %vm848 = vcmask 261312
        %849 = vst.msk [vmem:[#allocation2] sm:$0xff] %vm848, %v846
        %v850 = vld [vmem:[#allocation2] sm:$0xff]
        %v851 = vpack.c.bf16 %v850, %v850
        %vm852 = vcmask 257024
        %853 = vst.msk [vmem:[%s340] sm:$0xf] %vm852, %v851
        %s854 = sand.u32 %s159, 1
        %s855 = scalar_lea.sflag [#allocation5], %s854
        %s856 = sand.u32 %s159, 1
        %s857 = smul.addr %s856, 4
        %s858 = scalar_lea.vmem [#allocation11], %s857
        // Predicated region
        $region53: #{_lambda_.18} parent=35 // pred_check
          %p859 = pneg %p169
        $region54: #{_lambda_.18} parent=35 // pred_check_branch
          %861 = sbr.rel (%p859) target = $region56
        $region55: #{_lambda_.18} parent=35 // pred_region
          %s863 = ssub.s32 64, 64
          %864 = vsyncadd %s855, %s863
          %s865 = sadd.s32 %s32, %s31
          %s866 = smul.addr %s865, 64
          %s867 = scalar_lea.hbm %s4, %s866
          %s869 = sshll.u32 %s858, 4
          %s870 = int_to_ptr.vmem [resolvable:$true] %s869
          %872 = dma.vmem_to_hbm [thread:$0]  %s870, 64, %s867, %s855
        $region56: #{_lambda_.18} parent=35 // pred_fallthru
          _
      $region36: #{_lambda_.18} parent=5 // pred_fallthru
        _
      %p873 = scmp.le.s32.totalorder 2, %s22
      // Predicated region
      $region57: #{_lambda_.18} parent=5 // pred_check
        %p874 = pneg %p873
      $region58: #{_lambda_.18} parent=5 // pred_check_branch
        %876 = sbr.rel (%p874) target = $region60
      $region59: #{_lambda_.18} parent=5 // pred_region
        %s877 = ssub.s32 %s22, 2
        // Predicated region
        $region61: #{_lambda_.18} parent=59 // pred_check
          %p878 = pneg %p175
        $region62: #{_lambda_.18} parent=59 // pred_check_branch
          %880 = sbr.rel (%p878) target = $region64
        $region63: #{_lambda_.18} parent=59 // pred_region
          %s881 = sand.u32 %s160, 1
          %s882 = scalar_lea.sflag [#allocation5], %s881
          %s883 = sand.u32 %s160, 1
          %s884 = smul.addr %s883, 4
          %s885 = scalar_lea.vmem [#allocation11], %s884
          %886 = dma.done %s882, 64
        $region64: #{_lambda_.18} parent=59 // pred_fallthru
          _
      $region60: #{_lambda_.18} parent=5 // pred_fallthru
        _
    $region6: #{_lambda_.18} parent=1 // loop_footer
      %s26 = sadd.s32 1, %s22
    $region7: #{_lambda_.18} parent=1 // loop_footer_branch
      %21 = sbr.rel target = $region3
    $region8: #{_lambda_.18} parent=1 // loop_exit
      _
    %887 = vsyncpa [#allocation4], 1
    %s888 = scalar_lea.sflag [#allocation4], 1
    %889 = vsyncpa %s888, 1
    %890 = vsyncpa [#allocation7], 1
    %s891 = scalar_lea.sflag [#allocation7], 1
    %892 = vsyncpa %s891, 1
    %893 = vsyncpa [#allocation10], 1
    %s894 = scalar_lea.sflag [#allocation10], 1
    %895 = vsyncpa %s894, 1
    %896 = vsyncpa [#allocation5], 1
    %s897 = scalar_lea.sflag [#allocation5], 1
    %898 = vsyncpa %s897, 1

// kernel: _lambda_.21
$region0: #{_lambda_.21}
  #allocation0 [shape = 'u32[]', space=smem, size = 0x4, offset = 0x4, fixed_abs, tag = 'smem constant byte address 0x4 - core index']
  #allocation1 [shape = 'u32[144,128]{1,0:T(1,128)}', space=vmem, size = 0x12000, scoped, tag = 'internal scratch']
  %s0 = inlined_call_operand.hbm [shape: bf16[20,32], index: 0, kind: input, shape index: {}]
  %s1 = inlined_call_operand.hbm [shape: bf16[32,64], index: 1, kind: input, shape index: {}]
  %s2 = inlined_call_operand.hbm [shape: f32[1,64], index: 2, kind: input, shape index: {}]
  %s3 = inlined_call_operand.hbm [shape: bf16[20,32], index: 3, kind: output, shape index: {0}]
  %s4 = inlined_call_operand.hbm [shape: bf16[20,32], index: 4, kind: output, shape index: {1}]
  %5 = xla_tuple %s3, %s4
  %s6 = sld [smem:[#allocation0]]
  $region42: #{_lambda_.21} parent=0
    _
  %s8 = ssub.s32 1, %s6
  %s9 = scalar_select 0, %s8, %s6
  $region1: #{_lambda_.21} parent=0
    #allocation2 [shape = 'u8[6144]{0}', space=vmem, size = 0x1800, scoped, tag = 'input window, operand 0, single buffered']
    #allocation3 [shape = 's32[1]{0}', space=sflag, size = 0x4, scoped, tag = 'scoped memory for _lambda_.21']
    #allocation4 [shape = 's32[1]{0}', space=sflag, size = 0x4, scoped, tag = 'scoped memory for _lambda_.21']
    #allocation5 [shape = 'u8[8192]{0}', space=vmem, size = 0x2000, scoped, tag = 'input window, operand 1, single buffered']
    #allocation6 [shape = 's32[1]{0}', space=sflag, size = 0x4, scoped, tag = 'scoped memory for _lambda_.21']
    #allocation7 [shape = 'u8[512]{0}', space=vmem, size = 0x400, scoped, tag = 'input window, operand 2, single buffered']
    #allocation8 [shape = 'u8[6144]{0}', space=vmem, size = 0x1800, scoped, tag = 'output window, operand 0, single buffered']
    #allocation9 [shape = 'u8[6144]{0}', space=vmem, size = 0x1800, scoped, tag = 'output window, operand 1, single buffered']
    #allocation10 [shape = 's32[1]{0}', space=sflag, size = 0x4, scoped, tag = 'scoped memory for _lambda_.21']
    %10 = vsyncpa [#allocation3], 0
    %11 = vsyncpa [#allocation6], 0
    %12 = vsyncpa [#allocation4], 0
    %13 = vsyncpa [#allocation10], 0
    // Predicated region
    $region2: #{_lambda_.21} parent=1 // pred_check
      _
    $region3: #{_lambda_.21} parent=1 // pred_check_branch
      %15 = sbr.rel (0) target = $region5
    $region4: #{_lambda_.21} parent=1 // pred_region
      %s17 = ssub.s32 192, 192
      %18 = vsyncadd [#allocation3], %s17
      %s19 = sshll.u32 [#allocation2], 4
      %s20 = int_to_ptr.vmem [resolvable:$true] %s19
      %25 = dma.hbm_to_vmem [thread:$0]  %s0, 192, %s20, [#allocation3], 64, 64, 4
    $region5: #{_lambda_.21} parent=1 // pred_fallthru
      _
    // Predicated region
    $region6: #{_lambda_.21} parent=1 // pred_check
      _
    $region7: #{_lambda_.21} parent=1 // pred_check_branch
      %27 = sbr.rel (0) target = $region9
    $region8: #{_lambda_.21} parent=1 // pred_region
      %s29 = ssub.s32 256, 256
      %30 = vsyncadd [#allocation6], %s29
      %s31 = sshll.u32 [#allocation5], 4
      %s32 = int_to_ptr.vmem [resolvable:$true] %s31
      %37 = dma.hbm_to_vmem [thread:$0]  %s1, 256, %s32, [#allocation6], 64, 64, 4
    $region9: #{_lambda_.21} parent=1 // pred_fallthru
      _
    // Predicated region
    $region10: #{_lambda_.21} parent=1 // pred_check
      _
    $region11: #{_lambda_.21} parent=1 // pred_check_branch
      %39 = sbr.rel (0) target = $region13
    $region12: #{_lambda_.21} parent=1 // pred_region
      %s41 = ssub.s32 16, 16
      %42 = vsyncadd [#allocation6], %s41
      %s44 = sshll.u32 [#allocation7], 4
      %s45 = int_to_ptr.vmem [resolvable:$true] %s44
      %47 = dma.hbm_to_vmem [thread:$0]  %s2, 16, %s45, [#allocation6]
    $region13: #{_lambda_.21} parent=1 // pred_fallthru
      _
    // Predicated region
    $region14: #{_lambda_.21} parent=1 // pred_check
      _
    $region15: #{_lambda_.21} parent=1 // pred_check_branch
      %49 = sbr.rel (0) target = $region17
    $region16: #{_lambda_.21} parent=1 // pred_region
      %50 = dma.done [#allocation3], 192
    $region17: #{_lambda_.21} parent=1 // pred_fallthru
      _
    // Predicated region
    $region18: #{_lambda_.21} parent=1 // pred_check
      _
    $region19: #{_lambda_.21} parent=1 // pred_check_branch
      %52 = sbr.rel (0) target = $region21
    $region20: #{_lambda_.21} parent=1 // pred_region
      %53 = dma.done [#allocation6], 256
    $region21: #{_lambda_.21} parent=1 // pred_fallthru
      _
    // Predicated region
    $region22: #{_lambda_.21} parent=1 // pred_check
      _
    $region23: #{_lambda_.21} parent=1 // pred_check_branch
      %55 = sbr.rel (0) target = $region25
    $region24: #{_lambda_.21} parent=1 // pred_region
      %56 = dma.done [#allocation6], 16
    $region25: #{_lambda_.21} parent=1 // pred_fallthru
      _
    %v58 = vld [vmem:[#allocation2] sm:$0xf]
    %v59 = vld [vmem:[#allocation2 + $0x4] sm:$0xf]
    %v60 = vld [vmem:[#allocation2 + $0x8] sm:$0x3]
    %v61 = vld [vmem:[#allocation5] sm:$0xf]
    %v62 = vld [vmem:[#allocation5 + $0x4] sm:$0xf]
    %v63 = vld [vmem:[#allocation5 + $0x8] sm:$0xf]
    %v64 = vld [vmem:[#allocation5 + $0xc] sm:$0xf]
    %v65 = vld [vmem:[#allocation7] sm:$0x1]
    %v67 = vlaneseq
    %v68 = vshrl.u32 %v67, 7
    %v69 = vsub.s32 0, %v68
    %v70 = vrot.slane %v65, %v69
    %v75 = vunpack.c.l.b16 %v58
    %v76 = vunpack.c.l.b16 %v59
    %v77 = vunpack.c.l.b16 %v60
    %v78 = vpack.c.b16 %v76, %v75
    %v79 = vpack.c.b16 %v77, %v77
    %v84 = vunpack.c.l.b16 %v61
    %v85 = vunpack.c.l.b16 %v62
    %v86 = vunpack.c.l.b16 %v63
    %v87 = vunpack.c.l.b16 %v64
    %v88 = vpack.c.b16 %v85, %v84
    %v89 = vpack.c.b16 %v87, %v86
    %vm92 = vcmask 261120
    %v94 = vsel %vm92, %v78, 0
    %v97 = vsel %vm92, %v79, 0
    %99 = vmatprep.subr.bf16.mxu0 0
    %100 = vmatpush1.bf16.msra.mxu0 %v88
    %101 = vmatprep.subr.bf16.mxu0 0
    %102 = vmatpush1.bf16.msra.mxu0 %v89
    %103 = vmatprep.subr.bf16.mxu0 0
    %104 = vmatpush1.bf16.msra.mxu0 0
    %105 = vmatprep.subr.bf16.mxu0 0
    %106 = vmatpush1.bf16.msra.mxu0 0
    %107 = vmatprep.subr.bf16.mxu0 0
    %108 = vmatpush1.bf16.msra.mxu0 0
    %109 = vmatprep.subr.bf16.mxu0 0
    %110 = vmatpush1.bf16.msra.mxu0 0
    %111 = vmatprep.subr.bf16.mxu0 0
    %112 = vmatpush1.bf16.msra.mxu0 0
    %113 = vmatprep.subr.bf16.mxu0 0
    %114 = vmatpush1.bf16.msra.mxu0 0
    %115 = vmatprep.subr.bf16.mxu0 0
    %116 = vmatpush1.bf16.msra.mxu0 0
    %117 = vmatprep.subr.bf16.mxu0 0
    %118 = vmatpush1.bf16.msra.mxu0 0
    %119 = vmatprep.subr.bf16.mxu0 0
    %120 = vmatpush1.bf16.msra.mxu0 0
    %121 = vmatprep.subr.bf16.mxu0 0
    %122 = vmatpush1.bf16.msra.mxu0 0
    %123 = vmatprep.subr.bf16.mxu0 0
    %124 = vmatpush1.bf16.msra.mxu0 0
    %125 = vmatprep.subr.bf16.mxu0 0
    %126 = vmatpush1.bf16.msra.mxu0 0
    %127 = vmatprep.subr.bf16.mxu0 0
    %128 = vmatpush1.bf16.msra.mxu0 0
    %129 = vmatprep.subr.bf16.mxu0 0
    %130 = vmatpush1.bf16.msra.mxu0 0
    %131 = vmatprep.mubr.bf16.mxu0 0
    %132 = vmatmul.mubr.bf16.gmra.mrb[0].mxu0 %v94
    %v133 = vpop.f32.mrb[0].mxu0
    %v134 = vadd.f32 %v70, %v133
    %v135 = vpop.f32.mrb[0].mxu0
    %v136 = vpop.f32.mrb[0].mxu0
    %v137 = vadd.f32 %v70, %v136
    %v138 = vpop.f32.mrb[0].mxu0
    %139 = vmatprep.mubr.bf16.mxu0 0
    %140 = vmatmul.mubr.bf16.gmra.mrb[0].mxu0 %v97
    %v141 = vpop.f32.mrb[0].mxu0
    %v142 = vadd.f32 %v70, %v141
    %v143 = vpop.f32.mrb[0].mxu0
    %v144 = vpop.f32.mrb[0].mxu0
    %v145 = vpop.f32.mrb[0].mxu0
    %146 = vdwg.mxu0
    %v147 = vpack.c.bf16 %v137, %v134
    %v148 = vpack.c.bf16 %v142, %v142
    %v151 = vunpack.c.l.b16 %v147
    %v152 = vunpack.c.h.b16 %v147
    %v153 = vunpack.c.l.b16 %v148
    %v154 = vpack.c.b16 %v151, %v151
    %v155 = vpack.c.b16 %v152, %v152
    %v156 = vpack.c.b16 %v153, %v153
    %vm160 = vcmask 257024
    %161 = vst.msk [vmem:[#allocation8] sm:$0xf] %vm160, %v154
    %162 = vst.msk [vmem:[#allocation8 + $0x4] sm:$0xf] %vm160, %v155
    %vm163 = vcmask 254976
    %164 = vst.msk [vmem:[#allocation8 + $0x8] sm:$0x3] %vm163, %v156
    %165 = vrot.lane.b32.xlu0 %v154, 96
    %v166 = vpop.permute.xlu0 %165
    %167 = vrot.lane.b32.xlu0 %v155, 96
    %v168 = vpop.permute.xlu0 %167
    %169 = vrot.lane.b32.xlu0 %v156, 96
    %v170 = vpop.permute.xlu0 %169
    %174 = vst.msk [vmem:[#allocation9] sm:$0xf] %vm160, %v166
    %175 = vst.msk [vmem:[#allocation9 + $0x4] sm:$0xf] %vm160, %v168
    %176 = vst.msk [vmem:[#allocation9 + $0x8] sm:$0x3] %vm163, %v170
    // Predicated region
    $region26: #{_lambda_.21} parent=1 // pred_check
      _
    $region27: #{_lambda_.21} parent=1 // pred_check_branch
      %178 = sbr.rel (0) target = $region29
    $region28: #{_lambda_.21} parent=1 // pred_region
      %s180 = ssub.s32 192, 192
      %181 = vsyncadd [#allocation4], %s180
      %s182 = sshll.u32 [#allocation8], 4
      %s183 = int_to_ptr.vmem [resolvable:$true] %s182
      %188 = dma.vmem_to_hbm [thread:$0]  %s183, 192, %s3, [#allocation4], 64, 64, 4
    $region29: #{_lambda_.21} parent=1 // pred_fallthru
      _
    // Predicated region
    $region30: #{_lambda_.21} parent=1 // pred_check
      _
    $region31: #{_lambda_.21} parent=1 // pred_check_branch
      %190 = sbr.rel (0) target = $region33
    $region32: #{_lambda_.21} parent=1 // pred_region
      %s192 = ssub.s32 192, 192
      %193 = vsyncadd [#allocation10], %s192
      %s194 = sshll.u32 [#allocation9], 4
      %s195 = int_to_ptr.vmem [resolvable:$true] %s194
      %200 = dma.vmem_to_hbm [thread:$0]  %s195, 192, %s4, [#allocation10], 64, 64, 4
    $region33: #{_lambda_.21} parent=1 // pred_fallthru
      _
    // Predicated region
    $region34: #{_lambda_.21} parent=1 // pred_check
      _
    $region35: #{_lambda_.21} parent=1 // pred_check_branch
      %202 = sbr.rel (0) target = $region37
    $region36: #{_lambda_.21} parent=1 // pred_region
      %203 = dma.done [#allocation4], 192
    $region37: #{_lambda_.21} parent=1 // pred_fallthru
      _
    // Predicated region
    $region38: #{_lambda_.21} parent=1 // pred_check
      _
    $region39: #{_lambda_.21} parent=1 // pred_check_branch
      %205 = sbr.rel (0) target = $region41
    $region40: #{_lambda_.21} parent=1 // pred_region
      %206 = dma.done [#allocation10], 192
    $region41: #{_lambda_.21} parent=1 // pred_fallthru
      _
    %207 = vsyncpa [#allocation3], 1
    %208 = vsyncpa [#allocation6], 1
    %209 = vsyncpa [#allocation4], 1
    %210 = vsyncpa [#allocation10], 1

// kernel: _lambda_.24
$region0: #{_lambda_.24}
  #allocation0 [shape = 'u32[]', space=smem, size = 0x4, offset = 0x4, fixed_abs, tag = 'smem constant byte address 0x4 - core index']
  #allocation1 [shape = 'u32[144,128]{1,0:T(1,128)}', space=vmem, size = 0x12000, scoped, tag = 'internal scratch']
  %s0 = inlined_call_operand.hbm [shape: bf16[16,32], index: 0, kind: input, shape index: {}]
  %s1 = inlined_call_operand.hbm [shape: f32[1,32], index: 1, kind: input, shape index: {}]
  %s2 = inlined_call_operand.hbm [shape: f32[1,32], index: 2, kind: input, shape index: {}]
  %s3 = inlined_call_operand.hbm [shape: bf16[32,64], index: 3, kind: input, shape index: {}]
  %s4 = inlined_call_operand.hbm [shape: f32[1,64], index: 4, kind: input, shape index: {}]
  %s5 = inlined_call_operand.hbm [shape: bf16[64,32], index: 5, kind: input, shape index: {}]
  %s6 = inlined_call_operand.hbm [shape: f32[1,32], index: 6, kind: input, shape index: {}]
  %s7 = inlined_call_operand.hbm [shape: bf16[16,32], index: 7, kind: output, shape index: {}]
  %s8 = sld [smem:[#allocation0]]
  $region66: #{_lambda_.24} parent=0
    _
  %s10 = ssub.s32 1, %s8
  %s11 = scalar_select 0, %s10, %s8
  $region1: #{_lambda_.24} parent=0
    #allocation2 [shape = 'u8[4096]{0}', space=vmem, size = 0x1000, scoped, tag = 'input window, operand 0, single buffered']
    #allocation3 [shape = 's32[1]{0}', space=sflag, size = 0x4, scoped, tag = 'scoped memory for _lambda_.24']
    #allocation4 [shape = 's32[1]{0}', space=sflag, size = 0x4, scoped, tag = 'scoped memory for _lambda_.24']
    #allocation5 [shape = 'u8[512]{0}', space=vmem, size = 0x400, scoped, tag = 'input window, operand 1, single buffered']
    #allocation6 [shape = 's32[1]{0}', space=sflag, size = 0x4, scoped, tag = 'scoped memory for _lambda_.24']
    #allocation7 [shape = 'u8[512]{0}', space=vmem, size = 0x400, scoped, tag = 'input window, operand 2, single buffered']
    #allocation8 [shape = 'u8[8192]{0}', space=vmem, size = 0x2000, scoped, tag = 'input window, operand 3, single buffered']
    #allocation9 [shape = 's32[1]{0}', space=sflag, size = 0x4, scoped, tag = 'scoped memory for _lambda_.24']
    #allocation10 [shape = 'u8[512]{0}', space=vmem, size = 0x400, scoped, tag = 'input window, operand 4, single buffered']
    #allocation11 [shape = 'u8[16384]{0}', space=vmem, size = 0x4000, scoped, tag = 'input window, operand 5, single buffered']
    #allocation12 [shape = 's32[1]{0}', space=sflag, size = 0x4, scoped, tag = 'scoped memory for _lambda_.24']
    #allocation13 [shape = 'u8[512]{0}', space=vmem, size = 0x400, scoped, tag = 'input window, operand 6, single buffered']
    #allocation14 [shape = 'u8[4096]{0}', space=vmem, size = 0x1000, scoped, tag = 'output window, operand 0, single buffered']
    %12 = vsyncpa [#allocation3], 0
    %13 = vsyncpa [#allocation6], 0
    %14 = vsyncpa [#allocation9], 0
    %15 = vsyncpa [#allocation12], 0
    %16 = vsyncpa [#allocation4], 0
    // Predicated region
    $region2: #{_lambda_.24} parent=1 // pred_check
      _
    $region3: #{_lambda_.24} parent=1 // pred_check_branch
      %18 = sbr.rel (0) target = $region5
    $region4: #{_lambda_.24} parent=1 // pred_region
      %s20 = ssub.s32 128, 128
      %21 = vsyncadd [#allocation3], %s20
      %s22 = sshll.u32 [#allocation2], 4
      %s23 = int_to_ptr.vmem [resolvable:$true] %s22
      %28 = dma.hbm_to_vmem [thread:$0]  %s0, 128, %s23, [#allocation3], 64, 64, 4
    $region5: #{_lambda_.24} parent=1 // pred_fallthru
      _
    // Predicated region
    $region6: #{_lambda_.24} parent=1 // pred_check
      _
    $region7: #{_lambda_.24} parent=1 // pred_check_branch
      %30 = sbr.rel (0) target = $region9
    $region8: #{_lambda_.24} parent=1 // pred_region
      %s32 = ssub.s32 16, 16
      %33 = vsyncadd [#allocation6], %s32
      %s35 = sshll.u32 [#allocation5], 4
      %s36 = int_to_ptr.vmem [resolvable:$true] %s35
      %38 = dma.hbm_to_vmem [thread:$0]  %s1, 16, %s36, [#allocation6]
    $region9: #{_lambda_.24} parent=1 // pred_fallthru
      _
    // Predicated region
    $region10: #{_lambda_.24} parent=1 // pred_check
      _
    $region11: #{_lambda_.24} parent=1 // pred_check_branch
      %40 = sbr.rel (0) target = $region13
    $region12: #{_lambda_.24} parent=1 // pred_region
      %s42 = ssub.s32 16, 16
      %43 = vsyncadd [#allocation6], %s42
      %s45 = sshll.u32 [#allocation7], 4
      %s46 = int_to_ptr.vmem [resolvable:$true] %s45
      %48 = dma.hbm_to_vmem [thread:$0]  %s2, 16, %s46, [#allocation6]
    $region13: #{_lambda_.24} parent=1 // pred_fallthru
      _
    // Predicated region
    $region14: #{_lambda_.24} parent=1 // pred_check
      _
    $region15: #{_lambda_.24} parent=1 // pred_check_branch
      %50 = sbr.rel (0) target = $region17
    $region16: #{_lambda_.24} parent=1 // pred_region
      %s52 = ssub.s32 256, 256
      %53 = vsyncadd [#allocation9], %s52
      %s54 = sshll.u32 [#allocation8], 4
      %s55 = int_to_ptr.vmem [resolvable:$true] %s54
      %60 = dma.hbm_to_vmem [thread:$0]  %s3, 256, %s55, [#allocation9], 64, 64, 4
    $region17: #{_lambda_.24} parent=1 // pred_fallthru
      _
    // Predicated region
    $region18: #{_lambda_.24} parent=1 // pred_check
      _
    $region19: #{_lambda_.24} parent=1 // pred_check_branch
      %62 = sbr.rel (0) target = $region21
    $region20: #{_lambda_.24} parent=1 // pred_region
      %s64 = ssub.s32 16, 16
      %65 = vsyncadd [#allocation9], %s64
      %s67 = sshll.u32 [#allocation10], 4
      %s68 = int_to_ptr.vmem [resolvable:$true] %s67
      %70 = dma.hbm_to_vmem [thread:$0]  %s4, 16, %s68, [#allocation9]
    $region21: #{_lambda_.24} parent=1 // pred_fallthru
      _
    // Predicated region
    $region22: #{_lambda_.24} parent=1 // pred_check
      _
    $region23: #{_lambda_.24} parent=1 // pred_check_branch
      %72 = sbr.rel (0) target = $region25
    $region24: #{_lambda_.24} parent=1 // pred_region
      %s74 = ssub.s32 512, 512
      %75 = vsyncadd [#allocation12], %s74
      %s76 = sshll.u32 [#allocation11], 4
      %s77 = int_to_ptr.vmem [resolvable:$true] %s76
      %82 = dma.hbm_to_vmem [thread:$0]  %s5, 512, %s77, [#allocation12], 64, 64, 4
    $region25: #{_lambda_.24} parent=1 // pred_fallthru
      _
    // Predicated region
    $region26: #{_lambda_.24} parent=1 // pred_check
      _
    $region27: #{_lambda_.24} parent=1 // pred_check_branch
      %84 = sbr.rel (0) target = $region29
    $region28: #{_lambda_.24} parent=1 // pred_region
      %s86 = ssub.s32 16, 16
      %87 = vsyncadd [#allocation12], %s86
      %s89 = sshll.u32 [#allocation13], 4
      %s90 = int_to_ptr.vmem [resolvable:$true] %s89
      %92 = dma.hbm_to_vmem [thread:$0]  %s6, 16, %s90, [#allocation12]
    $region29: #{_lambda_.24} parent=1 // pred_fallthru
      _
    // Predicated region
    $region30: #{_lambda_.24} parent=1 // pred_check
      _
    $region31: #{_lambda_.24} parent=1 // pred_check_branch
      %94 = sbr.rel (0) target = $region33
    $region32: #{_lambda_.24} parent=1 // pred_region
      %95 = dma.done [#allocation3], 128
    $region33: #{_lambda_.24} parent=1 // pred_fallthru
      _
    // Predicated region
    $region34: #{_lambda_.24} parent=1 // pred_check
      _
    $region35: #{_lambda_.24} parent=1 // pred_check_branch
      %97 = sbr.rel (0) target = $region37
    $region36: #{_lambda_.24} parent=1 // pred_region
      %98 = dma.done [#allocation6], 16
    $region37: #{_lambda_.24} parent=1 // pred_fallthru
      _
    // Predicated region
    $region38: #{_lambda_.24} parent=1 // pred_check
      _
    $region39: #{_lambda_.24} parent=1 // pred_check_branch
      %100 = sbr.rel (0) target = $region41
    $region40: #{_lambda_.24} parent=1 // pred_region
      %101 = dma.done [#allocation6], 16
    $region41: #{_lambda_.24} parent=1 // pred_fallthru
      _
    // Predicated region
    $region42: #{_lambda_.24} parent=1 // pred_check
      _
    $region43: #{_lambda_.24} parent=1 // pred_check_branch
      %103 = sbr.rel (0) target = $region45
    $region44: #{_lambda_.24} parent=1 // pred_region
      %104 = dma.done [#allocation9], 256
    $region45: #{_lambda_.24} parent=1 // pred_fallthru
      _
    // Predicated region
    $region46: #{_lambda_.24} parent=1 // pred_check
      _
    $region47: #{_lambda_.24} parent=1 // pred_check_branch
      %106 = sbr.rel (0) target = $region49
    $region48: #{_lambda_.24} parent=1 // pred_region
      %107 = dma.done [#allocation9], 16
    $region49: #{_lambda_.24} parent=1 // pred_fallthru
      _
    // Predicated region
    $region50: #{_lambda_.24} parent=1 // pred_check
      _
    $region51: #{_lambda_.24} parent=1 // pred_check_branch
      %109 = sbr.rel (0) target = $region53
    $region52: #{_lambda_.24} parent=1 // pred_region
      %110 = dma.done [#allocation12], 512
    $region53: #{_lambda_.24} parent=1 // pred_fallthru
      _
    // Predicated region
    $region54: #{_lambda_.24} parent=1 // pred_check
      _
    $region55: #{_lambda_.24} parent=1 // pred_check_branch
      %112 = sbr.rel (0) target = $region57
    $region56: #{_lambda_.24} parent=1 // pred_region
      %113 = dma.done [#allocation12], 16
    $region57: #{_lambda_.24} parent=1 // pred_fallthru
      _
    %v115 = vld [vmem:[#allocation2] sm:$0xf]
    %v116 = vld [vmem:[#allocation2 + $0x4] sm:$0xf]
    %v117 = vunpack.c.l.bf16 %v115
    %v118 = vunpack.c.l.bf16 %v116
    %vm119 = vcmask 261120
    %v120 = vsel %vm119, %v117, 0.0
    %121 = vadd.xlane.f32.xlu0 %v120
    %v122 = vpop.xlane.xlu0 %121
    %v123 = vsel %vm119, %v118, 0.0
    %124 = vadd.xlane.f32.xlu0 %v123
    %v125 = vpop.xlane.xlu0 %124
    %v126 = vrcp.pop 32.0
    %v127 = vmul.f32 %v122, %v126
    %v128 = vmul.f32 %v125, %v126
    %v129 = vsub.f32 %v117, %v127
    %v130 = vsub.f32 %v118, %v128
    %v131 = vmul.f32 %v129, %v129
    %v132 = vmul.f32 %v130, %v130
    %v133 = vsel %vm119, %v131, 0.0
    %134 = vadd.xlane.f32.xlu0 %v133
    %v135 = vpop.xlane.xlu0 %134
    %v136 = vsel %vm119, %v132, 0.0
    %137 = vadd.xlane.f32.xlu0 %v136
    %v138 = vpop.xlane.xlu0 %137
    %v139 = vmul.f32 %v135, %v126
    %v140 = vmul.f32 %v138, %v126
    %v141 = vadd.f32 %v139, 1e-05
    %v142 = vadd.f32 %v140, 1e-05
    %v143 = vrsqrt.pop %v141
    %v144 = vrsqrt.pop %v142
    %v145 = vmul.f32 %v129, %v143
    %v146 = vmul.f32 %v130, %v144
    %v147 = vld [vmem:[#allocation5] sm:$0x1]
    %v149 = vlaneseq
    %v150 = vshrl.u32 %v149, 7
    %v151 = vsub.s32 0, %v150
    %v152 = vrot.slane %v147, %v151
    %v154 = vmul.f32 %v145, %v152
    %v155 = vmul.f32 %v146, %v152
    %v156 = vld [vmem:[#allocation7] sm:$0x1]
    %v158 = vlaneseq
    %v159 = vshrl.u32 %v158, 7
    %v160 = vsub.s32 0, %v159
    %v161 = vrot.slane %v156, %v160
    %v163 = vadd.f32 %v154, %v161
    %v164 = vadd.f32 %v155, %v161
    %v165 = vpack.c.bf16 %v164, %v163
    %v166 = vld [vmem:[#allocation8] sm:$0xf]
    %v167 = vld [vmem:[#allocation8 + $0x4] sm:$0xf]
    %v168 = vld [vmem:[#allocation8 + $0x8] sm:$0xf]
    %v169 = vld [vmem:[#allocation8 + $0xc] sm:$0xf]
    %v170 = vld [vmem:[#allocation10] sm:$0x1]
    %v172 = vlaneseq
    %v173 = vshrl.u32 %v172, 7
    %v174 = vsub.s32 0, %v173
    %v175 = vrot.slane %v170, %v174
    %v181 = vunpack.c.l.b16 %v166
    %v182 = vunpack.c.l.b16 %v167
    %v183 = vunpack.c.l.b16 %v168
    %v184 = vunpack.c.l.b16 %v169
    %v185 = vpack.c.b16 %v182, %v181
    %v186 = vpack.c.b16 %v184, %v183
    %v190 = vsel %vm119, %v165, 0
    %192 = vmatprep.subr.bf16.mxu0 0
    %193 = vmatpush1.bf16.msra.mxu0 %v185
    %194 = vmatprep.subr.bf16.mxu0 0
    %195 = vmatpush1.bf16.msra.mxu0 %v186
    %196 = vmatprep.subr.bf16.mxu0 0
    %197 = vmatpush1.bf16.msra.mxu0 0
    %198 = vmatprep.subr.bf16.mxu0 0
    %199 = vmatpush1.bf16.msra.mxu0 0
    %200 = vmatprep.subr.bf16.mxu0 0
    %201 = vmatpush1.bf16.msra.mxu0 0
    %202 = vmatprep.subr.bf16.mxu0 0
    %203 = vmatpush1.bf16.msra.mxu0 0
    %204 = vmatprep.subr.bf16.mxu0 0
    %205 = vmatpush1.bf16.msra.mxu0 0
    %206 = vmatprep.subr.bf16.mxu0 0
    %207 = vmatpush1.bf16.msra.mxu0 0
    %208 = vmatprep.subr.bf16.mxu0 0
    %209 = vmatpush1.bf16.msra.mxu0 0
    %210 = vmatprep.subr.bf16.mxu0 0
    %211 = vmatpush1.bf16.msra.mxu0 0
    %212 = vmatprep.subr.bf16.mxu0 0
    %213 = vmatpush1.bf16.msra.mxu0 0
    %214 = vmatprep.subr.bf16.mxu0 0
    %215 = vmatpush1.bf16.msra.mxu0 0
    %216 = vmatprep.subr.bf16.mxu0 0
    %217 = vmatpush1.bf16.msra.mxu0 0
    %218 = vmatprep.subr.bf16.mxu0 0
    %219 = vmatpush1.bf16.msra.mxu0 0
    %220 = vmatprep.subr.bf16.mxu0 0
    %221 = vmatpush1.bf16.msra.mxu0 0
    %222 = vmatprep.subr.bf16.mxu0 0
    %223 = vmatpush1.bf16.msra.mxu0 0
    %224 = vmatprep.mubr.bf16.mxu0 0
    %225 = vmatmul.mubr.bf16.gmra.mrb[0].mxu0 %v190
    %v226 = vpop.f32.mrb[0].mxu0
    %v227 = vadd.f32 %v175, %v226
    %v228 = vpop.f32.mrb[0].mxu0
    %v229 = vpop.f32.mrb[0].mxu0
    %v230 = vadd.f32 %v175, %v229
    %v231 = vpop.f32.mrb[0].mxu0
    %232 = vdwg.mxu0
    %v233 = vmax.f32 %v227, 0.0
    %v234 = vmax.f32 %v230, 0.0
    %v235 = vpack.c.bf16 %v234, %v233
    %v236 = vld [vmem:[#allocation11] sm:$0xf]
    %v237 = vld [vmem:[#allocation11 + $0x4] sm:$0xf]
    %v238 = vld [vmem:[#allocation11 + $0x8] sm:$0xf]
    %v239 = vld [vmem:[#allocation11 + $0xc] sm:$0xf]
    %v240 = vld [vmem:[#allocation11 + $0x10] sm:$0xf]
    %v241 = vld [vmem:[#allocation11 + $0x14] sm:$0xf]
    %v242 = vld [vmem:[#allocation11 + $0x18] sm:$0xf]
    %v243 = vld [vmem:[#allocation11 + $0x1c] sm:$0xf]
    %v244 = vld [vmem:[#allocation13] sm:$0x1]
    %v246 = vlaneseq
    %v247 = vshrl.u32 %v246, 7
    %v248 = vsub.s32 0, %v247
    %v249 = vrot.slane %v244, %v248
    %v259 = vunpack.c.l.b16 %v236
    %v260 = vunpack.c.l.b16 %v237
    %v261 = vunpack.c.l.b16 %v238
    %v262 = vunpack.c.l.b16 %v239
    %v263 = vunpack.c.l.b16 %v240
    %v264 = vunpack.c.l.b16 %v241
    %v265 = vunpack.c.l.b16 %v242
    %v266 = vunpack.c.l.b16 %v243
    %v267 = vpack.c.b16 %v260, %v259
    %v268 = vpack.c.b16 %v262, %v261
    %v269 = vpack.c.b16 %v264, %v263
    %v270 = vpack.c.b16 %v266, %v265
    %vm275 = vcmask 523264
    %v277 = vsel %vm275, %v235, 0
    %279 = vmatprep.subr.bf16.mxu0 0
    %280 = vmatpush1.bf16.msra.mxu0 %v267
    %281 = vmatprep.subr.bf16.mxu0 0
    %282 = vmatpush1.bf16.msra.mxu0 %v268
    %283 = vmatprep.subr.bf16.mxu0 0
    %284 = vmatpush1.bf16.msra.mxu0 %v269
    %285 = vmatprep.subr.bf16.mxu0 0
    %286 = vmatpush1.bf16.msra.mxu0 %v270
    %287 = vmatprep.subr.bf16.mxu0 0
    %288 = vmatpush1.bf16.msra.mxu0 0
    %289 = vmatprep.subr.bf16.mxu0 0
    %290 = vmatpush1.bf16.msra.mxu0 0
    %291 = vmatprep.subr.bf16.mxu0 0
    %292 = vmatpush1.bf16.msra.mxu0 0
    %293 = vmatprep.subr.bf16.mxu0 0
    %294 = vmatpush1.bf16.msra.mxu0 0
    %295 = vmatprep.subr.bf16.mxu0 0
    %296 = vmatpush1.bf16.msra.mxu0 0
    %297 = vmatprep.subr.bf16.mxu0 0
    %298 = vmatpush1.bf16.msra.mxu0 0
    %299 = vmatprep.subr.bf16.mxu0 0
    %300 = vmatpush1.bf16.msra.mxu0 0
    %301 = vmatprep.subr.bf16.mxu0 0
    %302 = vmatpush1.bf16.msra.mxu0 0
    %303 = vmatprep.subr.bf16.mxu0 0
    %304 = vmatpush1.bf16.msra.mxu0 0
    %305 = vmatprep.subr.bf16.mxu0 0
    %306 = vmatpush1.bf16.msra.mxu0 0
    %307 = vmatprep.subr.bf16.mxu0 0
    %308 = vmatpush1.bf16.msra.mxu0 0
    %309 = vmatprep.subr.bf16.mxu0 0
    %310 = vmatpush1.bf16.msra.mxu0 0
    %311 = vmatprep.mubr.bf16.mxu0 0
    %312 = vmatmul.mubr.bf16.gmra.mrb[0].mxu0 %v277
    %v313 = vpop.f32.mrb[0].mxu0
    %v314 = vadd.f32 %v249, %v313
    %v315 = vpop.f32.mrb[0].mxu0
    %v316 = vpop.f32.mrb[0].mxu0
    %v317 = vadd.f32 %v249, %v316
    %v318 = vpop.f32.mrb[0].mxu0
    %319 = vdwg.mxu0
    %v320 = vadd.f32 %v117, %v314
    %v321 = vadd.f32 %v118, %v317
    %v322 = vpack.c.bf16 %v321, %v320
    %v324 = vunpack.c.l.b16 %v322
    %v325 = vunpack.c.h.b16 %v322
    %v326 = vpack.c.b16 %v324, %v324
    %v327 = vpack.c.b16 %v325, %v325
    %vm330 = vcmask 257024
    %331 = vst.msk [vmem:[#allocation14] sm:$0xf] %vm330, %v326
    %332 = vst.msk [vmem:[#allocation14 + $0x4] sm:$0xf] %vm330, %v327
    // Predicated region
    $region58: #{_lambda_.24} parent=1 // pred_check
      _
    $region59: #{_lambda_.24} parent=1 // pred_check_branch
      %334 = sbr.rel (0) target = $region61
    $region60: #{_lambda_.24} parent=1 // pred_region
      %s336 = ssub.s32 128, 128
      %337 = vsyncadd [#allocation4], %s336
      %s338 = sshll.u32 [#allocation14], 4
      %s339 = int_to_ptr.vmem [resolvable:$true] %s338
      %344 = dma.vmem_to_hbm [thread:$0]  %s339, 128, %s7, [#allocation4], 64, 64, 4
    $region61: #{_lambda_.24} parent=1 // pred_fallthru
      _
    // Predicated region
    $region62: #{_lambda_.24} parent=1 // pred_check
      _
    $region63: #{_lambda_.24} parent=1 // pred_check_branch
      %346 = sbr.rel (0) target = $region65
    $region64: #{_lambda_.24} parent=1 // pred_region
      %347 = dma.done [#allocation4], 128
    $region65: #{_lambda_.24} parent=1 // pred_fallthru
      _
    %348 = vsyncpa [#allocation3], 1
    %349 = vsyncpa [#allocation6], 1
    %350 = vsyncpa [#allocation9], 1
    %351 = vsyncpa [#allocation12], 1
    %352 = vsyncpa [#allocation4], 1

// kernel: _lambda_.22
$region0: #{_lambda_.22}
  #allocation0 [shape = 'u32[]', space=smem, size = 0x4, offset = 0x4, fixed_abs, tag = 'smem constant byte address 0x4 - core index']
  #allocation1 [shape = 'u32[144,128]{1,0:T(1,128)}', space=vmem, size = 0x12000, scoped, tag = 'internal scratch']
  #allocation2 [shape = 'f32[8,32]{1,0:T(8,128)}', space=vmem, size = 0x1000, scoped, tag = 'scratch operand']
  %s0 = inlined_call_operand.hbm [shape: f32[2,1,10], index: 0, kind: input, shape index: {}]
  %s1 = inlined_call_operand.hbm [shape: bf16[2,8,32], index: 1, kind: input, shape index: {}]
  %s2 = inlined_call_operand.hbm [shape: bf16[2,10,32], index: 2, kind: input, shape index: {}]
  %s3 = inlined_call_operand.hbm [shape: bf16[2,10,32], index: 3, kind: input, shape index: {}]
  %s4 = inlined_call_operand.hbm [shape: bf16[2,8,32], index: 4, kind: output, shape index: {}]
  %s5 = sld [smem:[#allocation0]]
  $region65: #{_lambda_.22} parent=0
    _
  %s7 = ssub.s32 1, %s5
  %s8 = scalar_select 0, %s7, %s5
  $region1: #{_lambda_.22} parent=0
    #allocation3 [shape = 'u8[1024]{0}', space=vmem, size = 0x400, scoped, tag = 'input window, operand 0']
    #allocation4 [shape = 's32[2]{0}', space=sflag, size = 0x8, scoped, tag = 'scoped memory for _lambda_.22']
    #allocation5 [shape = 's32[2]{0}', space=sflag, size = 0x8, scoped, tag = 'scoped memory for _lambda_.22']
    #allocation6 [shape = 'u8[4096]{0}', space=vmem, size = 0x1000, scoped, tag = 'input window, operand 1']
    #allocation7 [shape = 's32[2]{0}', space=sflag, size = 0x8, scoped, tag = 'scoped memory for _lambda_.22']
    #allocation8 [shape = 'u8[8192]{0}', space=vmem, size = 0x2000, scoped, tag = 'input window, operand 2']
    #allocation9 [shape = 'u8[8192]{0}', space=vmem, size = 0x2000, scoped, tag = 'input window, operand 3']
    #allocation10 [shape = 's32[2]{0}', space=sflag, size = 0x8, scoped, tag = 'scoped memory for _lambda_.22']
    #allocation11 [shape = 'u8[4096]{0}', space=vmem, size = 0x1000, scoped, tag = 'output window, operand 0']
    %9 = vsyncpa [#allocation4], 0
    %s10 = scalar_lea.sflag [#allocation4], 1
    %11 = vsyncpa %s10, 0
    %12 = vsyncpa [#allocation7], 0
    %s13 = scalar_lea.sflag [#allocation7], 1
    %14 = vsyncpa %s13, 0
    %15 = vsyncpa [#allocation10], 0
    %s16 = scalar_lea.sflag [#allocation10], 1
    %17 = vsyncpa %s16, 0
    %18 = vsyncpa [#allocation5], 0
    %s19 = scalar_lea.sflag [#allocation5], 1
    %20 = vsyncpa %s19, 0
    loop: start=0, step=1, limit=4
    $region2: #{_lambda_.22} parent=1 // loop_pre_header
      _
    $region3: #{_lambda_.22} parent=1 // loop_header
      %s22 = sphi 0, %s26
      %p23 = scmp.ge.s32.totalorder %s22, 4
      %s29 = sphi 0, %s41
      %s30 = sphi 0, %s37
      %s31 = sphi 0, %s29
      %s32 = sphi 0, %s30
      %s33 = sphi 0, %s31
      %s34 = sphi 0, %s32
      %s44 = sphi 0, %s46
      %s47 = sphi 0, %s44
      %s48 = sphi 0, %s47
      %s64 = sphi 0, %s48
      %s72 = sphi 0, %s74
      %s75 = sphi 0, %s72
      %s76 = sphi 0, %s75
      %s92 = sphi 0, %s76
      %s100 = sphi 0, %s102
      %s103 = sphi 0, %s100
      %s104 = sphi 0, %s103
      %s120 = sphi 0, %s104
      %s128 = sphi 0, %s130
      %s131 = sphi 0, %s128
      %s132 = sphi 0, %s131
      %s148 = sphi 0, %s132
      %s156 = sphi 0, %s158
      %s159 = sphi 0, %s156
      %s160 = sphi 0, %s159
      %s176 = sphi 0, %s160
    $region4: #{_lambda_.22} parent=1 // loop_header_branch
      %25 = sbr.rel (%p23) target = $region8
    $region5: #{_lambda_.22} parent=1 // loop_body
      %s27 = ssub.s32 %s22, 1
      %s28 = ssub.s32 %s22, 2
      %s35 = sadd.s32 1, %s30
      %p36 = scmp.ge.s32.totalorder %s35, 1
      %s37 = scalar_select %p36, 0, %s35
      %s38 = sadd.s32 1, %s29
      %s39 = scalar_select %p36, %s38, %s29
      %p40 = scmp.ge.s32.totalorder %s39, 2
      %s41 = scalar_select %p40, 0, %s39
      %s42 = ssub.s32 %s29, %s41
      %p43 = scmp.eq.s32.totalorder %s42, 0
      %s45 = sadd.s32 %s44, 1
      %s46 = scalar_select %p43, %s44, %s45
      %p49 = pneg %p43
      %p50 = scmp.eq.s32.totalorder %s22, 1
      %p51 = por %p49, %p50
      %p52 = scmp.ne.s32.totalorder %s44, %s47
      %p53 = scmp.eq.s32.totalorder %s22, 0
      %p54 = por %p52, %p53
      %p55 = scmp.ne.s32.totalorder %s44, %s47
      %p56 = scmp.eq.s32.totalorder %s27, 1
      %p57 = por %p55, %p56
      %p58 = scmp.ne.s32.totalorder %s47, %s48
      %p59 = scmp.eq.s32.totalorder %s27, 0
      %p60 = por %p58, %p59
      %p61 = scmp.ne.s32.totalorder %s47, %s48
      %p62 = scmp.eq.s32.totalorder %s28, 1
      %p63 = por %p61, %p62
      %p65 = scmp.ne.s32.totalorder %s48, %s64
      %p66 = scmp.eq.s32.totalorder %s28, 0
      %p67 = por %p65, %p66
      %s68 = ssub.s32 %s29, %s41
      %s69 = ssub.s32 %s30, %s37
      %s70 = sor.u32 %s68, %s69
      %p71 = scmp.eq.s32.totalorder %s70, 0
      %s73 = sadd.s32 %s72, 1
      %s74 = scalar_select %p71, %s72, %s73
      %p77 = pneg %p71
      %p78 = scmp.eq.s32.totalorder %s22, 1
      %p79 = por %p77, %p78
      %p80 = scmp.ne.s32.totalorder %s72, %s75
      %p81 = scmp.eq.s32.totalorder %s22, 0
      %p82 = por %p80, %p81
      %p83 = scmp.ne.s32.totalorder %s72, %s75
      %p84 = scmp.eq.s32.totalorder %s27, 1
      %p85 = por %p83, %p84
      %p86 = scmp.ne.s32.totalorder %s75, %s76
      %p87 = scmp.eq.s32.totalorder %s27, 0
      %p88 = por %p86, %p87
      %p89 = scmp.ne.s32.totalorder %s75, %s76
      %p90 = scmp.eq.s32.totalorder %s28, 1
      %p91 = por %p89, %p90
      %p93 = scmp.ne.s32.totalorder %s76, %s92
      %p94 = scmp.eq.s32.totalorder %s28, 0
      %p95 = por %p93, %p94
      %s96 = ssub.s32 %s29, %s41
      %s97 = ssub.s32 %s30, %s37
      %s98 = sor.u32 %s96, %s97
      %p99 = scmp.eq.s32.totalorder %s98, 0
      %s101 = sadd.s32 %s100, 1
      %s102 = scalar_select %p99, %s100, %s101
      %p105 = pneg %p99
      %p106 = scmp.eq.s32.totalorder %s22, 1
      %p107 = por %p105, %p106
      %p108 = scmp.ne.s32.totalorder %s100, %s103
      %p109 = scmp.eq.s32.totalorder %s22, 0
      %p110 = por %p108, %p109
      %p111 = scmp.ne.s32.totalorder %s100, %s103
      %p112 = scmp.eq.s32.totalorder %s27, 1
      %p113 = por %p111, %p112
      %p114 = scmp.ne.s32.totalorder %s103, %s104
      %p115 = scmp.eq.s32.totalorder %s27, 0
      %p116 = por %p114, %p115
      %p117 = scmp.ne.s32.totalorder %s103, %s104
      %p118 = scmp.eq.s32.totalorder %s28, 1
      %p119 = por %p117, %p118
      %p121 = scmp.ne.s32.totalorder %s104, %s120
      %p122 = scmp.eq.s32.totalorder %s28, 0
      %p123 = por %p121, %p122
      %s124 = ssub.s32 %s29, %s41
      %s125 = ssub.s32 %s30, %s37
      %s126 = sor.u32 %s124, %s125
      %p127 = scmp.eq.s32.totalorder %s126, 0
      %s129 = sadd.s32 %s128, 1
      %s130 = scalar_select %p127, %s128, %s129
      %p133 = pneg %p127
      %p134 = scmp.eq.s32.totalorder %s22, 1
      %p135 = por %p133, %p134
      %p136 = scmp.ne.s32.totalorder %s128, %s131
      %p137 = scmp.eq.s32.totalorder %s22, 0
      %p138 = por %p136, %p137
      %p139 = scmp.ne.s32.totalorder %s128, %s131
      %p140 = scmp.eq.s32.totalorder %s27, 1
      %p141 = por %p139, %p140
      %p142 = scmp.ne.s32.totalorder %s131, %s132
      %p143 = scmp.eq.s32.totalorder %s27, 0
      %p144 = por %p142, %p143
      %p145 = scmp.ne.s32.totalorder %s131, %s132
      %p146 = scmp.eq.s32.totalorder %s28, 1
      %p147 = por %p145, %p146
      %p149 = scmp.ne.s32.totalorder %s132, %s148
      %p150 = scmp.eq.s32.totalorder %s28, 0
      %p151 = por %p149, %p150
      %s152 = ssub.s32 %s29, %s41
      %s153 = ssub.s32 %s30, %s37
      %s154 = sor.u32 %s152, %s153
      %p155 = scmp.eq.s32.totalorder %s154, 0
      %s157 = sadd.s32 %s156, 1
      %s158 = scalar_select %p155, %s156, %s157
      %p161 = pneg %p155
      %p162 = scmp.eq.s32.totalorder %s22, 1
      %p163 = por %p161, %p162
      %p164 = scmp.ne.s32.totalorder %s156, %s159
      %p165 = scmp.eq.s32.totalorder %s22, 0
      %p166 = por %p164, %p165
      %p167 = scmp.ne.s32.totalorder %s156, %s159
      %p168 = scmp.eq.s32.totalorder %s27, 1
      %p169 = por %p167, %p168
      %p170 = scmp.ne.s32.totalorder %s159, %s160
      %p171 = scmp.eq.s32.totalorder %s27, 0
      %p172 = por %p170, %p171
      %p173 = scmp.ne.s32.totalorder %s159, %s160
      %p174 = scmp.eq.s32.totalorder %s28, 1
      %p175 = por %p173, %p174
      %p177 = scmp.ne.s32.totalorder %s160, %s176
      %p178 = scmp.eq.s32.totalorder %s28, 0
      %p179 = por %p177, %p178
      %p180 = scmp.le.s32.totalorder 1, %s22
      %p181 = scmp.lt.s32.totalorder %s22, 3
      %p182 = pnand %p180, %p181
      %p183 = pneg %p182
      // Predicated region
      $region9: #{_lambda_.22} parent=5 // pred_check
        _
      $region10: #{_lambda_.22} parent=5 // pred_check_branch
        %185 = sbr.rel (%p182) target = $region12
      $region11: #{_lambda_.22} parent=5 // pred_region
        %s186 = ssub.s32 %s22, 1
      $region12: #{_lambda_.22} parent=5 // pred_fallthru
        _
      %p187 = scmp.lt.s32.totalorder %s22, 2
      // Predicated region
      $region13: #{_lambda_.22} parent=5 // pred_check
        %p188 = pneg %p187
      $region14: #{_lambda_.22} parent=5 // pred_check_branch
        %190 = sbr.rel (%p188) target = $region16
      $region15: #{_lambda_.22} parent=5 // pred_region
        // Predicated region
        $region17: #{_lambda_.22} parent=15 // pred_check
          %p191 = pneg %p54
        $region18: #{_lambda_.22} parent=15 // pred_check_branch
          %193 = sbr.rel (%p191) target = $region20
        $region19: #{_lambda_.22} parent=15 // pred_region
          %s194 = sand.u32 %s44, 1
          %s195 = scalar_lea.sflag [#allocation4], %s194
          %s196 = sand.u32 %s44, 1
          %s197 = scalar_lea.vmem [#allocation3], %s196
          %s199 = ssub.s32 16, 16
          %200 = vsyncadd %s195, %s199
          %s201 = smul.addr %s29, 16
          %s202 = scalar_lea.hbm %s0, %s201
          %s204 = sshll.u32 %s197, 4
          %s205 = int_to_ptr.vmem [resolvable:$true] %s204
          %207 = dma.hbm_to_vmem [thread:$0]  %s202, 16, %s205, %s195
        $region20: #{_lambda_.22} parent=15 // pred_fallthru
          _
        // Predicated region
        $region21: #{_lambda_.22} parent=15 // pred_check
          %p208 = pneg %p82
        $region22: #{_lambda_.22} parent=15 // pred_check_branch
          %210 = sbr.rel (%p208) target = $region24
        $region23: #{_lambda_.22} parent=15 // pred_region
          %s211 = sand.u32 %s22, 1
          %s212 = scalar_lea.sflag [#allocation7], %s211
          %s213 = sand.u32 %s72, 1
          %s214 = smul.addr %s213, 4
          %s215 = scalar_lea.vmem [#allocation6], %s214
          %s217 = ssub.s32 64, 64
          %218 = vsyncadd %s212, %s217
          %s219 = sadd.s32 %s30, %s29
          %s220 = smul.addr %s219, 64
          %s221 = scalar_lea.hbm %s1, %s220
          %s223 = sshll.u32 %s215, 4
          %s224 = int_to_ptr.vmem [resolvable:$true] %s223
          %226 = dma.hbm_to_vmem [thread:$0]  %s221, 64, %s224, %s212
        $region24: #{_lambda_.22} parent=15 // pred_fallthru
          _
        // Predicated region
        $region25: #{_lambda_.22} parent=15 // pred_check
          %p227 = pneg %p110
        $region26: #{_lambda_.22} parent=15 // pred_check_branch
          %229 = sbr.rel (%p227) target = $region28
        $region27: #{_lambda_.22} parent=15 // pred_region
          %s230 = sand.u32 %s22, 1
          %s231 = scalar_lea.sflag [#allocation7], %s230
          %s232 = sand.u32 %s100, 1
          %s233 = smul.addr %s232, 8
          %s234 = scalar_lea.vmem [#allocation8], %s233
          %s236 = ssub.s32 128, 128
          %237 = vsyncadd %s231, %s236
          %s238 = smul.addr %s29, 2
          %s239 = sadd.s32 %s30, %s238
          %s240 = smul.addr %s239, 64
          %s241 = scalar_lea.hbm %s2, %s240
          %s242 = sshll.u32 %s234, 4
          %s243 = int_to_ptr.vmem [resolvable:$true] %s242
          %248 = dma.hbm_to_vmem [thread:$0]  %s241, 128, %s243, %s231, 64, 64, 4
        $region28: #{_lambda_.22} parent=15 // pred_fallthru
          _
        // Predicated region
        $region29: #{_lambda_.22} parent=15 // pred_check
          %p249 = pneg %p138
        $region30: #{_lambda_.22} parent=15 // pred_check_branch
          %251 = sbr.rel (%p249) target = $region32
        $region31: #{_lambda_.22} parent=15 // pred_region
          %s252 = sand.u32 %s128, 1
          %s253 = scalar_lea.sflag [#allocation10], %s252
          %s254 = sand.u32 %s128, 1
          %s255 = smul.addr %s254, 8
          %s256 = scalar_lea.vmem [#allocation9], %s255
          %s258 = ssub.s32 128, 128
          %259 = vsyncadd %s253, %s258
          %s260 = smul.addr %s29, 2
          %s261 = sadd.s32 %s30, %s260
          %s262 = smul.addr %s261, 64
          %s263 = scalar_lea.hbm %s3, %s262
          %s264 = sshll.u32 %s256, 4
          %s265 = int_to_ptr.vmem [resolvable:$true] %s264
          %270 = dma.hbm_to_vmem [thread:$0]  %s263, 128, %s265, %s253, 64, 64, 4
        $region32: #{_lambda_.22} parent=15 // pred_fallthru
          _
      $region16: #{_lambda_.22} parent=5 // pred_fallthru
        _
      %p271 = scmp.le.s32.totalorder 1, %s22
      %p272 = scmp.lt.s32.totalorder %s22, 3
      %p273 = pnand %p271, %p272
      %p274 = pneg %p273
      // Predicated region
      $region33: #{_lambda_.22} parent=5 // pred_check
        _
      $region34: #{_lambda_.22} parent=5 // pred_check_branch
        %276 = sbr.rel (%p273) target = $region36
      $region35: #{_lambda_.22} parent=5 // pred_region
        %s277 = ssub.s32 %s22, 1
        %s278 = sand.u32 %s47, 1
        %s279 = scalar_lea.sflag [#allocation4], %s278
        %s280 = sand.u32 %s47, 1
        %s281 = scalar_lea.vmem [#allocation3], %s280
        // Predicated region
        $region37: #{_lambda_.22} parent=35 // pred_check
          %p282 = pneg %p60
        $region38: #{_lambda_.22} parent=35 // pred_check_branch
          %284 = sbr.rel (%p282) target = $region40
        $region39: #{_lambda_.22} parent=35 // pred_region
          %285 = dma.done %s279, 16
        $region40: #{_lambda_.22} parent=35 // pred_fallthru
          _
        %s286 = sand.u32 %s27, 1
        %s287 = scalar_lea.sflag [#allocation7], %s286
        %s288 = sand.u32 %s75, 1
        %s289 = smul.addr %s288, 4
        %s290 = scalar_lea.vmem [#allocation6], %s289
        // Predicated region
        $region41: #{_lambda_.22} parent=35 // pred_check
          %p291 = pneg %p88
        $region42: #{_lambda_.22} parent=35 // pred_check_branch
          %293 = sbr.rel (%p291) target = $region44
        $region43: #{_lambda_.22} parent=35 // pred_region
          %294 = dma.done %s287, 64
        $region44: #{_lambda_.22} parent=35 // pred_fallthru
          _
        %s295 = sand.u32 %s27, 1
        %s296 = scalar_lea.sflag [#allocation7], %s295
        %s297 = sand.u32 %s103, 1
        %s298 = smul.addr %s297, 8
        %s299 = scalar_lea.vmem [#allocation8], %s298
        // Predicated region
        $region45: #{_lambda_.22} parent=35 // pred_check
          %p300 = pneg %p116
        $region46: #{_lambda_.22} parent=35 // pred_check_branch
          %302 = sbr.rel (%p300) target = $region48
        $region47: #{_lambda_.22} parent=35 // pred_region
          %303 = dma.done %s296, 128
        $region48: #{_lambda_.22} parent=35 // pred_fallthru
          _
        %s304 = sand.u32 %s131, 1
        %s305 = scalar_lea.sflag [#allocation10], %s304
        %s306 = sand.u32 %s131, 1
        %s307 = smul.addr %s306, 8
        %s308 = scalar_lea.vmem [#allocation9], %s307
        // Predicated region
        $region49: #{_lambda_.22} parent=35 // pred_check
          %p309 = pneg %p144
        $region50: #{_lambda_.22} parent=35 // pred_check_branch
          %311 = sbr.rel (%p309) target = $region52
        $region51: #{_lambda_.22} parent=35 // pred_region
          %312 = dma.done %s305, 128
        $region52: #{_lambda_.22} parent=35 // pred_fallthru
          _
        %s313 = sand.u32 %s47, 1
        %s314 = scalar_lea.sflag [#allocation4], %s313
        %s315 = sand.u32 %s47, 1
        %s316 = scalar_lea.vmem [#allocation3], %s315
        %p317 = pneg %p60
        %p318 = pneg %p57
        %s319 = sand.u32 %s27, 1
        %s320 = scalar_lea.sflag [#allocation7], %s319
        %s321 = sand.u32 %s75, 1
        %s322 = smul.addr %s321, 4
        %s323 = scalar_lea.vmem [#allocation6], %s322
        %p324 = pneg %p88
        %p325 = pneg %p85
        %s326 = sand.u32 %s27, 1
        %s327 = scalar_lea.sflag [#allocation7], %s326
        %s328 = sand.u32 %s103, 1
        %s329 = smul.addr %s328, 8
        %s330 = scalar_lea.vmem [#allocation8], %s329
        %p331 = pneg %p116
        %p332 = pneg %p113
        %s333 = sand.u32 %s131, 1
        %s334 = scalar_lea.sflag [#allocation10], %s333
        %s335 = sand.u32 %s131, 1
        %s336 = smul.addr %s335, 8
        %s337 = scalar_lea.vmem [#allocation9], %s336
        %p338 = pneg %p144
        %p339 = pneg %p141
        %p340 = pneg %p172
        %p341 = pneg %p169
        %s342 = sand.u32 %s159, 1
        %s343 = scalar_lea.sflag [#allocation5], %s342
        %s344 = sand.u32 %s159, 1
        %s345 = smul.addr %s344, 4
        %s346 = scalar_lea.vmem [#allocation11], %s345
        %v348 = vld [vmem:[%s281] sm:$0x1]
        %v349 = vld [vmem:[%s290] sm:$0xf]
        %v350 = vld [vmem:[%s299] sm:$0xf]
        %v351 = vld [vmem:[%s299 + $0x4] sm:$0x1]
        %v352 = vld [vmem:[%s308] sm:$0xf]
        %v353 = vld [vmem:[%s308 + $0x4] sm:$0x1]
        %v355 = vlaneseq
        %v356 = vshrl.u32 %v355, 7
        %v357 = vsub.s32 0, %v356
        %v358 = vrot.slane %v348, %v357
        %v362 = vunpack.c.l.b16 %v350
        %v363 = vunpack.c.l.b16 %v351
        %v364 = vpack.c.b16 %v363, %v362
        %vm365 = vcmask 64512
        %v367 = vsel %vm365, %v349, 0
        %v370 = vsel %vm365, %v364, 0
        %372 = vmatprep.subr.bf16.mxu0 0
        %373 = vmatpush1.bf16.xpose.msra.mxu0 %v370
        %374 = vmatprep.subr.bf16.mxu0 0
        %375 = vmatpush1.bf16.xpose.msra.mxu0 0
        %376 = vmatprep.subr.bf16.mxu0 0
        %377 = vmatpush1.bf16.xpose.msra.mxu0 0
        %378 = vmatprep.subr.bf16.mxu0 0
        %379 = vmatpush1.bf16.xpose.msra.mxu0 0
        %380 = vmatprep.subr.bf16.mxu0 0
        %381 = vmatpush1.bf16.xpose.msra.mxu0 0
        %382 = vmatprep.subr.bf16.mxu0 0
        %383 = vmatpush1.bf16.xpose.msra.mxu0 0
        %384 = vmatprep.subr.bf16.mxu0 0
        %385 = vmatpush1.bf16.xpose.msra.mxu0 0
        %386 = vmatprep.subr.bf16.mxu0 0
        %387 = vmatpush1.bf16.xpose.msra.mxu0 0
        %388 = vmatprep.subr.bf16.mxu0 0
        %389 = vmatpush1.bf16.xpose.msra.mxu0 0
        %390 = vmatprep.subr.bf16.mxu0 0
        %391 = vmatpush1.bf16.xpose.msra.mxu0 0
        %392 = vmatprep.subr.bf16.mxu0 0
        %393 = vmatpush1.bf16.xpose.msra.mxu0 0
        %394 = vmatprep.subr.bf16.mxu0 0
        %395 = vmatpush1.bf16.xpose.msra.mxu0 0
        %396 = vmatprep.subr.bf16.mxu0 0
        %397 = vmatpush1.bf16.xpose.msra.mxu0 0
        %398 = vmatprep.subr.bf16.mxu0 0
        %399 = vmatpush1.bf16.xpose.msra.mxu0 0
        %400 = vmatprep.subr.bf16.mxu0 0
        %401 = vmatpush1.bf16.xpose.msra.mxu0 0
        %402 = vmatprep.subr.bf16.mxu0 0
        %403 = vmatpush1.bf16.xpose.msra.mxu0 0
        %404 = vmatprep.mubr.bf16.mxu0 0
        %405 = vmatmul.mubr.bf16.gmra.mrb[0].mxu0 %v367
        %v406 = vpop.f32.mrb[0].mxu0
        %v407 = vadd.f32 %v358, %v406
        %v408 = vpop.f32.mrb[0].mxu0
        %v409 = vpop.f32.mrb[0].mxu0
        %v410 = vpop.f32.mrb[0].mxu0
        %411 = vdwg.mxu0
        %vm412 = vcmask 80896
        %v413 = vsel %vm412, %v407, -inf
        %414 = vmax.xlane.f32.xlu0 %v413
        %v415 = vpop.xlane.xlu0 %414
        %v416 = vsub.f32 %v407, %v415
        %v417 = vmul.f32 %v416, 1.442695
        %v418 = vpow.pop %v417
        %v419 = vsel %vm412, %v418, 0.0
        %420 = vadd.xlane.f32.xlu0 %v419
        %v421 = vpop.xlane.xlu0 %420
        %v422 = vrcp.pop %v421
        %v423 = vmul.f32 %v418, %v422
        %v424 = vpack.c.bf16 %v423, %v423
        %v427 = vunpack.c.l.b16 %v352
        %v428 = vunpack.c.l.b16 %v353
        %v429 = vpack.c.b16 %v428, %v427
        %v431 = vsel %vm412, %v424, 0
        %vm433 = vcmask 1044480
        %v435 = vsel %vm433, %v429, 0
        %437 = vmatprep.subr.bf16.mxu0 0
        %438 = vmatpush1.bf16.msra.mxu0 %v435
        %439 = vmatprep.subr.bf16.mxu0 0
        %440 = vmatpush1.bf16.msra.mxu0 0
        %441 = vmatprep.subr.bf16.mxu0 0
        %442 = vmatpush1.bf16.msra.mxu0 0
        %443 = vmatprep.subr.bf16.mxu0 0
        %444 = vmatpush1.bf16.msra.mxu0 0
        %445 = vmatprep.subr.bf16.mxu0 0
        %446 = vmatpush1.bf16.msra.mxu0 0
        %447 = vmatprep.subr.bf16.mxu0 0
        %448 = vmatpush1.bf16.msra.mxu0 0
        %449 = vmatprep.subr.bf16.mxu0 0
        %450 = vmatpush1.bf16.msra.mxu0 0
        %451 = vmatprep.subr.bf16.mxu0 0
        %452 = vmatpush1.bf16.msra.mxu0 0
        %453 = vmatprep.subr.bf16.mxu0 0
        %454 = vmatpush1.bf16.msra.mxu0 0
        %455 = vmatprep.subr.bf16.mxu0 0
        %456 = vmatpush1.bf16.msra.mxu0 0
        %457 = vmatprep.subr.bf16.mxu0 0
        %458 = vmatpush1.bf16.msra.mxu0 0
        %459 = vmatprep.subr.bf16.mxu0 0
        %460 = vmatpush1.bf16.msra.mxu0 0
        %461 = vmatprep.subr.bf16.mxu0 0
        %462 = vmatpush1.bf16.msra.mxu0 0
        %463 = vmatprep.subr.bf16.mxu0 0
        %464 = vmatpush1.bf16.msra.mxu0 0
        %465 = vmatprep.subr.bf16.mxu0 0
        %466 = vmatpush1.bf16.msra.mxu0 0
        %467 = vmatprep.subr.bf16.mxu0 0
        %468 = vmatpush1.bf16.msra.mxu0 0
        %469 = vmatprep.mubr.bf16.mxu0 0
        %470 = vmatmul.mubr.bf16.gmra.mrb[0].mxu0 %v431
        %v471 = vpop.f32.mrb[0].mxu0
        %v472 = vadd.f32 0.0, %v471
        %v473 = vpop.f32.mrb[0].mxu0
        %v474 = vpop.f32.mrb[0].mxu0
        %v475 = vpop.f32.mrb[0].mxu0
        %476 = vdwg.mxu0
        %477 = vst.msk [vmem:[#allocation2] sm:$0xff] %vm365, %v472
        %v478 = vld [vmem:[%s290] sm:$0xf]
        %v479 = vld [vmem:[%s299] sm:$0xf]
        %v480 = vld [vmem:[%s299 + $0x4] sm:$0x1]
        %v481 = vld [vmem:[%s308] sm:$0xf]
        %v482 = vld [vmem:[%s308 + $0x4] sm:$0x1]
        %v484 = vunpack.c.l.b16 %v478
        %v485 = vpack.c.b16 %v484, %v484
        %486 = vrot.lane.b32.xlu0 %v485, 120
        %v487 = vpop.permute.xlu0 %486
        %v490 = vunpack.c.l.b16 %v479
        %v491 = vunpack.c.l.b16 %v480
        %v492 = vpack.c.b16 %v491, %v490
        %493 = vrot.lane.b32.xlu0 %v492, 120
        %v494 = vpop.permute.xlu0 %493
        %v496 = vsel %vm365, %v487, 0
        %v499 = vsel %vm365, %v494, 0
        %501 = vmatprep.subr.bf16.mxu0 0
        %502 = vmatpush1.bf16.xpose.msra.mxu0 %v499
        %503 = vmatprep.subr.bf16.mxu0 0
        %504 = vmatpush1.bf16.xpose.msra.mxu0 0
        %505 = vmatprep.subr.bf16.mxu0 0
        %506 = vmatpush1.bf16.xpose.msra.mxu0 0
        %507 = vmatprep.subr.bf16.mxu0 0
        %508 = vmatpush1.bf16.xpose.msra.mxu0 0
        %509 = vmatprep.subr.bf16.mxu0 0
        %510 = vmatpush1.bf16.xpose.msra.mxu0 0
        %511 = vmatprep.subr.bf16.mxu0 0
        %512 = vmatpush1.bf16.xpose.msra.mxu0 0
        %513 = vmatprep.subr.bf16.mxu0 0
        %514 = vmatpush1.bf16.xpose.msra.mxu0 0
        %515 = vmatprep.subr.bf16.mxu0 0
        %516 = vmatpush1.bf16.xpose.msra.mxu0 0
        %517 = vmatprep.subr.bf16.mxu0 0
        %518 = vmatpush1.bf16.xpose.msra.mxu0 0
        %519 = vmatprep.subr.bf16.mxu0 0
        %520 = vmatpush1.bf16.xpose.msra.mxu0 0
        %521 = vmatprep.subr.bf16.mxu0 0
        %522 = vmatpush1.bf16.xpose.msra.mxu0 0
        %523 = vmatprep.subr.bf16.mxu0 0
        %524 = vmatpush1.bf16.xpose.msra.mxu0 0
        %525 = vmatprep.subr.bf16.mxu0 0
        %526 = vmatpush1.bf16.xpose.msra.mxu0 0
        %527 = vmatprep.subr.bf16.mxu0 0
        %528 = vmatpush1.bf16.xpose.msra.mxu0 0
        %529 = vmatprep.subr.bf16.mxu0 0
        %530 = vmatpush1.bf16.xpose.msra.mxu0 0
        %531 = vmatprep.subr.bf16.mxu0 0
        %532 = vmatpush1.bf16.xpose.msra.mxu0 0
        %533 = vmatprep.mubr.bf16.mxu0 0
        %534 = vmatmul.mubr.bf16.gmra.mrb[0].mxu0 %v496
        %v535 = vpop.f32.mrb[0].mxu0
        %v536 = vadd.f32 %v358, %v535
        %v537 = vpop.f32.mrb[0].mxu0
        %v538 = vpop.f32.mrb[0].mxu0
        %v539 = vpop.f32.mrb[0].mxu0
        %540 = vdwg.mxu0
        %v541 = vsel %vm412, %v536, -inf
        %542 = vmax.xlane.f32.xlu0 %v541
        %v543 = vpop.xlane.xlu0 %542
        %v544 = vsub.f32 %v536, %v543
        %v545 = vmul.f32 %v544, 1.442695
        %v546 = vpow.pop %v545
        %v547 = vsel %vm412, %v546, 0.0
        %548 = vadd.xlane.f32.xlu0 %v547
        %v549 = vpop.xlane.xlu0 %548
        %v550 = vrcp.pop %v549
        %v551 = vmul.f32 %v546, %v550
        %v552 = vpack.c.bf16 %v551, %v551
        %v555 = vunpack.c.l.b16 %v481
        %v556 = vunpack.c.l.b16 %v482
        %v557 = vpack.c.b16 %v556, %v555
        %558 = vrot.lane.b32.xlu0 %v557, 120
        %v559 = vpop.permute.xlu0 %558
        %v561 = vsel %vm412, %v552, 0
        %v564 = vsel %vm433, %v559, 0
        %566 = vmatprep.subr.bf16.mxu0 0
        %567 = vmatpush1.bf16.msra.mxu0 %v564
        %568 = vmatprep.subr.bf16.mxu0 0
        %569 = vmatpush1.bf16.msra.mxu0 0
        %570 = vmatprep.subr.bf16.mxu0 0
        %571 = vmatpush1.bf16.msra.mxu0 0
        %572 = vmatprep.subr.bf16.mxu0 0
        %573 = vmatpush1.bf16.msra.mxu0 0
        %574 = vmatprep.subr.bf16.mxu0 0
        %575 = vmatpush1.bf16.msra.mxu0 0
        %576 = vmatprep.subr.bf16.mxu0 0
        %577 = vmatpush1.bf16.msra.mxu0 0
        %578 = vmatprep.subr.bf16.mxu0 0
        %579 = vmatpush1.bf16.msra.mxu0 0
        %580 = vmatprep.subr.bf16.mxu0 0
        %581 = vmatpush1.bf16.msra.mxu0 0
        %582 = vmatprep.subr.bf16.mxu0 0
        %583 = vmatpush1.bf16.msra.mxu0 0
        %584 = vmatprep.subr.bf16.mxu0 0
        %585 = vmatpush1.bf16.msra.mxu0 0
        %586 = vmatprep.subr.bf16.mxu0 0
        %587 = vmatpush1.bf16.msra.mxu0 0
        %588 = vmatprep.subr.bf16.mxu0 0
        %589 = vmatpush1.bf16.msra.mxu0 0
        %590 = vmatprep.subr.bf16.mxu0 0
        %591 = vmatpush1.bf16.msra.mxu0 0
        %592 = vmatprep.subr.bf16.mxu0 0
        %593 = vmatpush1.bf16.msra.mxu0 0
        %594 = vmatprep.subr.bf16.mxu0 0
        %595 = vmatpush1.bf16.msra.mxu0 0
        %596 = vmatprep.subr.bf16.mxu0 0
        %597 = vmatpush1.bf16.msra.mxu0 0
        %598 = vmatprep.mubr.bf16.mxu0 0
        %599 = vmatmul.mubr.bf16.gmra.mrb[0].mxu0 %v561
        %v600 = vpop.f32.mrb[0].mxu0
        %v601 = vadd.f32 0.0, %v600
        %v602 = vpop.f32.mrb[0].mxu0
        %v603 = vpop.f32.mrb[0].mxu0
        %v604 = vpop.f32.mrb[0].mxu0
        %605 = vdwg.mxu0
        %607 = vrot.lane.b32.xlu0 %v601, 8
        %v608 = vpop.permute.xlu0 %607
        %vm610 = vcmask 130112
        %611 = vst.msk [vmem:[#allocation2] sm:$0xff] %vm610, %v608
        %v612 = vld [vmem:[%s290] sm:$0xf]
        %v613 = vld [vmem:[%s299] sm:$0xf]
        %v614 = vld [vmem:[%s299 + $0x4] sm:$0x1]
        %v615 = vld [vmem:[%s308] sm:$0xf]
        %v616 = vld [vmem:[%s308 + $0x4] sm:$0x1]
        %v618 = vunpack.c.l.b16 %v612
        %v619 = vpack.c.b16 %v618, %v618
        %620 = vrot.lane.b32.xlu0 %v619, 112
        %v621 = vpop.permute.xlu0 %620
        %v624 = vunpack.c.l.b16 %v613
        %v625 = vunpack.c.l.b16 %v614
        %v626 = vpack.c.b16 %v625, %v624
        %627 = vrot.lane.b32.xlu0 %v626, 112
        %v628 = vpop.permute.xlu0 %627
        %v630 = vsel %vm365, %v621, 0
        %v633 = vsel %vm365, %v628, 0
        %635 = vmatprep.subr.bf16.mxu0 0
        %636 = vmatpush1.bf16.xpose.msra.mxu0 %v633
        %637 = vmatprep.subr.bf16.mxu0 0
        %638 = vmatpush1.bf16.xpose.msra.mxu0 0
        %639 = vmatprep.subr.bf16.mxu0 0
        %640 = vmatpush1.bf16.xpose.msra.mxu0 0
        %641 = vmatprep.subr.bf16.mxu0 0
        %642 = vmatpush1.bf16.xpose.msra.mxu0 0
        %643 = vmatprep.subr.bf16.mxu0 0
        %644 = vmatpush1.bf16.xpose.msra.mxu0 0
        %645 = vmatprep.subr.bf16.mxu0 0
        %646 = vmatpush1.bf16.xpose.msra.mxu0 0
        %647 = vmatprep.subr.bf16.mxu0 0
        %648 = vmatpush1.bf16.xpose.msra.mxu0 0
        %649 = vmatprep.subr.bf16.mxu0 0
        %650 = vmatpush1.bf16.xpose.msra.mxu0 0
        %651 = vmatprep.subr.bf16.mxu0 0
        %652 = vmatpush1.bf16.xpose.msra.mxu0 0
        %653 = vmatprep.subr.bf16.mxu0 0
        %654 = vmatpush1.bf16.xpose.msra.mxu0 0
        %655 = vmatprep.subr.bf16.mxu0 0
        %656 = vmatpush1.bf16.xpose.msra.mxu0 0
        %657 = vmatprep.subr.bf16.mxu0 0
        %658 = vmatpush1.bf16.xpose.msra.mxu0 0
        %659 = vmatprep.subr.bf16.mxu0 0
        %660 = vmatpush1.bf16.xpose.msra.mxu0 0
        %661 = vmatprep.subr.bf16.mxu0 0
        %662 = vmatpush1.bf16.xpose.msra.mxu0 0
        %663 = vmatprep.subr.bf16.mxu0 0
        %664 = vmatpush1.bf16.xpose.msra.mxu0 0
        %665 = vmatprep.subr.bf16.mxu0 0
        %666 = vmatpush1.bf16.xpose.msra.mxu0 0
        %667 = vmatprep.mubr.bf16.mxu0 0
        %668 = vmatmul.mubr.bf16.gmra.mrb[0].mxu0 %v630
        %v669 = vpop.f32.mrb[0].mxu0
        %v670 = vadd.f32 %v358, %v669
        %v671 = vpop.f32.mrb[0].mxu0
        %v672 = vpop.f32.mrb[0].mxu0
        %v673 = vpop.f32.mrb[0].mxu0
        %674 = vdwg.mxu0
        %v675 = vsel %vm412, %v670, -inf
        %676 = vmax.xlane.f32.xlu0 %v675
        %v677 = vpop.xlane.xlu0 %676
        %v678 = vsub.f32 %v670, %v677
        %v679 = vmul.f32 %v678, 1.442695
        %v680 = vpow.pop %v679
        %v681 = vsel %vm412, %v680, 0.0
        %682 = vadd.xlane.f32.xlu0 %v681
        %v683 = vpop.xlane.xlu0 %682
        %v684 = vrcp.pop %v683
        %v685 = vmul.f32 %v680, %v684
        %v686 = vpack.c.bf16 %v685, %v685
        %v689 = vunpack.c.l.b16 %v615
        %v690 = vunpack.c.l.b16 %v616
        %v691 = vpack.c.b16 %v690, %v689
        %692 = vrot.lane.b32.xlu0 %v691, 112
        %v693 = vpop.permute.xlu0 %692
        %v695 = vsel %vm412, %v686, 0
        %v698 = vsel %vm433, %v693, 0
        %700 = vmatprep.subr.bf16.mxu0 0
        %701 = vmatpush1.bf16.msra.mxu0 %v698
        %702 = vmatprep.subr.bf16.mxu0 0
        %703 = vmatpush1.bf16.msra.mxu0 0
        %704 = vmatprep.subr.bf16.mxu0 0
        %705 = vmatpush1.bf16.msra.mxu0 0
        %706 = vmatprep.subr.bf16.mxu0 0
        %707 = vmatpush1.bf16.msra.mxu0 0
        %708 = vmatprep.subr.bf16.mxu0 0
        %709 = vmatpush1.bf16.msra.mxu0 0
        %710 = vmatprep.subr.bf16.mxu0 0
        %711 = vmatpush1.bf16.msra.mxu0 0
        %712 = vmatprep.subr.bf16.mxu0 0
        %713 = vmatpush1.bf16.msra.mxu0 0
        %714 = vmatprep.subr.bf16.mxu0 0
        %715 = vmatpush1.bf16.msra.mxu0 0
        %716 = vmatprep.subr.bf16.mxu0 0
        %717 = vmatpush1.bf16.msra.mxu0 0
        %718 = vmatprep.subr.bf16.mxu0 0
        %719 = vmatpush1.bf16.msra.mxu0 0
        %720 = vmatprep.subr.bf16.mxu0 0
        %721 = vmatpush1.bf16.msra.mxu0 0
        %722 = vmatprep.subr.bf16.mxu0 0
        %723 = vmatpush1.bf16.msra.mxu0 0
        %724 = vmatprep.subr.bf16.mxu0 0
        %725 = vmatpush1.bf16.msra.mxu0 0
        %726 = vmatprep.subr.bf16.mxu0 0
        %727 = vmatpush1.bf16.msra.mxu0 0
        %728 = vmatprep.subr.bf16.mxu0 0
        %729 = vmatpush1.bf16.msra.mxu0 0
        %730 = vmatprep.subr.bf16.mxu0 0
        %731 = vmatpush1.bf16.msra.mxu0 0
        %732 = vmatprep.mubr.bf16.mxu0 0
        %733 = vmatmul.mubr.bf16.gmra.mrb[0].mxu0 %v695
        %v734 = vpop.f32.mrb[0].mxu0
        %v735 = vadd.f32 0.0, %v734
        %v736 = vpop.f32.mrb[0].mxu0
        %v737 = vpop.f32.mrb[0].mxu0
        %v738 = vpop.f32.mrb[0].mxu0
        %739 = vdwg.mxu0
        %741 = vrot.lane.b32.xlu0 %v735, 16
        %v742 = vpop.permute.xlu0 %741
        %vm744 = vcmask 195712
        %745 = vst.msk [vmem:[#allocation2] sm:$0xff] %vm744, %v742
        %v746 = vld [vmem:[%s290] sm:$0xf]
        %v747 = vld [vmem:[%s299] sm:$0xf]
        %v748 = vld [vmem:[%s299 + $0x4] sm:$0x1]
        %v749 = vld [vmem:[%s308] sm:$0xf]
        %v750 = vld [vmem:[%s308 + $0x4] sm:$0x1]
        %v752 = vunpack.c.l.b16 %v746
        %v753 = vpack.c.b16 %v752, %v752
        %754 = vrot.lane.b32.xlu0 %v753, 104
        %v755 = vpop.permute.xlu0 %754
        %v758 = vunpack.c.l.b16 %v747
        %v759 = vunpack.c.l.b16 %v748
        %v760 = vpack.c.b16 %v759, %v758
        %761 = vrot.lane.b32.xlu0 %v760, 104
        %v762 = vpop.permute.xlu0 %761
        %v764 = vsel %vm365, %v755, 0
        %v767 = vsel %vm365, %v762, 0
        %769 = vmatprep.subr.bf16.mxu0 0
        %770 = vmatpush1.bf16.xpose.msra.mxu0 %v767
        %771 = vmatprep.subr.bf16.mxu0 0
        %772 = vmatpush1.bf16.xpose.msra.mxu0 0
        %773 = vmatprep.subr.bf16.mxu0 0
        %774 = vmatpush1.bf16.xpose.msra.mxu0 0
        %775 = vmatprep.subr.bf16.mxu0 0
        %776 = vmatpush1.bf16.xpose.msra.mxu0 0
        %777 = vmatprep.subr.bf16.mxu0 0
        %778 = vmatpush1.bf16.xpose.msra.mxu0 0
        %779 = vmatprep.subr.bf16.mxu0 0
        %780 = vmatpush1.bf16.xpose.msra.mxu0 0
        %781 = vmatprep.subr.bf16.mxu0 0
        %782 = vmatpush1.bf16.xpose.msra.mxu0 0
        %783 = vmatprep.subr.bf16.mxu0 0
        %784 = vmatpush1.bf16.xpose.msra.mxu0 0
        %785 = vmatprep.subr.bf16.mxu0 0
        %786 = vmatpush1.bf16.xpose.msra.mxu0 0
        %787 = vmatprep.subr.bf16.mxu0 0
        %788 = vmatpush1.bf16.xpose.msra.mxu0 0
        %789 = vmatprep.subr.bf16.mxu0 0
        %790 = vmatpush1.bf16.xpose.msra.mxu0 0
        %791 = vmatprep.subr.bf16.mxu0 0
        %792 = vmatpush1.bf16.xpose.msra.mxu0 0
        %793 = vmatprep.subr.bf16.mxu0 0
        %794 = vmatpush1.bf16.xpose.msra.mxu0 0
        %795 = vmatprep.subr.bf16.mxu0 0
        %796 = vmatpush1.bf16.xpose.msra.mxu0 0
        %797 = vmatprep.subr.bf16.mxu0 0
        %798 = vmatpush1.bf16.xpose.msra.mxu0 0
        %799 = vmatprep.subr.bf16.mxu0 0
        %800 = vmatpush1.bf16.xpose.msra.mxu0 0
        %801 = vmatprep.mubr.bf16.mxu0 0
        %802 = vmatmul.mubr.bf16.gmra.mrb[0].mxu0 %v764
        %v803 = vpop.f32.mrb[0].mxu0
        %v804 = vadd.f32 %v358, %v803
        %v805 = vpop.f32.mrb[0].mxu0
        %v806 = vpop.f32.mrb[0].mxu0
        %v807 = vpop.f32.mrb[0].mxu0
        %808 = vdwg.mxu0
        %v809 = vsel %vm412, %v804, -inf
        %810 = vmax.xlane.f32.xlu0 %v809
        %v811 = vpop.xlane.xlu0 %810
        %v812 = vsub.f32 %v804, %v811
        %v813 = vmul.f32 %v812, 1.442695
        %v814 = vpow.pop %v813
        %v815 = vsel %vm412, %v814, 0.0
        %816 = vadd.xlane.f32.xlu0 %v815
        %v817 = vpop.xlane.xlu0 %816
        %v818 = vrcp.pop %v817
        %v819 = vmul.f32 %v814, %v818
        %v820 = vpack.c.bf16 %v819, %v819
        %v823 = vunpack.c.l.b16 %v749
        %v824 = vunpack.c.l.b16 %v750
        %v825 = vpack.c.b16 %v824, %v823
        %826 = vrot.lane.b32.xlu0 %v825, 104
        %v827 = vpop.permute.xlu0 %826
        %v829 = vsel %vm412, %v820, 0
        %v832 = vsel %vm433, %v827, 0
        %834 = vmatprep.subr.bf16.mxu0 0
        %835 = vmatpush1.bf16.msra.mxu0 %v832
        %836 = vmatprep.subr.bf16.mxu0 0
        %837 = vmatpush1.bf16.msra.mxu0 0
        %838 = vmatprep.subr.bf16.mxu0 0
        %839 = vmatpush1.bf16.msra.mxu0 0
        %840 = vmatprep.subr.bf16.mxu0 0
        %841 = vmatpush1.bf16.msra.mxu0 0
        %842 = vmatprep.subr.bf16.mxu0 0
        %843 = vmatpush1.bf16.msra.mxu0 0
        %844 = vmatprep.subr.bf16.mxu0 0
        %845 = vmatpush1.bf16.msra.mxu0 0
        %846 = vmatprep.subr.bf16.mxu0 0
        %847 = vmatpush1.bf16.msra.mxu0 0
        %848 = vmatprep.subr.bf16.mxu0 0
        %849 = vmatpush1.bf16.msra.mxu0 0
        %850 = vmatprep.subr.bf16.mxu0 0
        %851 = vmatpush1.bf16.msra.mxu0 0
        %852 = vmatprep.subr.bf16.mxu0 0
        %853 = vmatpush1.bf16.msra.mxu0 0
        %854 = vmatprep.subr.bf16.mxu0 0
        %855 = vmatpush1.bf16.msra.mxu0 0
        %856 = vmatprep.subr.bf16.mxu0 0
        %857 = vmatpush1.bf16.msra.mxu0 0
        %858 = vmatprep.subr.bf16.mxu0 0
        %859 = vmatpush1.bf16.msra.mxu0 0
        %860 = vmatprep.subr.bf16.mxu0 0
        %861 = vmatpush1.bf16.msra.mxu0 0
        %862 = vmatprep.subr.bf16.mxu0 0
        %863 = vmatpush1.bf16.msra.mxu0 0
        %864 = vmatprep.subr.bf16.mxu0 0
        %865 = vmatpush1.bf16.msra.mxu0 0
        %866 = vmatprep.mubr.bf16.mxu0 0
        %867 = vmatmul.mubr.bf16.gmra.mrb[0].mxu0 %v829
        %v868 = vpop.f32.mrb[0].mxu0
        %v869 = vadd.f32 0.0, %v868
        %v870 = vpop.f32.mrb[0].mxu0
        %v871 = vpop.f32.mrb[0].mxu0
        %v872 = vpop.f32.mrb[0].mxu0
        %873 = vdwg.mxu0
        %875 = vrot.lane.b32.xlu0 %v869, 24
        %v876 = vpop.permute.xlu0 %875
        %vm878 = vcmask 261312
        %879 = vst.msk [vmem:[#allocation2] sm:$0xff] %vm878, %v876
        %v880 = vld [vmem:[#allocation2] sm:$0xff]
        %v881 = vpack.c.bf16 %v880, %v880
        %vm882 = vcmask 257024
        %883 = vst.msk [vmem:[%s346] sm:$0xf] %vm882, %v881
        %s884 = sand.u32 %s159, 1
        %s885 = scalar_lea.sflag [#allocation5], %s884
        %s886 = sand.u32 %s159, 1
        %s887 = smul.addr %s886, 4
        %s888 = scalar_lea.vmem [#allocation11], %s887
        // Predicated region
        $region53: #{_lambda_.22} parent=35 // pred_check
          %p889 = pneg %p169
        $region54: #{_lambda_.22} parent=35 // pred_check_branch
          %891 = sbr.rel (%p889) target = $region56
        $region55: #{_lambda_.22} parent=35 // pred_region
          %s893 = ssub.s32 64, 64
          %894 = vsyncadd %s885, %s893
          %s895 = sadd.s32 %s32, %s31
          %s896 = smul.addr %s895, 64
          %s897 = scalar_lea.hbm %s4, %s896
          %s899 = sshll.u32 %s888, 4
          %s900 = int_to_ptr.vmem [resolvable:$true] %s899
          %902 = dma.vmem_to_hbm [thread:$0]  %s900, 64, %s897, %s885
        $region56: #{_lambda_.22} parent=35 // pred_fallthru
          _
      $region36: #{_lambda_.22} parent=5 // pred_fallthru
        _
      %p903 = scmp.le.s32.totalorder 2, %s22
      // Predicated region
      $region57: #{_lambda_.22} parent=5 // pred_check
        %p904 = pneg %p903
      $region58: #{_lambda_.22} parent=5 // pred_check_branch
        %906 = sbr.rel (%p904) target = $region60
      $region59: #{_lambda_.22} parent=5 // pred_region
        %s907 = ssub.s32 %s22, 2
        // Predicated region
        $region61: #{_lambda_.22} parent=59 // pred_check
          %p908 = pneg %p175
        $region62: #{_lambda_.22} parent=59 // pred_check_branch
          %910 = sbr.rel (%p908) target = $region64
        $region63: #{_lambda_.22} parent=59 // pred_region
          %s911 = sand.u32 %s160, 1
          %s912 = scalar_lea.sflag [#allocation5], %s911
          %s913 = sand.u32 %s160, 1
          %s914 = smul.addr %s913, 4
          %s915 = scalar_lea.vmem [#allocation11], %s914
          %916 = dma.done %s912, 64
        $region64: #{_lambda_.22} parent=59 // pred_fallthru
          _
      $region60: #{_lambda_.22} parent=5 // pred_fallthru
        _
    $region6: #{_lambda_.22} parent=1 // loop_footer
      %s26 = sadd.s32 1, %s22
    $region7: #{_lambda_.22} parent=1 // loop_footer_branch
      %21 = sbr.rel target = $region3
    $region8: #{_lambda_.22} parent=1 // loop_exit
      _
    %917 = vsyncpa [#allocation4], 1
    %s918 = scalar_lea.sflag [#allocation4], 1
    %919 = vsyncpa %s918, 1
    %920 = vsyncpa [#allocation7], 1
    %s921 = scalar_lea.sflag [#allocation7], 1
    %922 = vsyncpa %s921, 1
    %923 = vsyncpa [#allocation10], 1
    %s924 = scalar_lea.sflag [#allocation10], 1
    %925 = vsyncpa %s924, 1
    %926 = vsyncpa [#allocation5], 1
    %s927 = scalar_lea.sflag [#allocation5], 1
    %928 = vsyncpa %s927, 1

// kernel: _lambda_.33
$region0: #{_lambda_.33}
  #allocation0 [shape = 'u32[]', space=smem, size = 0x4, offset = 0x4, fixed_abs, tag = 'smem constant byte address 0x4 - core index']
  #allocation1 [shape = 'u32[144,128]{1,0:T(1,128)}', space=vmem, size = 0x12000, scoped, tag = 'internal scratch']
  %s0 = inlined_call_operand.hbm [shape: bf16[16,32], index: 0, kind: input, shape index: {}]
  %s1 = inlined_call_operand.hbm [shape: f32[1,32], index: 1, kind: input, shape index: {}]
  %s2 = inlined_call_operand.hbm [shape: f32[1,32], index: 2, kind: input, shape index: {}]
  %s3 = inlined_call_operand.hbm [shape: bf16[32,16], index: 3, kind: input, shape index: {}]
  %s4 = inlined_call_operand.hbm [shape: f32[1,16], index: 4, kind: input, shape index: {}]
  %s5 = inlined_call_operand.hbm [shape: f32[16,16], index: 5, kind: output, shape index: {}]
  %s6 = sld [smem:[#allocation0]]
  $region50: #{_lambda_.33} parent=0
    _
  %s8 = ssub.s32 1, %s6
  %s9 = scalar_select 0, %s8, %s6
  $region1: #{_lambda_.33} parent=0
    #allocation2 [shape = 'u8[4096]{0}', space=vmem, size = 0x1000, scoped, tag = 'input window, operand 0, single buffered']
    #allocation3 [shape = 's32[1]{0}', space=sflag, size = 0x4, scoped, tag = 'scoped memory for _lambda_.33']
    #allocation4 [shape = 's32[1]{0}', space=sflag, size = 0x4, scoped, tag = 'scoped memory for _lambda_.33']
    #allocation5 [shape = 'u8[512]{0}', space=vmem, size = 0x400, scoped, tag = 'input window, operand 1, single buffered']
    #allocation6 [shape = 's32[1]{0}', space=sflag, size = 0x4, scoped, tag = 'scoped memory for _lambda_.33']
    #allocation7 [shape = 'u8[512]{0}', space=vmem, size = 0x400, scoped, tag = 'input window, operand 2, single buffered']
    #allocation8 [shape = 'u8[8192]{0}', space=vmem, size = 0x2000, scoped, tag = 'input window, operand 3, single buffered']
    #allocation9 [shape = 's32[1]{0}', space=sflag, size = 0x4, scoped, tag = 'scoped memory for _lambda_.33']
    #allocation10 [shape = 'u8[512]{0}', space=vmem, size = 0x400, scoped, tag = 'input window, operand 4, single buffered']
    #allocation11 [shape = 'u8[8192]{0}', space=vmem, size = 0x2000, scoped, tag = 'output window, operand 0, single buffered']
    %10 = vsyncpa [#allocation3], 0
    %11 = vsyncpa [#allocation6], 0
    %12 = vsyncpa [#allocation9], 0
    %13 = vsyncpa [#allocation4], 0
    // Predicated region
    $region2: #{_lambda_.33} parent=1 // pred_check
      _
    $region3: #{_lambda_.33} parent=1 // pred_check_branch
      %15 = sbr.rel (0) target = $region5
    $region4: #{_lambda_.33} parent=1 // pred_region
      %s17 = ssub.s32 128, 128
      %18 = vsyncadd [#allocation3], %s17
      %s19 = sshll.u32 [#allocation2], 4
      %s20 = int_to_ptr.vmem [resolvable:$true] %s19
      %25 = dma.hbm_to_vmem [thread:$0]  %s0, 128, %s20, [#allocation3], 64, 64, 4
    $region5: #{_lambda_.33} parent=1 // pred_fallthru
      _
    // Predicated region
    $region6: #{_lambda_.33} parent=1 // pred_check
      _
    $region7: #{_lambda_.33} parent=1 // pred_check_branch
      %27 = sbr.rel (0) target = $region9
    $region8: #{_lambda_.33} parent=1 // pred_region
      %s29 = ssub.s32 16, 16
      %30 = vsyncadd [#allocation6], %s29
      %s32 = sshll.u32 [#allocation5], 4
      %s33 = int_to_ptr.vmem [resolvable:$true] %s32
      %35 = dma.hbm_to_vmem [thread:$0]  %s1, 16, %s33, [#allocation6]
    $region9: #{_lambda_.33} parent=1 // pred_fallthru
      _
    // Predicated region
    $region10: #{_lambda_.33} parent=1 // pred_check
      _
    $region11: #{_lambda_.33} parent=1 // pred_check_branch
      %37 = sbr.rel (0) target = $region13
    $region12: #{_lambda_.33} parent=1 // pred_region
      %s39 = ssub.s32 16, 16
      %40 = vsyncadd [#allocation6], %s39
      %s42 = sshll.u32 [#allocation7], 4
      %s43 = int_to_ptr.vmem [resolvable:$true] %s42
      %45 = dma.hbm_to_vmem [thread:$0]  %s2, 16, %s43, [#allocation6]
    $region13: #{_lambda_.33} parent=1 // pred_fallthru
      _
    // Predicated region
    $region14: #{_lambda_.33} parent=1 // pred_check
      _
    $region15: #{_lambda_.33} parent=1 // pred_check_branch
      %47 = sbr.rel (0) target = $region17
    $region16: #{_lambda_.33} parent=1 // pred_region
      %s49 = ssub.s32 256, 256
      %50 = vsyncadd [#allocation9], %s49
      %s51 = sshll.u32 [#allocation8], 4
      %s52 = int_to_ptr.vmem [resolvable:$true] %s51
      %57 = dma.hbm_to_vmem [thread:$0]  %s3, 256, %s52, [#allocation9], 64, 64, 4
    $region17: #{_lambda_.33} parent=1 // pred_fallthru
      _
    // Predicated region
    $region18: #{_lambda_.33} parent=1 // pred_check
      _
    $region19: #{_lambda_.33} parent=1 // pred_check_branch
      %59 = sbr.rel (0) target = $region21
    $region20: #{_lambda_.33} parent=1 // pred_region
      %s61 = ssub.s32 16, 16
      %62 = vsyncadd [#allocation9], %s61
      %s64 = sshll.u32 [#allocation10], 4
      %s65 = int_to_ptr.vmem [resolvable:$true] %s64
      %67 = dma.hbm_to_vmem [thread:$0]  %s4, 16, %s65, [#allocation9]
    $region21: #{_lambda_.33} parent=1 // pred_fallthru
      _
    // Predicated region
    $region22: #{_lambda_.33} parent=1 // pred_check
      _
    $region23: #{_lambda_.33} parent=1 // pred_check_branch
      %69 = sbr.rel (0) target = $region25
    $region24: #{_lambda_.33} parent=1 // pred_region
      %70 = dma.done [#allocation3], 128
    $region25: #{_lambda_.33} parent=1 // pred_fallthru
      _
    // Predicated region
    $region26: #{_lambda_.33} parent=1 // pred_check
      _
    $region27: #{_lambda_.33} parent=1 // pred_check_branch
      %72 = sbr.rel (0) target = $region29
    $region28: #{_lambda_.33} parent=1 // pred_region
      %73 = dma.done [#allocation6], 16
    $region29: #{_lambda_.33} parent=1 // pred_fallthru
      _
    // Predicated region
    $region30: #{_lambda_.33} parent=1 // pred_check
      _
    $region31: #{_lambda_.33} parent=1 // pred_check_branch
      %75 = sbr.rel (0) target = $region33
    $region32: #{_lambda_.33} parent=1 // pred_region
      %76 = dma.done [#allocation6], 16
    $region33: #{_lambda_.33} parent=1 // pred_fallthru
      _
    // Predicated region
    $region34: #{_lambda_.33} parent=1 // pred_check
      _
    $region35: #{_lambda_.33} parent=1 // pred_check_branch
      %78 = sbr.rel (0) target = $region37
    $region36: #{_lambda_.33} parent=1 // pred_region
      %79 = dma.done [#allocation9], 256
    $region37: #{_lambda_.33} parent=1 // pred_fallthru
      _
    // Predicated region
    $region38: #{_lambda_.33} parent=1 // pred_check
      _
    $region39: #{_lambda_.33} parent=1 // pred_check_branch
      %81 = sbr.rel (0) target = $region41
    $region40: #{_lambda_.33} parent=1 // pred_region
      %82 = dma.done [#allocation9], 16
    $region41: #{_lambda_.33} parent=1 // pred_fallthru
      _
    %v84 = vld [vmem:[#allocation2] sm:$0xf]
    %v85 = vld [vmem:[#allocation2 + $0x4] sm:$0xf]
    %v86 = vunpack.c.l.bf16 %v84
    %v87 = vunpack.c.l.bf16 %v85
    %vm88 = vcmask 261120
    %v89 = vsel %vm88, %v86, 0.0
    %90 = vadd.xlane.f32.xlu0 %v89
    %v91 = vpop.xlane.xlu0 %90
    %v92 = vsel %vm88, %v87, 0.0
    %93 = vadd.xlane.f32.xlu0 %v92
    %v94 = vpop.xlane.xlu0 %93
    %v95 = vrcp.pop 32.0
    %v96 = vmul.f32 %v91, %v95
    %v97 = vmul.f32 %v94, %v95
    %v98 = vsub.f32 %v86, %v96
    %v99 = vsub.f32 %v87, %v97
    %v100 = vmul.f32 %v98, %v98
    %v101 = vmul.f32 %v99, %v99
    %v102 = vsel %vm88, %v100, 0.0
    %103 = vadd.xlane.f32.xlu0 %v102
    %v104 = vpop.xlane.xlu0 %103
    %v105 = vsel %vm88, %v101, 0.0
    %106 = vadd.xlane.f32.xlu0 %v105
    %v107 = vpop.xlane.xlu0 %106
    %v108 = vmul.f32 %v104, %v95
    %v109 = vmul.f32 %v107, %v95
    %v110 = vadd.f32 %v108, 1e-05
    %v111 = vadd.f32 %v109, 1e-05
    %v112 = vrsqrt.pop %v110
    %v113 = vrsqrt.pop %v111
    %v114 = vmul.f32 %v98, %v112
    %v115 = vmul.f32 %v99, %v113
    %v116 = vld [vmem:[#allocation5] sm:$0x1]
    %v118 = vlaneseq
    %v119 = vshrl.u32 %v118, 7
    %v120 = vsub.s32 0, %v119
    %v121 = vrot.slane %v116, %v120
    %v123 = vmul.f32 %v114, %v121
    %v124 = vmul.f32 %v115, %v121
    %v125 = vld [vmem:[#allocation7] sm:$0x1]
    %v127 = vlaneseq
    %v128 = vshrl.u32 %v127, 7
    %v129 = vsub.s32 0, %v128
    %v130 = vrot.slane %v125, %v129
    %v132 = vadd.f32 %v123, %v130
    %v133 = vadd.f32 %v124, %v130
    %v134 = vpack.c.bf16 %v133, %v132
    %v135 = vld [vmem:[#allocation8] sm:$0xf]
    %v136 = vld [vmem:[#allocation8 + $0x4] sm:$0xf]
    %v137 = vld [vmem:[#allocation8 + $0x8] sm:$0xf]
    %v138 = vld [vmem:[#allocation8 + $0xc] sm:$0xf]
    %v139 = vld [vmem:[#allocation10] sm:$0x1]
    %v141 = vlaneseq
    %v142 = vshrl.u32 %v141, 7
    %v143 = vsub.s32 0, %v142
    %v144 = vrot.slane %v139, %v143
    %v150 = vunpack.c.l.b16 %v135
    %v151 = vunpack.c.l.b16 %v136
    %v152 = vunpack.c.l.b16 %v137
    %v153 = vunpack.c.l.b16 %v138
    %v154 = vpack.c.b16 %v151, %v150
    %v155 = vpack.c.b16 %v153, %v152
    %v159 = vsel %vm88, %v134, 0
    %161 = vmatprep.subr.bf16.mxu0 0
    %162 = vmatpush1.bf16.msra.mxu0 %v154
    %163 = vmatprep.subr.bf16.mxu0 0
    %164 = vmatpush1.bf16.msra.mxu0 %v155
    %165 = vmatprep.subr.bf16.mxu0 0
    %166 = vmatpush1.bf16.msra.mxu0 0
    %167 = vmatprep.subr.bf16.mxu0 0
    %168 = vmatpush1.bf16.msra.mxu0 0
    %169 = vmatprep.subr.bf16.mxu0 0
    %170 = vmatpush1.bf16.msra.mxu0 0
    %171 = vmatprep.subr.bf16.mxu0 0
    %172 = vmatpush1.bf16.msra.mxu0 0
    %173 = vmatprep.subr.bf16.mxu0 0
    %174 = vmatpush1.bf16.msra.mxu0 0
    %175 = vmatprep.subr.bf16.mxu0 0
    %176 = vmatpush1.bf16.msra.mxu0 0
    %177 = vmatprep.subr.bf16.mxu0 0
    %178 = vmatpush1.bf16.msra.mxu0 0
    %179 = vmatprep.subr.bf16.mxu0 0
    %180 = vmatpush1.bf16.msra.mxu0 0
    %181 = vmatprep.subr.bf16.mxu0 0
    %182 = vmatpush1.bf16.msra.mxu0 0
    %183 = vmatprep.subr.bf16.mxu0 0
    %184 = vmatpush1.bf16.msra.mxu0 0
    %185 = vmatprep.subr.bf16.mxu0 0
    %186 = vmatpush1.bf16.msra.mxu0 0
    %187 = vmatprep.subr.bf16.mxu0 0
    %188 = vmatpush1.bf16.msra.mxu0 0
    %189 = vmatprep.subr.bf16.mxu0 0
    %190 = vmatpush1.bf16.msra.mxu0 0
    %191 = vmatprep.subr.bf16.mxu0 0
    %192 = vmatpush1.bf16.msra.mxu0 0
    %193 = vmatprep.mubr.bf16.mxu0 0
    %194 = vmatmul.mubr.bf16.gmra.mrb[0].mxu0 %v159
    %v195 = vpop.f32.mrb[0].mxu0
    %v196 = vadd.f32 %v144, %v195
    %v197 = vpop.f32.mrb[0].mxu0
    %v198 = vpop.f32.mrb[0].mxu0
    %v199 = vadd.f32 %v144, %v198
    %v200 = vpop.f32.mrb[0].mxu0
    %201 = vdwg.mxu0
    %vm202 = vcmask 130048
    %203 = vst.msk [vmem:[#allocation11] sm:$0xff] %vm202, %v196
    %204 = vst.msk [vmem:[#allocation11 + $0x8] sm:$0xff] %vm202, %v199
    // Predicated region
    $region42: #{_lambda_.33} parent=1 // pred_check
      _
    $region43: #{_lambda_.33} parent=1 // pred_check_branch
      %206 = sbr.rel (0) target = $region45
    $region44: #{_lambda_.33} parent=1 // pred_region
      %s208 = ssub.s32 256, 256
      %209 = vsyncadd [#allocation4], %s208
      %s210 = sshll.u32 [#allocation11], 4
      %s211 = int_to_ptr.vmem [resolvable:$true] %s210
      %216 = dma.vmem_to_hbm [thread:$0]  %s211, 256, %s5, [#allocation4], 128, 128, 8
    $region45: #{_lambda_.33} parent=1 // pred_fallthru
      _
    // Predicated region
    $region46: #{_lambda_.33} parent=1 // pred_check
      _
    $region47: #{_lambda_.33} parent=1 // pred_check_branch
      %218 = sbr.rel (0) target = $region49
    $region48: #{_lambda_.33} parent=1 // pred_region
      %219 = dma.done [#allocation4], 256
    $region49: #{_lambda_.33} parent=1 // pred_fallthru
      _
    %220 = vsyncpa [#allocation3], 1
    %221 = vsyncpa [#allocation6], 1
    %222 = vsyncpa [#allocation9], 1
    %223 = vsyncpa [#allocation4], 1

</llo_original>
